<compile_context>
chip_gen: v7x
topology: tpu7x:2x2x1
jax: 0.10.0
libtpu: 0.0.40
codegen_flags: <defaults>
</compile_context>

<pallas_src>
import math

import jax
import jax.numpy as jnp
from jax.experimental import pallas as pl
from jax.experimental.pallas import tpu as pltpu

D_MODEL = 256
NHEAD = 8
NUM_LAYERS = 6
HEAD_DIM = D_MODEL // NHEAD
D_FF = 4 * D_MODEL
LN_EPS = 1e-5


def _layer_norm(x, w, b):
    mu = jnp.mean(x, axis=-1, keepdims=True)
    var = jnp.mean((x - mu) ** 2, axis=-1, keepdims=True)
    return (x - mu) * jax.lax.rsqrt(var + LN_EPS) * w + b


# ---------------------------------------------------------------------------
# Fused encoder-stack kernel
# ---------------------------------------------------------------------------
def _fused_encoder_kernel(
    x_ref,                        # (Bb, S, D)  batch-first input block (f32)
    pe_ref,                       # (S, D)      positional encoding (f32)
    w_qkv_ref, b_qkv_ref,         # (L, D, 3D) bf16, (L, 1, 3D) f32   -- resident
    w_out_ref, b_out_ref,         # (L, D, D)  bf16, (L, 1, D)  f32   -- resident
    w1_ref, b1_ref,               # (L, D, 4D) bf16, (L, 1, 4D) f32   -- resident
    w2_ref, b2_ref,               # (L, 4D, D) bf16, (L, 1, D)  f32   -- resident
    ln1_w_ref, ln1_b_ref,         # (L, 1, D) f32 x2                  -- resident
    ln2_w_ref, ln2_b_ref,         # (L, 1, D) f32 x2                  -- resident
    o_ref,                        # (Bb, S, D)  output block; also the f32
                                  #             layer-to-layer carry (index is
                                  #             constant over the layer axis)
):
    l = pl.program_id(1)
    Bb, S, D = x_ref.shape
    rows = Bb * S
    scale = 1.0 / math.sqrt(HEAD_DIM)

    # ---- layer 0: fold in positional encoding, seed the resident carry ------
    @pl.when(l == 0)
    def _():
        o_ref[...] = x_ref[...] + pe_ref[...]          # (S, D) broadcasts over Bb

    # ---------------- per-layer body (runs for every l) ----------------------
    x = o_ref[...]                                     # (Bb, S, D) f32 carry
    xf = x.reshape(rows, D)                            # (Bb*S, D) row view
    xb = xf.astype(jnp.bfloat16)

    # -- multi-head self-attention --
    qkv = jnp.dot(xb, w_qkv_ref[l],
                  preferred_element_type=jnp.float32) + b_qkv_ref[l]   # (rows, 3D)
    q = qkv[:, :D].astype(jnp.bfloat16).reshape(Bb, S, D)
    k = qkv[:, D:2 * D].astype(jnp.bfloat16).reshape(Bb, S, D)
    v = qkv[:, 2 * D:].astype(jnp.bfloat16).reshape(Bb, S, D)

    heads = []
    for h in range(NHEAD):                 # static unroll; dots batched over Bb
        lo, hi = h * HEAD_DIM, (h + 1) * HEAD_DIM
        qh, kh, vh = q[:, :, lo:hi], k[:, :, lo:hi], v[:, :, lo:hi]
        s_sc = jnp.einsum('bqd,bkd->bqk', qh, kh,
                          preferred_element_type=jnp.float32) * scale  # (Bb, S, S)
        s_sc = s_sc - jnp.max(s_sc, axis=-1, keepdims=True)
        p = jnp.exp(s_sc)
        p = p / jnp.sum(p, axis=-1, keepdims=True)                     # exact softmax
        heads.append(jnp.einsum('bqk,bkd->bqd', p.astype(jnp.bfloat16), vh,
                                preferred_element_type=jnp.float32))   # (Bb, S, Dh)
    attn = jnp.concatenate(heads, axis=-1).reshape(rows, D)            # (rows, D)
    attn = jnp.dot(attn.astype(jnp.bfloat16), w_out_ref[l],
                   preferred_element_type=jnp.float32) + b_out_ref[l]

    # -- residual + LayerNorm1 (f32) --
    # TODO(synk): dropout(p=0.1) treated as identity (eval-mode semantics)
    x1 = _layer_norm(xf + attn, ln1_w_ref[l], ln1_b_ref[l])

    # -- FFN --
    h1 = jnp.dot(x1.astype(jnp.bfloat16), w1_ref[l],
                 preferred_element_type=jnp.float32) + b1_ref[l]
    h1 = jnp.maximum(h1, 0.0)
    ffn = jnp.dot(h1.astype(jnp.bfloat16), w2_ref[l],
                  preferred_element_type=jnp.float32) + b2_ref[l]

    # -- residual + LayerNorm2 (f32) --
    x2 = _layer_norm(x1 + ffn, ln2_w_ref[l], ln2_b_ref[l])

    o_ref[...] = x2.reshape(Bb, S, D)      # carry to next layer / final output


# ---------------------------------------------------------------------------
# Wrappers
# ---------------------------------------------------------------------------
def _pick_batch_block(batch, seq, target_rows=512, min_rows_per_block=256):
    """Largest divisor Bb of batch with Bb*seq <= target_rows; prefer >=2 batch
    blocks (v7x megacore) when each block still keeps >= min_rows_per_block rows."""
    divisors = [c for c in range(1, batch + 1) if batch % c == 0]
    fitting = [c for c in divisors if c * seq <= max(target_rows, seq)]
    bb = max(fitting)
    if bb == batch and batch > 1:
        halved = [c for c in fitting if c < batch and c * seq >= min_rows_per_block]
        if halved:
            bb = max(halved)
    return bb


def make_positional_encoding_table(max_len, d_model):
    position = jnp.arange(max_len, dtype=jnp.float32)[:, None]
    div_term = jnp.exp(
        jnp.arange(0, d_model, 2, dtype=jnp.float32)
        * (-math.log(10000.0) / d_model))
    ang = position * div_term                            # (max_len, d_model/2)
    pe = jnp.zeros((max_len, d_model), jnp.float32)
    pe = pe.at[:, 0::2].set(jnp.sin(ang))
    pe = pe.at[:, 1::2].set(jnp.cos(ang))
    return pe                                            # (max_len, d_model)


def init_params(key):
    """Deterministic synthetic weights, stacked over layers (leading L axis).

    Matmul weights are bf16 and pre-transposed to (in, out); biases / LN in f32.
    """
    L = NUM_LAYERS
    scale = 0.02
    keys = jax.random.split(key, 4 * L)

    def rnd(i, shape):
        return (scale * jax.random.normal(keys[i], shape, jnp.float32)
                ).astype(jnp.bfloat16)

    return dict(
        w_qkv=jnp.stack([rnd(4 * l + 0, (D_MODEL, 3 * D_MODEL)) for l in range(L)]),
        b_qkv=jnp.zeros((L, 1, 3 * D_MODEL), jnp.float32),
        w_out=jnp.stack([rnd(4 * l + 1, (D_MODEL, D_MODEL)) for l in range(L)]),
        b_out=jnp.zeros((L, 1, D_MODEL), jnp.float32),
        w1=jnp.stack([rnd(4 * l + 2, (D_MODEL, D_FF)) for l in range(L)]),
        b1=jnp.zeros((L, 1, D_FF), jnp.float32),
        w2=jnp.stack([rnd(4 * l + 3, (D_FF, D_MODEL)) for l in range(L)]),
        b2=jnp.zeros((L, 1, D_MODEL), jnp.float32),
        ln1_w=jnp.ones((L, 1, D_MODEL), jnp.float32),
        ln1_b=jnp.zeros((L, 1, D_MODEL), jnp.float32),
        ln2_w=jnp.ones((L, 1, D_MODEL), jnp.float32),
        ln2_b=jnp.zeros((L, 1, D_MODEL), jnp.float32),
    )


def transformer_encoder(src_sbd, params, pe_table):
    """src_sbd: (S, B, D) float32, seq-first like the PyTorch module."""
    S, B, D = src_sbd.shape
    assert D == D_MODEL
    Bb = _pick_batch_block(B, S)
    nb = B // Bb
    pe = pe_table[:S]                              # (S, D)
    x_bsd = jnp.transpose(src_sbd, (1, 0, 2))      # one layout change, in XLA

    weight_names = ("w_qkv", "b_qkv", "w_out", "b_out", "w1", "b1", "w2", "b2",
                    "ln1_w", "ln1_b", "ln2_w", "ln2_b")
    weights = [params[n] for n in weight_names]

    # Full stacked weight arrays with a constant index_map => DMA'd once, kept
    # resident in VMEM across the whole grid; kernel indexes w_ref[l].
    def resident_spec(arr):
        return pl.BlockSpec(arr.shape, lambda b, l: (0, 0, 0))

    in_specs = [
        pl.BlockSpec((Bb, S, D), lambda b, l: (b, 0, 0)),   # x (constant over l)
        pl.BlockSpec((S, D), lambda b, l: (0, 0)),          # positional encoding
    ] + [resident_spec(w) for w in weights]

    out_spec = pl.BlockSpec((Bb, S, D), lambda b, l: (b, 0, 0))

    out_bsd = pl.pallas_call(
        _fused_encoder_kernel,
        out_shape=jax.ShapeDtypeStruct((B, S, D), jnp.float32),
        grid=(nb, NUM_LAYERS),
        in_specs=in_specs,
        out_specs=out_spec,
        compiler_params=pltpu.CompilerParams(
            dimension_semantics=("parallel", "arbitrary"),
            vmem_limit_bytes=64 * 1024 * 1024),
    )(x_bsd, pe, *weights)

    return jnp.transpose(out_bsd, (1, 0, 2))       # back to (S, B, D)


# ---------------------------------------------------------------------------
if __name__ == "__main__":
    S, B = 8, 2
    key = jax.random.PRNGKey(0)
    key, ksrc, kparam = jax.random.split(key, 3)

    src = jax.random.normal(ksrc, (S, B, D_MODEL), jnp.float32)
    params = init_params(kparam)
    pe_table = make_positional_encoding_table(5000, D_MODEL)

    out = jax.jit(transformer_encoder)(src, params, pe_table)
    out = jax.block_until_ready(out)

    assert out.shape == (S, B, D_MODEL)
    assert bool(jnp.all(jnp.isfinite(out)))
    print("KERNEL_OK")
</pallas_src>

<mosaic_0001>
module attributes {stable_mosaic.version = 11 : i64} {
  func.func @_fused_encoder_kernel(%arg0: i32, %arg1: i32, %arg2: memref<2x8x256xf32, #tpu.memory_space<vmem>>, %arg3: memref<8x256xf32, #tpu.memory_space<vmem>>, %arg4: memref<6x256x768xbf16, #tpu.memory_space<vmem>>, %arg5: memref<6x1x768xf32, #tpu.memory_space<vmem>>, %arg6: memref<6x256x256xbf16, #tpu.memory_space<vmem>>, %arg7: memref<6x1x256xf32, #tpu.memory_space<vmem>>, %arg8: memref<6x256x1024xbf16, #tpu.memory_space<vmem>>, %arg9: memref<6x1x1024xf32, #tpu.memory_space<vmem>>, %arg10: memref<6x1024x256xbf16, #tpu.memory_space<vmem>>, %arg11: memref<6x1x256xf32, #tpu.memory_space<vmem>>, %arg12: memref<6x1x256xf32, #tpu.memory_space<vmem>>, %arg13: memref<6x1x256xf32, #tpu.memory_space<vmem>>, %arg14: memref<6x1x256xf32, #tpu.memory_space<vmem>>, %arg15: memref<6x1x256xf32, #tpu.memory_space<vmem>>, %arg16: memref<2x8x256xf32, #tpu.memory_space<vmem>>) attributes {dimension_semantics = [#tpu.dimension_semantics<parallel>, #tpu.dimension_semantics<arbitrary>], iteration_bounds = array<i64: 1, 6>, scalar_prefetch = 0 : i64, scratch_operands = 0 : i64, tpu.core_type = #tpu.core_type<tc>, window_params = [{transform_indices = @transform_0, window_bounds = array<i64: 2, 8, 256>}, {pipeline_mode = #tpu.pipeline_mode<synchronous>, transform_indices = @transform_1, window_bounds = array<i64: 8, 256>}, {pipeline_mode = #tpu.pipeline_mode<synchronous>, transform_indices = @transform_2, window_bounds = array<i64: 6, 256, 768>}, {pipeline_mode = #tpu.pipeline_mode<synchronous>, transform_indices = @transform_3, window_bounds = array<i64: 6, 1, 768>}, {pipeline_mode = #tpu.pipeline_mode<synchronous>, transform_indices = @transform_4, window_bounds = array<i64: 6, 256, 256>}, {pipeline_mode = #tpu.pipeline_mode<synchronous>, transform_indices = @transform_5, window_bounds = array<i64: 6, 1, 256>}, {pipeline_mode = #tpu.pipeline_mode<synchronous>, transform_indices = @transform_6, window_bounds = array<i64: 6, 256, 1024>}, {pipeline_mode = #tpu.pipeline_mode<synchronous>, transform_indices = @transform_7, window_bounds = array<i64: 6, 1, 1024>}, {pipeline_mode = #tpu.pipeline_mode<synchronous>, transform_indices = @transform_8, window_bounds = array<i64: 6, 1024, 256>}, {pipeline_mode = #tpu.pipeline_mode<synchronous>, transform_indices = @transform_9, window_bounds = array<i64: 6, 1, 256>}, {pipeline_mode = #tpu.pipeline_mode<synchronous>, transform_indices = @transform_10, window_bounds = array<i64: 6, 1, 256>}, {pipeline_mode = #tpu.pipeline_mode<synchronous>, transform_indices = @transform_11, window_bounds = array<i64: 6, 1, 256>}, {pipeline_mode = #tpu.pipeline_mode<synchronous>, transform_indices = @transform_12, window_bounds = array<i64: 6, 1, 256>}, {pipeline_mode = #tpu.pipeline_mode<synchronous>, transform_indices = @transform_13, window_bounds = array<i64: 6, 1, 256>}, {transform_indices = @transform_14, window_bounds = array<i64: 2, 8, 256>}]} {
    %c0_i32 = arith.constant 0 : i32
    %0 = arith.cmpi eq, %arg1, %c0_i32 : i32
    %1 = arith.extui %0 : i1 to i32
    %c0_i32_0 = arith.constant 0 : i32
    %2 = arith.cmpi ne, %1, %c0_i32_0 : i32
    scf.if %2 {
      %c0_84 = arith.constant 0 : index
      %c0_85 = arith.constant 0 : index
      %c0_86 = arith.constant 0 : index
      %254 = vector.load %arg2[%c0_84, %c0_85, %c0_86] : memref<2x8x256xf32, #tpu.memory_space<vmem>>, vector<2x8x256xf32>
      %c0_87 = arith.constant 0 : index
      %c0_88 = arith.constant 0 : index
      %255 = vector.load %arg3[%c0_87, %c0_88] : memref<8x256xf32, #tpu.memory_space<vmem>>, vector<8x256xf32>
      %256 = vector.shape_cast %255 : vector<8x256xf32> to vector<1x8x256xf32>
      %257 = vector.broadcast %256 : vector<1x8x256xf32> to vector<2x8x256xf32>
      %258 = arith.addf %254, %257 : vector<2x8x256xf32>
      %c0_89 = arith.constant 0 : index
      %c0_90 = arith.constant 0 : index
      %c0_91 = arith.constant 0 : index
      %259 = vector.load %arg16[%c0_89, %c0_90, %c0_91] : memref<2x8x256xf32, #tpu.memory_space<vmem>>, vector<2x8x256xf32>
      tpu.vector_store %arg16[%c0_89, %c0_90, %c0_91], %258 {strides = array<i32>} : memref<2x8x256xf32, #tpu.memory_space<vmem>>, vector<2x8x256xf32>,
    } else {
    }
    %c0 = arith.constant 0 : index
    %c0_1 = arith.constant 0 : index
    %c0_2 = arith.constant 0 : index
    %3 = vector.load %arg16[%c0, %c0_1, %c0_2] : memref<2x8x256xf32, #tpu.memory_space<vmem>>, vector<2x8x256xf32>
    %4 = vector.shape_cast %3 : vector<2x8x256xf32> to vector<16x256xf32>
    %5 = arith.truncf %4 : vector<16x256xf32> to vector<16x256xbf16>
    %6 = arith.index_cast %arg1 : i32 to index
    %c0_3 = arith.constant 0 : index
    %c0_4 = arith.constant 0 : index
    %7 = vector.load %arg4[%6, %c0_3, %c0_4] : memref<6x256x768xbf16, #tpu.memory_space<vmem>>, vector<1x256x768xbf16>
    %8 = vector.shape_cast %7 : vector<1x256x768xbf16> to vector<256x768xbf16>
    %cst = arith.constant dense<0.000000e+00> : vector<16x768xf32>
    %9 = tpu.matmul %5, %8, %cst {dimension_numbers = #tpu.dot_dimension_numbers<[1], [0], [0], [1], [0, 0, 1, 1], [], []>} : vector<16x256xbf16>, vector<256x768xbf16>, vector<16x768xf32> -> vector<16x768xf32>
    %10 = arith.index_cast %arg1 : i32 to index
    %c0_5 = arith.constant 0 : index
    %c0_6 = arith.constant 0 : index
    %11 = vector.load %arg5[%10, %c0_5, %c0_6] : memref<6x1x768xf32, #tpu.memory_space<vmem>>, vector<1x1x768xf32>
    %12 = vector.shape_cast %11 : vector<1x1x768xf32> to vector<1x768xf32>
    %13 = vector.broadcast %12 : vector<1x768xf32> to vector<16x768xf32>
    %14 = arith.addf %9, %13 : vector<16x768xf32>
    %15 = vector.extract_strided_slice %14 {offsets = [0, 0], sizes = [16, 256], strides = [1, 1]} : vector<16x768xf32> to vector<16x256xf32>
    %16 = arith.truncf %15 : vector<16x256xf32> to vector<16x256xbf16>
    %17 = vector.shape_cast %16 : vector<16x256xbf16> to vector<2x8x256xbf16>
    %18 = vector.extract_strided_slice %14 {offsets = [0, 256], sizes = [16, 256], strides = [1, 1]} : vector<16x768xf32> to vector<16x256xf32>
    %19 = arith.truncf %18 : vector<16x256xf32> to vector<16x256xbf16>
    %20 = vector.shape_cast %19 : vector<16x256xbf16> to vector<2x8x256xbf16>
    %21 = vector.extract_strided_slice %14 {offsets = [0, 512], sizes = [16, 256], strides = [1, 1]} : vector<16x768xf32> to vector<16x256xf32>
    %22 = arith.truncf %21 : vector<16x256xf32> to vector<16x256xbf16>
    %23 = vector.shape_cast %22 : vector<16x256xbf16> to vector<2x8x256xbf16>
    %24 = vector.extract_strided_slice %17 {offsets = [0, 0, 0], sizes = [2, 8, 32], strides = [1, 1, 1]} : vector<2x8x256xbf16> to vector<2x8x32xbf16>
    %25 = vector.extract_strided_slice %20 {offsets = [0, 0, 0], sizes = [2, 8, 32], strides = [1, 1, 1]} : vector<2x8x256xbf16> to vector<2x8x32xbf16>
    %26 = vector.extract_strided_slice %23 {offsets = [0, 0, 0], sizes = [2, 8, 32], strides = [1, 1, 1]} : vector<2x8x256xbf16> to vector<2x8x32xbf16>
    "tpu.trace_start"() <{level = 10 : i32, message = "bqd,bkd->bqk"}> : () -> ()
    %cst_7 = arith.constant dense<0.000000e+00> : vector<2x8x8xf32>
    %27 = tpu.matmul %24, %25, %cst_7 {dimension_numbers = #tpu.dot_dimension_numbers<[2], [2], [1], [1], [0, 0, 0, 1, 1, 1], [0], [0]>} : vector<2x8x32xbf16>, vector<2x8x32xbf16>, vector<2x8x8xf32> -> vector<2x8x8xf32>
    "tpu.trace_stop"() : () -> ()
    %cst_8 = arith.constant 0.176776692 : f32
    %28 = vector.broadcast %cst_8 : f32 to vector<2x8x8xf32>
    %29 = arith.mulf %27, %28 : vector<2x8x8xf32>
    %cst_9 = arith.constant dense<0xFF800000> : vector<2x8xf32>
    %30 = vector.multi_reduction <maximumf>, %29, %cst_9 [2] : vector<2x8x8xf32> to vector<2x8xf32>
    %31 = vector.shape_cast %30 : vector<2x8xf32> to vector<2x8x1xf32>
    %32 = vector.broadcast %31 : vector<2x8x1xf32> to vector<2x8x8xf32>
    %33 = arith.subf %29, %32 : vector<2x8x8xf32>
    %34 = math.exp %33 : vector<2x8x8xf32>
    %cst_10 = arith.constant dense<0.000000e+00> : vector<2x8xf32>
    %35 = vector.multi_reduction <add>, %34, %cst_10 [2] : vector<2x8x8xf32> to vector<2x8xf32>
    %36 = vector.shape_cast %35 : vector<2x8xf32> to vector<2x8x1xf32>
    %37 = vector.broadcast %36 : vector<2x8x1xf32> to vector<2x8x8xf32>
    %38 = arith.divf %34, %37 : vector<2x8x8xf32>
    %39 = arith.truncf %38 : vector<2x8x8xf32> to vector<2x8x8xbf16>
    "tpu.trace_start"() <{level = 10 : i32, message = "bqk,bkd->bqd"}> : () -> ()
    %cst_11 = arith.constant dense<0.000000e+00> : vector<2x8x32xf32>
    %40 = tpu.matmul %39, %26, %cst_11 {dimension_numbers = #tpu.dot_dimension_numbers<[2], [1], [1], [2], [0, 0, 0, 1, 1, 2], [0], [0]>} : vector<2x8x8xbf16>, vector<2x8x32xbf16>, vector<2x8x32xf32> -> vector<2x8x32xf32>
    "tpu.trace_stop"() : () -> ()
    %41 = vector.extract_strided_slice %17 {offsets = [0, 0, 32], sizes = [2, 8, 32], strides = [1, 1, 1]} : vector<2x8x256xbf16> to vector<2x8x32xbf16>
    %42 = vector.extract_strided_slice %20 {offsets = [0, 0, 32], sizes = [2, 8, 32], strides = [1, 1, 1]} : vector<2x8x256xbf16> to vector<2x8x32xbf16>
    %43 = vector.extract_strided_slice %23 {offsets = [0, 0, 32], sizes = [2, 8, 32], strides = [1, 1, 1]} : vector<2x8x256xbf16> to vector<2x8x32xbf16>
    "tpu.trace_start"() <{level = 10 : i32, message = "bqd,bkd->bqk"}> : () -> ()
    %cst_12 = arith.constant dense<0.000000e+00> : vector<2x8x8xf32>
    %44 = tpu.matmul %41, %42, %cst_12 {dimension_numbers = #tpu.dot_dimension_numbers<[2], [2], [1], [1], [0, 0, 0, 1, 1, 1], [0], [0]>} : vector<2x8x32xbf16>, vector<2x8x32xbf16>, vector<2x8x8xf32> -> vector<2x8x8xf32>
    "tpu.trace_stop"() : () -> ()
    %cst_13 = arith.constant 0.176776692 : f32
    %45 = vector.broadcast %cst_13 : f32 to vector<2x8x8xf32>
    %46 = arith.mulf %44, %45 : vector<2x8x8xf32>
    %cst_14 = arith.constant dense<0xFF800000> : vector<2x8xf32>
    %47 = vector.multi_reduction <maximumf>, %46, %cst_14 [2] : vector<2x8x8xf32> to vector<2x8xf32>
    %48 = vector.shape_cast %47 : vector<2x8xf32> to vector<2x8x1xf32>
    %49 = vector.broadcast %48 : vector<2x8x1xf32> to vector<2x8x8xf32>
    %50 = arith.subf %46, %49 : vector<2x8x8xf32>
    %51 = math.exp %50 : vector<2x8x8xf32>
    %cst_15 = arith.constant dense<0.000000e+00> : vector<2x8xf32>
    %52 = vector.multi_reduction <add>, %51, %cst_15 [2] : vector<2x8x8xf32> to vector<2x8xf32>
    %53 = vector.shape_cast %52 : vector<2x8xf32> to vector<2x8x1xf32>
    %54 = vector.broadcast %53 : vector<2x8x1xf32> to vector<2x8x8xf32>
    %55 = arith.divf %51, %54 : vector<2x8x8xf32>
    %56 = arith.truncf %55 : vector<2x8x8xf32> to vector<2x8x8xbf16>
    "tpu.trace_start"() <{level = 10 : i32, message = "bqk,bkd->bqd"}> : () -> ()
    %cst_16 = arith.constant dense<0.000000e+00> : vector<2x8x32xf32>
    %57 = tpu.matmul %56, %43, %cst_16 {dimension_numbers = #tpu.dot_dimension_numbers<[2], [1], [1], [2], [0, 0, 0, 1, 1, 2], [0], [0]>} : vector<2x8x8xbf16>, vector<2x8x32xbf16>, vector<2x8x32xf32> -> vector<2x8x32xf32>
    "tpu.trace_stop"() : () -> ()
    %58 = vector.extract_strided_slice %17 {offsets = [0, 0, 64], sizes = [2, 8, 32], strides = [1, 1, 1]} : vector<2x8x256xbf16> to vector<2x8x32xbf16>
    %59 = vector.extract_strided_slice %20 {offsets = [0, 0, 64], sizes = [2, 8, 32], strides = [1, 1, 1]} : vector<2x8x256xbf16> to vector<2x8x32xbf16>
    %60 = vector.extract_strided_slice %23 {offsets = [0, 0, 64], sizes = [2, 8, 32], strides = [1, 1, 1]} : vector<2x8x256xbf16> to vector<2x8x32xbf16>
    "tpu.trace_start"() <{level = 10 : i32, message = "bqd,bkd->bqk"}> : () -> ()
    %cst_17 = arith.constant dense<0.000000e+00> : vector<2x8x8xf32>
    %61 = tpu.matmul %58, %59, %cst_17 {dimension_numbers = #tpu.dot_dimension_numbers<[2], [2], [1], [1], [0, 0, 0, 1, 1, 1], [0], [0]>} : vector<2x8x32xbf16>, vector<2x8x32xbf16>, vector<2x8x8xf32> -> vector<2x8x8xf32>
    "tpu.trace_stop"() : () -> ()
    %cst_18 = arith.constant 0.176776692 : f32
    %62 = vector.broadcast %cst_18 : f32 to vector<2x8x8xf32>
    %63 = arith.mulf %61, %62 : vector<2x8x8xf32>
    %cst_19 = arith.constant dense<0xFF800000> : vector<2x8xf32>
    %64 = vector.multi_reduction <maximumf>, %63, %cst_19 [2] : vector<2x8x8xf32> to vector<2x8xf32>
    %65 = vector.shape_cast %64 : vector<2x8xf32> to vector<2x8x1xf32>
    %66 = vector.broadcast %65 : vector<2x8x1xf32> to vector<2x8x8xf32>
    %67 = arith.subf %63, %66 : vector<2x8x8xf32>
    %68 = math.exp %67 : vector<2x8x8xf32>
    %cst_20 = arith.constant dense<0.000000e+00> : vector<2x8xf32>
    %69 = vector.multi_reduction <add>, %68, %cst_20 [2] : vector<2x8x8xf32> to vector<2x8xf32>
    %70 = vector.shape_cast %69 : vector<2x8xf32> to vector<2x8x1xf32>
    %71 = vector.broadcast %70 : vector<2x8x1xf32> to vector<2x8x8xf32>
    %72 = arith.divf %68, %71 : vector<2x8x8xf32>
    %73 = arith.truncf %72 : vector<2x8x8xf32> to vector<2x8x8xbf16>
    "tpu.trace_start"() <{level = 10 : i32, message = "bqk,bkd->bqd"}> : () -> ()
    %cst_21 = arith.constant dense<0.000000e+00> : vector<2x8x32xf32>
    %74 = tpu.matmul %73, %60, %cst_21 {dimension_numbers = #tpu.dot_dimension_numbers<[2], [1], [1], [2], [0, 0, 0, 1, 1, 2], [0], [0]>} : vector<2x8x8xbf16>, vector<2x8x32xbf16>, vector<2x8x32xf32> -> vector<2x8x32xf32>
    "tpu.trace_stop"() : () -> ()
    %75 = vector.extract_strided_slice %17 {offsets = [0, 0, 96], sizes = [2, 8, 32], strides = [1, 1, 1]} : vector<2x8x256xbf16> to vector<2x8x32xbf16>
    %76 = vector.extract_strided_slice %20 {offsets = [0, 0, 96], sizes = [2, 8, 32], strides = [1, 1, 1]} : vector<2x8x256xbf16> to vector<2x8x32xbf16>
    %77 = vector.extract_strided_slice %23 {offsets = [0, 0, 96], sizes = [2, 8, 32], strides = [1, 1, 1]} : vector<2x8x256xbf16> to vector<2x8x32xbf16>
    "tpu.trace_start"() <{level = 10 : i32, message = "bqd,bkd->bqk"}> : () -> ()
    %cst_22 = arith.constant dense<0.000000e+00> : vector<2x8x8xf32>
    %78 = tpu.matmul %75, %76, %cst_22 {dimension_numbers = #tpu.dot_dimension_numbers<[2], [2], [1], [1], [0, 0, 0, 1, 1, 1], [0], [0]>} : vector<2x8x32xbf16>, vector<2x8x32xbf16>, vector<2x8x8xf32> -> vector<2x8x8xf32>
    "tpu.trace_stop"() : () -> ()
    %cst_23 = arith.constant 0.176776692 : f32
    %79 = vector.broadcast %cst_23 : f32 to vector<2x8x8xf32>
    %80 = arith.mulf %78, %79 : vector<2x8x8xf32>
    %cst_24 = arith.constant dense<0xFF800000> : vector<2x8xf32>
    %81 = vector.multi_reduction <maximumf>, %80, %cst_24 [2] : vector<2x8x8xf32> to vector<2x8xf32>
    %82 = vector.shape_cast %81 : vector<2x8xf32> to vector<2x8x1xf32>
    %83 = vector.broadcast %82 : vector<2x8x1xf32> to vector<2x8x8xf32>
    %84 = arith.subf %80, %83 : vector<2x8x8xf32>
    %85 = math.exp %84 : vector<2x8x8xf32>
    %cst_25 = arith.constant dense<0.000000e+00> : vector<2x8xf32>
    %86 = vector.multi_reduction <add>, %85, %cst_25 [2] : vector<2x8x8xf32> to vector<2x8xf32>
    %87 = vector.shape_cast %86 : vector<2x8xf32> to vector<2x8x1xf32>
    %88 = vector.broadcast %87 : vector<2x8x1xf32> to vector<2x8x8xf32>
    %89 = arith.divf %85, %88 : vector<2x8x8xf32>
    %90 = arith.truncf %89 : vector<2x8x8xf32> to vector<2x8x8xbf16>
    "tpu.trace_start"() <{level = 10 : i32, message = "bqk,bkd->bqd"}> : () -> ()
    %cst_26 = arith.constant dense<0.000000e+00> : vector<2x8x32xf32>
    %91 = tpu.matmul %90, %77, %cst_26 {dimension_numbers = #tpu.dot_dimension_numbers<[2], [1], [1], [2], [0, 0, 0, 1, 1, 2], [0], [0]>} : vector<2x8x8xbf16>, vector<2x8x32xbf16>, vector<2x8x32xf32> -> vector<2x8x32xf32>
    "tpu.trace_stop"() : () -> ()
    %92 = vector.extract_strided_slice %17 {offsets = [0, 0, 128], sizes = [2, 8, 32], strides = [1, 1, 1]} : vector<2x8x256xbf16> to vector<2x8x32xbf16>
    %93 = vector.extract_strided_slice %20 {offsets = [0, 0, 128], sizes = [2, 8, 32], strides = [1, 1, 1]} : vector<2x8x256xbf16> to vector<2x8x32xbf16>
    %94 = vector.extract_strided_slice %23 {offsets = [0, 0, 128], sizes = [2, 8, 32], strides = [1, 1, 1]} : vector<2x8x256xbf16> to vector<2x8x32xbf16>
    "tpu.trace_start"() <{level = 10 : i32, message = "bqd,bkd->bqk"}> : () -> ()
    %cst_27 = arith.constant dense<0.000000e+00> : vector<2x8x8xf32>
    %95 = tpu.matmul %92, %93, %cst_27 {dimension_numbers = #tpu.dot_dimension_numbers<[2], [2], [1], [1], [0, 0, 0, 1, 1, 1], [0], [0]>} : vector<2x8x32xbf16>, vector<2x8x32xbf16>, vector<2x8x8xf32> -> vector<2x8x8xf32>
    "tpu.trace_stop"() : () -> ()
    %cst_28 = arith.constant 0.176776692 : f32
    %96 = vector.broadcast %cst_28 : f32 to vector<2x8x8xf32>
    %97 = arith.mulf %95, %96 : vector<2x8x8xf32>
    %cst_29 = arith.constant dense<0xFF800000> : vector<2x8xf32>
    %98 = vector.multi_reduction <maximumf>, %97, %cst_29 [2] : vector<2x8x8xf32> to vector<2x8xf32>
    %99 = vector.shape_cast %98 : vector<2x8xf32> to vector<2x8x1xf32>
    %100 = vector.broadcast %99 : vector<2x8x1xf32> to vector<2x8x8xf32>
    %101 = arith.subf %97, %100 : vector<2x8x8xf32>
    %102 = math.exp %101 : vector<2x8x8xf32>
    %cst_30 = arith.constant dense<0.000000e+00> : vector<2x8xf32>
    %103 = vector.multi_reduction <add>, %102, %cst_30 [2] : vector<2x8x8xf32> to vector<2x8xf32>
    %104 = vector.shape_cast %103 : vector<2x8xf32> to vector<2x8x1xf32>
    %105 = vector.broadcast %104 : vector<2x8x1xf32> to vector<2x8x8xf32>
    %106 = arith.divf %102, %105 : vector<2x8x8xf32>
    %107 = arith.truncf %106 : vector<2x8x8xf32> to vector<2x8x8xbf16>
    "tpu.trace_start"() <{level = 10 : i32, message = "bqk,bkd->bqd"}> : () -> ()
    %cst_31 = arith.constant dense<0.000000e+00> : vector<2x8x32xf32>
    %108 = tpu.matmul %107, %94, %cst_31 {dimension_numbers = #tpu.dot_dimension_numbers<[2], [1], [1], [2], [0, 0, 0, 1, 1, 2], [0], [0]>} : vector<2x8x8xbf16>, vector<2x8x32xbf16>, vector<2x8x32xf32> -> vector<2x8x32xf32>
    "tpu.trace_stop"() : () -> ()
    %109 = vector.extract_strided_slice %17 {offsets = [0, 0, 160], sizes = [2, 8, 32], strides = [1, 1, 1]} : vector<2x8x256xbf16> to vector<2x8x32xbf16>
    %110 = vector.extract_strided_slice %20 {offsets = [0, 0, 160], sizes = [2, 8, 32], strides = [1, 1, 1]} : vector<2x8x256xbf16> to vector<2x8x32xbf16>
    %111 = vector.extract_strided_slice %23 {offsets = [0, 0, 160], sizes = [2, 8, 32], strides = [1, 1, 1]} : vector<2x8x256xbf16> to vector<2x8x32xbf16>
    "tpu.trace_start"() <{level = 10 : i32, message = "bqd,bkd->bqk"}> : () -> ()
    %cst_32 = arith.constant dense<0.000000e+00> : vector<2x8x8xf32>
    %112 = tpu.matmul %109, %110, %cst_32 {dimension_numbers = #tpu.dot_dimension_numbers<[2], [2], [1], [1], [0, 0, 0, 1, 1, 1], [0], [0]>} : vector<2x8x32xbf16>, vector<2x8x32xbf16>, vector<2x8x8xf32> -> vector<2x8x8xf32>
    "tpu.trace_stop"() : () -> ()
    %cst_33 = arith.constant 0.176776692 : f32
    %113 = vector.broadcast %cst_33 : f32 to vector<2x8x8xf32>
    %114 = arith.mulf %112, %113 : vector<2x8x8xf32>
    %cst_34 = arith.constant dense<0xFF800000> : vector<2x8xf32>
    %115 = vector.multi_reduction <maximumf>, %114, %cst_34 [2] : vector<2x8x8xf32> to vector<2x8xf32>
    %116 = vector.shape_cast %115 : vector<2x8xf32> to vector<2x8x1xf32>
    %117 = vector.broadcast %116 : vector<2x8x1xf32> to vector<2x8x8xf32>
    %118 = arith.subf %114, %117 : vector<2x8x8xf32>
    %119 = math.exp %118 : vector<2x8x8xf32>
    %cst_35 = arith.constant dense<0.000000e+00> : vector<2x8xf32>
    %120 = vector.multi_reduction <add>, %119, %cst_35 [2] : vector<2x8x8xf32> to vector<2x8xf32>
    %121 = vector.shape_cast %120 : vector<2x8xf32> to vector<2x8x1xf32>
    %122 = vector.broadcast %121 : vector<2x8x1xf32> to vector<2x8x8xf32>
    %123 = arith.divf %119, %122 : vector<2x8x8xf32>
    %124 = arith.truncf %123 : vector<2x8x8xf32> to vector<2x8x8xbf16>
    "tpu.trace_start"() <{level = 10 : i32, message = "bqk,bkd->bqd"}> : () -> ()
    %cst_36 = arith.constant dense<0.000000e+00> : vector<2x8x32xf32>
    %125 = tpu.matmul %124, %111, %cst_36 {dimension_numbers = #tpu.dot_dimension_numbers<[2], [1], [1], [2], [0, 0, 0, 1, 1, 2], [0], [0]>} : vector<2x8x8xbf16>, vector<2x8x32xbf16>, vector<2x8x32xf32> -> vector<2x8x32xf32>
    "tpu.trace_stop"() : () -> ()
    %126 = vector.extract_strided_slice %17 {offsets = [0, 0, 192], sizes = [2, 8, 32], strides = [1, 1, 1]} : vector<2x8x256xbf16> to vector<2x8x32xbf16>
    %127 = vector.extract_strided_slice %20 {offsets = [0, 0, 192], sizes = [2, 8, 32], strides = [1, 1, 1]} : vector<2x8x256xbf16> to vector<2x8x32xbf16>
    %128 = vector.extract_strided_slice %23 {offsets = [0, 0, 192], sizes = [2, 8, 32], strides = [1, 1, 1]} : vector<2x8x256xbf16> to vector<2x8x32xbf16>
    "tpu.trace_start"() <{level = 10 : i32, message = "bqd,bkd->bqk"}> : () -> ()
    %cst_37 = arith.constant dense<0.000000e+00> : vector<2x8x8xf32>
    %129 = tpu.matmul %126, %127, %cst_37 {dimension_numbers = #tpu.dot_dimension_numbers<[2], [2], [1], [1], [0, 0, 0, 1, 1, 1], [0], [0]>} : vector<2x8x32xbf16>, vector<2x8x32xbf16>, vector<2x8x8xf32> -> vector<2x8x8xf32>
    "tpu.trace_stop"() : () -> ()
    %cst_38 = arith.constant 0.176776692 : f32
    %130 = vector.broadcast %cst_38 : f32 to vector<2x8x8xf32>
    %131 = arith.mulf %129, %130 : vector<2x8x8xf32>
    %cst_39 = arith.constant dense<0xFF800000> : vector<2x8xf32>
    %132 = vector.multi_reduction <maximumf>, %131, %cst_39 [2] : vector<2x8x8xf32> to vector<2x8xf32>
    %133 = vector.shape_cast %132 : vector<2x8xf32> to vector<2x8x1xf32>
    %134 = vector.broadcast %133 : vector<2x8x1xf32> to vector<2x8x8xf32>
    %135 = arith.subf %131, %134 : vector<2x8x8xf32>
    %136 = math.exp %135 : vector<2x8x8xf32>
    %cst_40 = arith.constant dense<0.000000e+00> : vector<2x8xf32>
    %137 = vector.multi_reduction <add>, %136, %cst_40 [2] : vector<2x8x8xf32> to vector<2x8xf32>
    %138 = vector.shape_cast %137 : vector<2x8xf32> to vector<2x8x1xf32>
    %139 = vector.broadcast %138 : vector<2x8x1xf32> to vector<2x8x8xf32>
    %140 = arith.divf %136, %139 : vector<2x8x8xf32>
    %141 = arith.truncf %140 : vector<2x8x8xf32> to vector<2x8x8xbf16>
    "tpu.trace_start"() <{level = 10 : i32, message = "bqk,bkd->bqd"}> : () -> ()
    %cst_41 = arith.constant dense<0.000000e+00> : vector<2x8x32xf32>
    %142 = tpu.matmul %141, %128, %cst_41 {dimension_numbers = #tpu.dot_dimension_numbers<[2], [1], [1], [2], [0, 0, 0, 1, 1, 2], [0], [0]>} : vector<2x8x8xbf16>, vector<2x8x32xbf16>, vector<2x8x32xf32> -> vector<2x8x32xf32>
    "tpu.trace_stop"() : () -> ()
    %143 = vector.extract_strided_slice %17 {offsets = [0, 0, 224], sizes = [2, 8, 32], strides = [1, 1, 1]} : vector<2x8x256xbf16> to vector<2x8x32xbf16>
    %144 = vector.extract_strided_slice %20 {offsets = [0, 0, 224], sizes = [2, 8, 32], strides = [1, 1, 1]} : vector<2x8x256xbf16> to vector<2x8x32xbf16>
    %145 = vector.extract_strided_slice %23 {offsets = [0, 0, 224], sizes = [2, 8, 32], strides = [1, 1, 1]} : vector<2x8x256xbf16> to vector<2x8x32xbf16>
    "tpu.trace_start"() <{level = 10 : i32, message = "bqd,bkd->bqk"}> : () -> ()
    %cst_42 = arith.constant dense<0.000000e+00> : vector<2x8x8xf32>
    %146 = tpu.matmul %143, %144, %cst_42 {dimension_numbers = #tpu.dot_dimension_numbers<[2], [2], [1], [1], [0, 0, 0, 1, 1, 1], [0], [0]>} : vector<2x8x32xbf16>, vector<2x8x32xbf16>, vector<2x8x8xf32> -> vector<2x8x8xf32>
    "tpu.trace_stop"() : () -> ()
    %cst_43 = arith.constant 0.176776692 : f32
    %147 = vector.broadcast %cst_43 : f32 to vector<2x8x8xf32>
    %148 = arith.mulf %146, %147 : vector<2x8x8xf32>
    %cst_44 = arith.constant dense<0xFF800000> : vector<2x8xf32>
    %149 = vector.multi_reduction <maximumf>, %148, %cst_44 [2] : vector<2x8x8xf32> to vector<2x8xf32>
    %150 = vector.shape_cast %149 : vector<2x8xf32> to vector<2x8x1xf32>
    %151 = vector.broadcast %150 : vector<2x8x1xf32> to vector<2x8x8xf32>
    %152 = arith.subf %148, %151 : vector<2x8x8xf32>
    %153 = math.exp %152 : vector<2x8x8xf32>
    %cst_45 = arith.constant dense<0.000000e+00> : vector<2x8xf32>
    %154 = vector.multi_reduction <add>, %153, %cst_45 [2] : vector<2x8x8xf32> to vector<2x8xf32>
    %155 = vector.shape_cast %154 : vector<2x8xf32> to vector<2x8x1xf32>
    %156 = vector.broadcast %155 : vector<2x8x1xf32> to vector<2x8x8xf32>
    %157 = arith.divf %153, %156 : vector<2x8x8xf32>
    %158 = arith.truncf %157 : vector<2x8x8xf32> to vector<2x8x8xbf16>
    "tpu.trace_start"() <{level = 10 : i32, message = "bqk,bkd->bqd"}> : () -> ()
    %cst_46 = arith.constant dense<0.000000e+00> : vector<2x8x32xf32>
    %159 = tpu.matmul %158, %145, %cst_46 {dimension_numbers = #tpu.dot_dimension_numbers<[2], [1], [1], [2], [0, 0, 0, 1, 1, 2], [0], [0]>} : vector<2x8x8xbf16>, vector<2x8x32xbf16>, vector<2x8x32xf32> -> vector<2x8x32xf32>
    "tpu.trace_stop"() : () -> ()
    %160 = tpu.concatenate %40, %57, %74, %91, %108, %125, %142, %159 in 2 : vector<2x8x32xf32>, vector<2x8x32xf32>, vector<2x8x32xf32>, vector<2x8x32xf32>, vector<2x8x32xf32>, vector<2x8x32xf32>, vector<2x8x32xf32>, vector<2x8x32xf32> -> vector<2x8x256xf32>
    %161 = vector.shape_cast %160 : vector<2x8x256xf32> to vector<16x256xf32>
    %162 = arith.truncf %161 : vector<16x256xf32> to vector<16x256xbf16>
    %163 = arith.index_cast %arg1 : i32 to index
    %c0_47 = arith.constant 0 : index
    %c0_48 = arith.constant 0 : index
    %164 = vector.load %arg6[%163, %c0_47, %c0_48] : memref<6x256x256xbf16, #tpu.memory_space<vmem>>, vector<1x256x256xbf16>
    %165 = vector.shape_cast %164 : vector<1x256x256xbf16> to vector<256x256xbf16>
    %cst_49 = arith.constant dense<0.000000e+00> : vector<16x256xf32>
    %166 = tpu.matmul %162, %165, %cst_49 {dimension_numbers = #tpu.dot_dimension_numbers<[1], [0], [0], [1], [0, 0, 1, 1], [], []>} : vector<16x256xbf16>, vector<256x256xbf16>, vector<16x256xf32> -> vector<16x256xf32>
    %167 = arith.index_cast %arg1 : i32 to index
    %c0_50 = arith.constant 0 : index
    %c0_51 = arith.constant 0 : index
    %168 = vector.load %arg7[%167, %c0_50, %c0_51] : memref<6x1x256xf32, #tpu.memory_space<vmem>>, vector<1x1x256xf32>
    %169 = vector.shape_cast %168 : vector<1x1x256xf32> to vector<1x256xf32>
    %170 = vector.broadcast %169 : vector<1x256xf32> to vector<16x256xf32>
    %171 = arith.addf %166, %170 : vector<16x256xf32>
    %172 = arith.addf %4, %171 : vector<16x256xf32>
    %173 = arith.index_cast %arg1 : i32 to index
    %c0_52 = arith.constant 0 : index
    %c0_53 = arith.constant 0 : index
    %174 = vector.load %arg12[%173, %c0_52, %c0_53] : memref<6x1x256xf32, #tpu.memory_space<vmem>>, vector<1x1x256xf32>
    %175 = vector.shape_cast %174 : vector<1x1x256xf32> to vector<1x256xf32>
    %176 = arith.index_cast %arg1 : i32 to index
    %c0_54 = arith.constant 0 : index
    %c0_55 = arith.constant 0 : index
    %177 = vector.load %arg13[%176, %c0_54, %c0_55] : memref<6x1x256xf32, #tpu.memory_space<vmem>>, vector<1x1x256xf32>
    %178 = vector.shape_cast %177 : vector<1x1x256xf32> to vector<1x256xf32>
    %cst_56 = arith.constant dense<0.000000e+00> : vector<16xf32>
    %179 = vector.multi_reduction <add>, %172, %cst_56 [1] : vector<16x256xf32> to vector<16xf32>
    %180 = vector.shape_cast %179 : vector<16xf32> to vector<16x1xf32>
    %cst_57 = arith.constant 2.560000e+02 : f32
    %181 = vector.broadcast %cst_57 : f32 to vector<16x1xf32>
    %182 = arith.divf %180, %181 : vector<16x1xf32>
    %183 = vector.broadcast %182 : vector<16x1xf32> to vector<16x256xf32>
    %184 = arith.subf %172, %183 : vector<16x256xf32>
    %185 = arith.mulf %184, %184 : vector<16x256xf32>
    %cst_58 = arith.constant dense<0.000000e+00> : vector<16xf32>
    %186 = vector.multi_reduction <add>, %185, %cst_58 [1] : vector<16x256xf32> to vector<16xf32>
    %187 = vector.shape_cast %186 : vector<16xf32> to vector<16x1xf32>
    %cst_59 = arith.constant 2.560000e+02 : f32
    %188 = vector.broadcast %cst_59 : f32 to vector<16x1xf32>
    %189 = arith.divf %187, %188 : vector<16x1xf32>
    %190 = vector.broadcast %182 : vector<16x1xf32> to vector<16x256xf32>
    %191 = arith.subf %172, %190 : vector<16x256xf32>
    %cst_60 = arith.constant 9.99999974E-6 : f32
    %192 = vector.broadcast %cst_60 : f32 to vector<16x1xf32>
    %193 = arith.addf %189, %192 : vector<16x1xf32>
    %194 = math.rsqrt %193 : vector<16x1xf32>
    %195 = vector.broadcast %194 : vector<16x1xf32> to vector<16x256xf32>
    %196 = arith.mulf %191, %195 : vector<16x256xf32>
    %197 = vector.broadcast %175 : vector<1x256xf32> to vector<16x256xf32>
    %198 = arith.mulf %196, %197 : vector<16x256xf32>
    %199 = vector.broadcast %178 : vector<1x256xf32> to vector<16x256xf32>
    %200 = arith.addf %198, %199 : vector<16x256xf32>
    %201 = arith.truncf %200 : vector<16x256xf32> to vector<16x256xbf16>
    %202 = arith.index_cast %arg1 : i32 to index
    %c0_61 = arith.constant 0 : index
    %c0_62 = arith.constant 0 : index
    %203 = vector.load %arg8[%202, %c0_61, %c0_62] : memref<6x256x1024xbf16, #tpu.memory_space<vmem>>, vector<1x256x1024xbf16>
    %204 = vector.shape_cast %203 : vector<1x256x1024xbf16> to vector<256x1024xbf16>
    %cst_63 = arith.constant dense<0.000000e+00> : vector<16x1024xf32>
    %205 = tpu.matmul %201, %204, %cst_63 {dimension_numbers = #tpu.dot_dimension_numbers<[1], [0], [0], [1], [0, 0, 1, 1], [], []>} : vector<16x256xbf16>, vector<256x1024xbf16>, vector<16x1024xf32> -> vector<16x1024xf32>
    %206 = arith.index_cast %arg1 : i32 to index
    %c0_64 = arith.constant 0 : index
    %c0_65 = arith.constant 0 : index
    %207 = vector.load %arg9[%206, %c0_64, %c0_65] : memref<6x1x1024xf32, #tpu.memory_space<vmem>>, vector<1x1x1024xf32>
    %208 = vector.shape_cast %207 : vector<1x1x1024xf32> to vector<1x1024xf32>
    %209 = vector.broadcast %208 : vector<1x1024xf32> to vector<16x1024xf32>
    %210 = arith.addf %205, %209 : vector<16x1024xf32>
    %cst_66 = arith.constant 0.000000e+00 : f32
    %211 = vector.broadcast %cst_66 : f32 to vector<16x1024xf32>
    %212 = arith.maximumf %210, %211 : vector<16x1024xf32>
    %213 = arith.truncf %212 : vector<16x1024xf32> to vector<16x1024xbf16>
    %214 = arith.index_cast %arg1 : i32 to index
    %c0_67 = arith.constant 0 : index
    %c0_68 = arith.constant 0 : index
    %215 = vector.load %arg10[%214, %c0_67, %c0_68] : memref<6x1024x256xbf16, #tpu.memory_space<vmem>>, vector<1x1024x256xbf16>
    %216 = vector.shape_cast %215 : vector<1x1024x256xbf16> to vector<1024x256xbf16>
    %cst_69 = arith.constant dense<0.000000e+00> : vector<16x256xf32>
    %217 = tpu.matmul %213, %216, %cst_69 {dimension_numbers = #tpu.dot_dimension_numbers<[1], [0], [0], [1], [0, 0, 1, 1], [], []>} : vector<16x1024xbf16>, vector<1024x256xbf16>, vector<16x256xf32> -> vector<16x256xf32>
    %218 = arith.index_cast %arg1 : i32 to index
    %c0_70 = arith.constant 0 : index
    %c0_71 = arith.constant 0 : index
    %219 = vector.load %arg11[%218, %c0_70, %c0_71] : memref<6x1x256xf32, #tpu.memory_space<vmem>>, vector<1x1x256xf32>
    %220 = vector.shape_cast %219 : vector<1x1x256xf32> to vector<1x256xf32>
    %221 = vector.broadcast %220 : vector<1x256xf32> to vector<16x256xf32>
    %222 = arith.addf %217, %221 : vector<16x256xf32>
    %223 = arith.addf %200, %222 : vector<16x256xf32>
    %224 = arith.index_cast %arg1 : i32 to index
    %c0_72 = arith.constant 0 : index
    %c0_73 = arith.constant 0 : index
    %225 = vector.load %arg14[%224, %c0_72, %c0_73] : memref<6x1x256xf32, #tpu.memory_space<vmem>>, vector<1x1x256xf32>
    %226 = vector.shape_cast %225 : vector<1x1x256xf32> to vector<1x256xf32>
    %227 = arith.index_cast %arg1 : i32 to index
    %c0_74 = arith.constant 0 : index
    %c0_75 = arith.constant 0 : index
    %228 = vector.load %arg15[%227, %c0_74, %c0_75] : memref<6x1x256xf32, #tpu.memory_space<vmem>>, vector<1x1x256xf32>
    %229 = vector.shape_cast %228 : vector<1x1x256xf32> to vector<1x256xf32>
    %cst_76 = arith.constant dense<0.000000e+00> : vector<16xf32>
    %230 = vector.multi_reduction <add>, %223, %cst_76 [1] : vector<16x256xf32> to vector<16xf32>
    %231 = vector.shape_cast %230 : vector<16xf32> to vector<16x1xf32>
    %cst_77 = arith.constant 2.560000e+02 : f32
    %232 = vector.broadcast %cst_77 : f32 to vector<16x1xf32>
    %233 = arith.divf %231, %232 : vector<16x1xf32>
    %234 = vector.broadcast %233 : vector<16x1xf32> to vector<16x256xf32>
    %235 = arith.subf %223, %234 : vector<16x256xf32>
    %236 = arith.mulf %235, %235 : vector<16x256xf32>
    %cst_78 = arith.constant dense<0.000000e+00> : vector<16xf32>
    %237 = vector.multi_reduction <add>, %236, %cst_78 [1] : vector<16x256xf32> to vector<16xf32>
    %238 = vector.shape_cast %237 : vector<16xf32> to vector<16x1xf32>
    %cst_79 = arith.constant 2.560000e+02 : f32
    %239 = vector.broadcast %cst_79 : f32 to vector<16x1xf32>
    %240 = arith.divf %238, %239 : vector<16x1xf32>
    %241 = vector.broadcast %233 : vector<16x1xf32> to vector<16x256xf32>
    %242 = arith.subf %223, %241 : vector<16x256xf32>
    %cst_80 = arith.constant 9.99999974E-6 : f32
    %243 = vector.broadcast %cst_80 : f32 to vector<16x1xf32>
    %244 = arith.addf %240, %243 : vector<16x1xf32>
    %245 = math.rsqrt %244 : vector<16x1xf32>
    %246 = vector.broadcast %245 : vector<16x1xf32> to vector<16x256xf32>
    %247 = arith.mulf %242, %246 : vector<16x256xf32>
    %248 = vector.broadcast %226 : vector<1x256xf32> to vector<16x256xf32>
    %249 = arith.mulf %247, %248 : vector<16x256xf32>
    %250 = vector.broadcast %229 : vector<1x256xf32> to vector<16x256xf32>
    %251 = arith.addf %249, %250 : vector<16x256xf32>
    %252 = vector.shape_cast %251 : vector<16x256xf32> to vector<2x8x256xf32>
    %c0_81 = arith.constant 0 : index
    %c0_82 = arith.constant 0 : index
    %c0_83 = arith.constant 0 : index
    %253 = vector.load %arg16[%c0_81, %c0_82, %c0_83] : memref<2x8x256xf32, #tpu.memory_space<vmem>>, vector<2x8x256xf32>
    tpu.vector_store %arg16[%c0_81, %c0_82, %c0_83], %252 {strides = array<i32>} : memref<2x8x256xf32, #tpu.memory_space<vmem>>, vector<2x8x256xf32>,
    return
  }
  func.func @transform_0(%arg0: i32, %arg1: i32) -> (i32, i32, i32) {
    %c0_i32 = arith.constant 0 : i32
    %c0_i32_0 = arith.constant 0 : i32
    %c0_i32_1 = arith.constant 0 : i32
    return %arg0, %c0_i32, %c0_i32_0 : i32, i32, i32
  }
  func.func @transform_1(%arg0: i32, %arg1: i32) -> (i32, i32) {
    %c0_i32 = arith.constant 0 : i32
    %c0_i32_0 = arith.constant 0 : i32
    %c0_i32_1 = arith.constant 0 : i32
    return %c0_i32, %c0_i32_0 : i32, i32
  }
  func.func @transform_2(%arg0: i32, %arg1: i32) -> (i32, i32, i32) {
    %c0_i32 = arith.constant 0 : i32
    %c0_i32_0 = arith.constant 0 : i32
    %c0_i32_1 = arith.constant 0 : i32
    %c0_i32_2 = arith.constant 0 : i32
    return %c0_i32, %c0_i32_0, %c0_i32_1 : i32, i32, i32
  }
  func.func @transform_3(%arg0: i32, %arg1: i32) -> (i32, i32, i32) {
    %c0_i32 = arith.constant 0 : i32
    %c0_i32_0 = arith.constant 0 : i32
    %c0_i32_1 = arith.constant 0 : i32
    %c0_i32_2 = arith.constant 0 : i32
    return %c0_i32, %c0_i32_0, %c0_i32_1 : i32, i32, i32
  }
  func.func @transform_4(%arg0: i32, %arg1: i32) -> (i32, i32, i32) {
    %c0_i32 = arith.constant 0 : i32
    %c0_i32_0 = arith.constant 0 : i32
    %c0_i32_1 = arith.constant 0 : i32
    %c0_i32_2 = arith.constant 0 : i32
    return %c0_i32, %c0_i32_0, %c0_i32_1 : i32, i32, i32
  }
  func.func @transform_5(%arg0: i32, %arg1: i32) -> (i32, i32, i32) {
    %c0_i32 = arith.constant 0 : i32
    %c0_i32_0 = arith.constant 0 : i32
    %c0_i32_1 = arith.constant 0 : i32
    %c0_i32_2 = arith.constant 0 : i32
    return %c0_i32, %c0_i32_0, %c0_i32_1 : i32, i32, i32
  }
  func.func @transform_6(%arg0: i32, %arg1: i32) -> (i32, i32, i32) {
    %c0_i32 = arith.constant 0 : i32
    %c0_i32_0 = arith.constant 0 : i32
    %c0_i32_1 = arith.constant 0 : i32
    %c0_i32_2 = arith.constant 0 : i32
    return %c0_i32, %c0_i32_0, %c0_i32_1 : i32, i32, i32
  }
  func.func @transform_7(%arg0: i32, %arg1: i32) -> (i32, i32, i32) {
    %c0_i32 = arith.constant 0 : i32
    %c0_i32_0 = arith.constant 0 : i32
    %c0_i32_1 = arith.constant 0 : i32
    %c0_i32_2 = arith.constant 0 : i32
    return %c0_i32, %c0_i32_0, %c0_i32_1 : i32, i32, i32
  }
  func.func @transform_8(%arg0: i32, %arg1: i32) -> (i32, i32, i32) {
    %c0_i32 = arith.constant 0 : i32
    %c0_i32_0 = arith.constant 0 : i32
    %c0_i32_1 = arith.constant 0 : i32
    %c0_i32_2 = arith.constant 0 : i32
    return %c0_i32, %c0_i32_0, %c0_i32_1 : i32, i32, i32
  }
  func.func @transform_9(%arg0: i32, %arg1: i32) -> (i32, i32, i32) {
    %c0_i32 = arith.constant 0 : i32
    %c0_i32_0 = arith.constant 0 : i32
    %c0_i32_1 = arith.constant 0 : i32
    %c0_i32_2 = arith.constant 0 : i32
    return %c0_i32, %c0_i32_0, %c0_i32_1 : i32, i32, i32
  }
  func.func @transform_10(%arg0: i32, %arg1: i32) -> (i32, i32, i32) {
    %c0_i32 = arith.constant 0 : i32
    %c0_i32_0 = arith.constant 0 : i32
    %c0_i32_1 = arith.constant 0 : i32
    %c0_i32_2 = arith.constant 0 : i32
    return %c0_i32, %c0_i32_0, %c0_i32_1 : i32, i32, i32
  }
  func.func @transform_11(%arg0: i32, %arg1: i32) -> (i32, i32, i32) {
    %c0_i32 = arith.constant 0 : i32
    %c0_i32_0 = arith.constant 0 : i32
    %c0_i32_1 = arith.constant 0 : i32
    %c0_i32_2 = arith.constant 0 : i32
    return %c0_i32, %c0_i32_0, %c0_i32_1 : i32, i32, i32
  }
  func.func @transform_12(%arg0: i32, %arg1: i32) -> (i32, i32, i32) {
    %c0_i32 = arith.constant 0 : i32
    %c0_i32_0 = arith.constant 0 : i32
    %c0_i32_1 = arith.constant 0 : i32
    %c0_i32_2 = arith.constant 0 : i32
    return %c0_i32, %c0_i32_0, %c0_i32_1 : i32, i32, i32
  }
  func.func @transform_13(%arg0: i32, %arg1: i32) -> (i32, i32, i32) {
    %c0_i32 = arith.constant 0 : i32
    %c0_i32_0 = arith.constant 0 : i32
    %c0_i32_1 = arith.constant 0 : i32
    %c0_i32_2 = arith.constant 0 : i32
    return %c0_i32, %c0_i32_0, %c0_i32_1 : i32, i32, i32
  }
  func.func @transform_14(%arg0: i32, %arg1: i32) -> (i32, i32, i32) {
    %c0_i32 = arith.constant 0 : i32
    %c0_i32_0 = arith.constant 0 : i32
    %c0_i32_1 = arith.constant 0 : i32
    return %arg0, %c0_i32, %c0_i32_0 : i32, i32, i32
  }
}

</mosaic_0001>

<llo_original>
// kernel: transformer_encoder.1
$region0: #{transformer_encoder.1}
  #allocation0 [shape = 'u32[]', space=smem, size = 0x4, offset = 0x4, fixed_abs, tag = 'smem constant byte address 0x4 - core index']
  #allocation1 [shape = 'u32[144,128]{1,0:T(1,128)}', space=vmem, size = 0x12000, scoped, tag = 'internal scratch']
  %s0 = inlined_call_operand.hbm [shape: f32[2,8,256], index: 0, kind: input, shape index: {}]
  %s1 = inlined_call_operand.hbm [shape: f32[8,256], index: 1, kind: input, shape index: {}]
  %s2 = inlined_call_operand.hbm [shape: bf16[6,256,768], index: 2, kind: input, shape index: {}]
  %s3 = inlined_call_operand.hbm [shape: f32[6,1,768], index: 3, kind: input, shape index: {}]
  %s4 = inlined_call_operand.hbm [shape: bf16[6,256,256], index: 4, kind: input, shape index: {}]
  %s5 = inlined_call_operand.hbm [shape: f32[6,1,256], index: 5, kind: input, shape index: {}]
  %s6 = inlined_call_operand.hbm [shape: bf16[6,256,1024], index: 6, kind: input, shape index: {}]
  %s7 = inlined_call_operand.hbm [shape: f32[6,1,1024], index: 7, kind: input, shape index: {}]
  %s8 = inlined_call_operand.hbm [shape: bf16[6,1024,256], index: 8, kind: input, shape index: {}]
  %s9 = inlined_call_operand.hbm [shape: f32[6,1,256], index: 9, kind: input, shape index: {}]
  %s10 = inlined_call_operand.hbm [shape: f32[6,1,256], index: 10, kind: input, shape index: {}]
  %s11 = inlined_call_operand.hbm [shape: f32[6,1,256], index: 11, kind: input, shape index: {}]
  %s12 = inlined_call_operand.hbm [shape: f32[6,1,256], index: 12, kind: input, shape index: {}]
  %s13 = inlined_call_operand.hbm [shape: f32[6,1,256], index: 13, kind: input, shape index: {}]
  %s14 = inlined_call_operand.hbm [shape: f32[2,8,256], index: 14, kind: output, shape index: {}]
  %s15 = sld [smem:[#allocation0]]
  $region149: #{transformer_encoder.1} parent=0
    _
  %s17 = ssub.s32 1, %s15
  %s18 = scalar_select 0, %s17, %s15
  $region1: #{transformer_encoder.1} parent=0
    #allocation2 [shape = 'u8[16384]{0}', space=vmem, size = 0x4000, scoped, tag = 'input window, operand 0, single buffered']
    #allocation3 [shape = 's32[2]{0}', space=sflag, size = 0x8, scoped, tag = 'scoped memory for transformer_encoder.1']
    #allocation4 [shape = 's32[2]{0}', space=sflag, size = 0x8, scoped, tag = 'scoped memory for transformer_encoder.1']
    #allocation5 [shape = 'u8[8192]{0}', space=vmem, size = 0x2000, scoped, tag = 'input window, operand 1, single buffered']
    #allocation6 [shape = 's32[1]{0}', space=sflag, size = 0x4, scoped, tag = 'scoped memory for transformer_encoder.1']
    #allocation7 [shape = 'u8[2359296]{0}', space=vmem, size = 0x240000, scoped, tag = 'input window, operand 2, single buffered']
    #allocation8 [shape = 'u8[18432]{0}', space=vmem, size = 0x4800, scoped, tag = 'input window, operand 3, single buffered']
    #allocation9 [shape = 's32[1]{0}', space=sflag, size = 0x4, scoped, tag = 'scoped memory for transformer_encoder.1']
    #allocation10 [shape = 'u8[786432]{0}', space=vmem, size = 0xc0000, scoped, tag = 'input window, operand 4, single buffered']
    #allocation11 [shape = 'u8[6144]{0}', space=vmem, size = 0x1800, scoped, tag = 'input window, operand 5, single buffered']
    #allocation12 [shape = 's32[1]{0}', space=sflag, size = 0x4, scoped, tag = 'scoped memory for transformer_encoder.1']
    #allocation13 [shape = 'u8[3145728]{0}', space=vmem, size = 0x300000, scoped, tag = 'input window, operand 6, single buffered']
    #allocation14 [shape = 'u8[24576]{0}', space=vmem, size = 0x6000, scoped, tag = 'input window, operand 7, single buffered']
    #allocation15 [shape = 's32[1]{0}', space=sflag, size = 0x4, scoped, tag = 'scoped memory for transformer_encoder.1']
    #allocation16 [shape = 'u8[3145728]{0}', space=vmem, size = 0x300000, scoped, tag = 'input window, operand 8, single buffered']
    #allocation17 [shape = 'u8[6144]{0}', space=vmem, size = 0x1800, scoped, tag = 'input window, operand 9, single buffered']
    #allocation18 [shape = 's32[1]{0}', space=sflag, size = 0x4, scoped, tag = 'scoped memory for transformer_encoder.1']
    #allocation19 [shape = 'u8[6144]{0}', space=vmem, size = 0x1800, scoped, tag = 'input window, operand 10, single buffered']
    #allocation20 [shape = 'u8[6144]{0}', space=vmem, size = 0x1800, scoped, tag = 'input window, operand 11, single buffered']
    #allocation21 [shape = 's32[1]{0}', space=sflag, size = 0x4, scoped, tag = 'scoped memory for transformer_encoder.1']
    #allocation22 [shape = 'u8[6144]{0}', space=vmem, size = 0x1800, scoped, tag = 'input window, operand 12, single buffered']
    #allocation23 [shape = 'u8[6144]{0}', space=vmem, size = 0x1800, scoped, tag = 'input window, operand 13, single buffered']
    #allocation24 [shape = 's32[1]{0}', space=sflag, size = 0x4, scoped, tag = 'scoped memory for transformer_encoder.1']
    #allocation25 [shape = 'u8[16384]{0}', space=vmem, size = 0x4000, scoped, tag = 'output window, operand 0, single buffered']
    %19 = vsyncpa [#allocation3], 0
    %20 = vsyncpa [#allocation6], 0
    %21 = vsyncpa [#allocation9], 0
    %22 = vsyncpa [#allocation12], 0
    %23 = vsyncpa [#allocation15], 0
    %24 = vsyncpa [#allocation18], 0
    %25 = vsyncpa [#allocation21], 0
    %26 = vsyncpa [#allocation24], 0
    %27 = vsyncpa [#allocation4], 0
    loop: start=0, step=1, limit=8
    $region2: #{transformer_encoder.1} parent=1 // loop_pre_header
      _
    $region3: #{transformer_encoder.1} parent=1 // loop_header
      %s29 = sphi 0, %s33
      %p30 = scmp.ge.s32.totalorder %s29, 8
      %s36 = sphi 0, %s48
      %s37 = sphi 0, %s44
      %s38 = sphi 0, %s36
      %s39 = sphi 0, %s37
      %s40 = sphi 0, %s38
      %s41 = sphi 0, %s39
      %s51 = sphi 0, %s53
      %s54 = sphi 0, %s51
      %s55 = sphi 0, %s54
      %s71 = sphi 0, %s55
      %s75 = sphi 0, %s75
      %s77 = sphi 0, %s75
      %s78 = sphi 0, %s77
      %s92 = sphi 0, %s78
      %s96 = sphi 0, %s96
      %s98 = sphi 0, %s96
      %s99 = sphi 0, %s98
      %s113 = sphi 0, %s99
      %s117 = sphi 0, %s117
      %s119 = sphi 0, %s117
      %s120 = sphi 0, %s119
      %s134 = sphi 0, %s120
      %s138 = sphi 0, %s138
      %s140 = sphi 0, %s138
      %s141 = sphi 0, %s140
      %s155 = sphi 0, %s141
      %s159 = sphi 0, %s159
      %s161 = sphi 0, %s159
      %s162 = sphi 0, %s161
      %s176 = sphi 0, %s162
      %s180 = sphi 0, %s180
      %s182 = sphi 0, %s180
      %s183 = sphi 0, %s182
      %s197 = sphi 0, %s183
      %s201 = sphi 0, %s201
      %s203 = sphi 0, %s201
      %s204 = sphi 0, %s203
      %s218 = sphi 0, %s204
      %s222 = sphi 0, %s222
      %s224 = sphi 0, %s222
      %s225 = sphi 0, %s224
      %s239 = sphi 0, %s225
      %s243 = sphi 0, %s243
      %s245 = sphi 0, %s243
      %s246 = sphi 0, %s245
      %s260 = sphi 0, %s246
      %s264 = sphi 0, %s264
      %s266 = sphi 0, %s264
      %s267 = sphi 0, %s266
      %s281 = sphi 0, %s267
      %s285 = sphi 0, %s285
      %s287 = sphi 0, %s285
      %s288 = sphi 0, %s287
      %s302 = sphi 0, %s288
      %s306 = sphi 0, %s306
      %s308 = sphi 0, %s306
      %s309 = sphi 0, %s308
      %s323 = sphi 0, %s309
      %s327 = sphi 0, %s327
      %s329 = sphi 0, %s327
      %s330 = sphi 0, %s329
      %s344 = sphi 0, %s330
      %s350 = sphi 0, %s352
      %s353 = sphi 0, %s350
      %s354 = sphi 0, %s353
      %s370 = sphi 0, %s354
    $region4: #{transformer_encoder.1} parent=1 // loop_header_branch
      %32 = sbr.rel (%p30) target = $region8
    $region5: #{transformer_encoder.1} parent=1 // loop_body
      %s34 = ssub.s32 %s29, 1
      %s35 = ssub.s32 %s29, 2
      %s42 = sadd.s32 1, %s37
      %p43 = scmp.ge.s32.totalorder %s42, 6
      %s44 = scalar_select %p43, 0, %s42
      %s45 = sadd.s32 1, %s36
      %s46 = scalar_select %p43, %s45, %s36
      %p47 = scmp.ge.s32.totalorder %s46, 1
      %s48 = scalar_select %p47, 0, %s46
      %s49 = ssub.s32 %s36, %s48
      %p50 = scmp.eq.s32.totalorder %s49, 0
      %s52 = sadd.s32 %s51, 1
      %s53 = scalar_select %p50, %s51, %s52
      %p56 = pneg %p50
      %p57 = scmp.eq.s32.totalorder %s29, 5
      %p58 = por %p56, %p57
      %p59 = scmp.ne.s32.totalorder %s51, %s54
      %p60 = scmp.eq.s32.totalorder %s29, 0
      %p61 = por %p59, %p60
      %p62 = scmp.ne.s32.totalorder %s51, %s54
      %p63 = scmp.eq.s32.totalorder %s34, 5
      %p64 = por %p62, %p63
      %p65 = scmp.ne.s32.totalorder %s54, %s55
      %p66 = scmp.eq.s32.totalorder %s34, 0
      %p67 = por %p65, %p66
      %p68 = scmp.ne.s32.totalorder %s54, %s55
      %p69 = scmp.eq.s32.totalorder %s35, 5
      %p70 = por %p68, %p69
      %p72 = scmp.ne.s32.totalorder %s55, %s71
      %p73 = scmp.eq.s32.totalorder %s35, 0
      %p74 = por %p72, %p73
      %s76 = sadd.s32 %s75, 1
      %p79 = scmp.eq.s32.totalorder %s29, 5
      %p80 = scmp.ne.s32.totalorder %s75, %s77
      %p81 = scmp.eq.s32.totalorder %s29, 0
      %p82 = por %p80, %p81
      %p83 = scmp.ne.s32.totalorder %s75, %s77
      %p84 = scmp.eq.s32.totalorder %s34, 5
      %p85 = por %p83, %p84
      %p86 = scmp.ne.s32.totalorder %s77, %s78
      %p87 = scmp.eq.s32.totalorder %s34, 0
      %p88 = por %p86, %p87
      %p89 = scmp.ne.s32.totalorder %s77, %s78
      %p90 = scmp.eq.s32.totalorder %s35, 5
      %p91 = por %p89, %p90
      %p93 = scmp.ne.s32.totalorder %s78, %s92
      %p94 = scmp.eq.s32.totalorder %s35, 0
      %p95 = por %p93, %p94
      %s97 = sadd.s32 %s96, 1
      %p100 = scmp.eq.s32.totalorder %s29, 5
      %p101 = scmp.ne.s32.totalorder %s96, %s98
      %p102 = scmp.eq.s32.totalorder %s29, 0
      %p103 = por %p101, %p102
      %p104 = scmp.ne.s32.totalorder %s96, %s98
      %p105 = scmp.eq.s32.totalorder %s34, 5
      %p106 = por %p104, %p105
      %p107 = scmp.ne.s32.totalorder %s98, %s99
      %p108 = scmp.eq.s32.totalorder %s34, 0
      %p109 = por %p107, %p108
      %p110 = scmp.ne.s32.totalorder %s98, %s99
      %p111 = scmp.eq.s32.totalorder %s35, 5
      %p112 = por %p110, %p111
      %p114 = scmp.ne.s32.totalorder %s99, %s113
      %p115 = scmp.eq.s32.totalorder %s35, 0
      %p116 = por %p114, %p115
      %s118 = sadd.s32 %s117, 1
      %p121 = scmp.eq.s32.totalorder %s29, 5
      %p122 = scmp.ne.s32.totalorder %s117, %s119
      %p123 = scmp.eq.s32.totalorder %s29, 0
      %p124 = por %p122, %p123
      %p125 = scmp.ne.s32.totalorder %s117, %s119
      %p126 = scmp.eq.s32.totalorder %s34, 5
      %p127 = por %p125, %p126
      %p128 = scmp.ne.s32.totalorder %s119, %s120
      %p129 = scmp.eq.s32.totalorder %s34, 0
      %p130 = por %p128, %p129
      %p131 = scmp.ne.s32.totalorder %s119, %s120
      %p132 = scmp.eq.s32.totalorder %s35, 5
      %p133 = por %p131, %p132
      %p135 = scmp.ne.s32.totalorder %s120, %s134
      %p136 = scmp.eq.s32.totalorder %s35, 0
      %p137 = por %p135, %p136
      %s139 = sadd.s32 %s138, 1
      %p142 = scmp.eq.s32.totalorder %s29, 5
      %p143 = scmp.ne.s32.totalorder %s138, %s140
      %p144 = scmp.eq.s32.totalorder %s29, 0
      %p145 = por %p143, %p144
      %p146 = scmp.ne.s32.totalorder %s138, %s140
      %p147 = scmp.eq.s32.totalorder %s34, 5
      %p148 = por %p146, %p147
      %p149 = scmp.ne.s32.totalorder %s140, %s141
      %p150 = scmp.eq.s32.totalorder %s34, 0
      %p151 = por %p149, %p150
      %p152 = scmp.ne.s32.totalorder %s140, %s141
      %p153 = scmp.eq.s32.totalorder %s35, 5
      %p154 = por %p152, %p153
      %p156 = scmp.ne.s32.totalorder %s141, %s155
      %p157 = scmp.eq.s32.totalorder %s35, 0
      %p158 = por %p156, %p157
      %s160 = sadd.s32 %s159, 1
      %p163 = scmp.eq.s32.totalorder %s29, 5
      %p164 = scmp.ne.s32.totalorder %s159, %s161
      %p165 = scmp.eq.s32.totalorder %s29, 0
      %p166 = por %p164, %p165
      %p167 = scmp.ne.s32.totalorder %s159, %s161
      %p168 = scmp.eq.s32.totalorder %s34, 5
      %p169 = por %p167, %p168
      %p170 = scmp.ne.s32.totalorder %s161, %s162
      %p171 = scmp.eq.s32.totalorder %s34, 0
      %p172 = por %p170, %p171
      %p173 = scmp.ne.s32.totalorder %s161, %s162
      %p174 = scmp.eq.s32.totalorder %s35, 5
      %p175 = por %p173, %p174
      %p177 = scmp.ne.s32.totalorder %s162, %s176
      %p178 = scmp.eq.s32.totalorder %s35, 0
      %p179 = por %p177, %p178
      %s181 = sadd.s32 %s180, 1
      %p184 = scmp.eq.s32.totalorder %s29, 5
      %p185 = scmp.ne.s32.totalorder %s180, %s182
      %p186 = scmp.eq.s32.totalorder %s29, 0
      %p187 = por %p185, %p186
      %p188 = scmp.ne.s32.totalorder %s180, %s182
      %p189 = scmp.eq.s32.totalorder %s34, 5
      %p190 = por %p188, %p189
      %p191 = scmp.ne.s32.totalorder %s182, %s183
      %p192 = scmp.eq.s32.totalorder %s34, 0
      %p193 = por %p191, %p192
      %p194 = scmp.ne.s32.totalorder %s182, %s183
      %p195 = scmp.eq.s32.totalorder %s35, 5
      %p196 = por %p194, %p195
      %p198 = scmp.ne.s32.totalorder %s183, %s197
      %p199 = scmp.eq.s32.totalorder %s35, 0
      %p200 = por %p198, %p199
      %s202 = sadd.s32 %s201, 1
      %p205 = scmp.eq.s32.totalorder %s29, 5
      %p206 = scmp.ne.s32.totalorder %s201, %s203
      %p207 = scmp.eq.s32.totalorder %s29, 0
      %p208 = por %p206, %p207
      %p209 = scmp.ne.s32.totalorder %s201, %s203
      %p210 = scmp.eq.s32.totalorder %s34, 5
      %p211 = por %p209, %p210
      %p212 = scmp.ne.s32.totalorder %s203, %s204
      %p213 = scmp.eq.s32.totalorder %s34, 0
      %p214 = por %p212, %p213
      %p215 = scmp.ne.s32.totalorder %s203, %s204
      %p216 = scmp.eq.s32.totalorder %s35, 5
      %p217 = por %p215, %p216
      %p219 = scmp.ne.s32.totalorder %s204, %s218
      %p220 = scmp.eq.s32.totalorder %s35, 0
      %p221 = por %p219, %p220
      %s223 = sadd.s32 %s222, 1
      %p226 = scmp.eq.s32.totalorder %s29, 5
      %p227 = scmp.ne.s32.totalorder %s222, %s224
      %p228 = scmp.eq.s32.totalorder %s29, 0
      %p229 = por %p227, %p228
      %p230 = scmp.ne.s32.totalorder %s222, %s224
      %p231 = scmp.eq.s32.totalorder %s34, 5
      %p232 = por %p230, %p231
      %p233 = scmp.ne.s32.totalorder %s224, %s225
      %p234 = scmp.eq.s32.totalorder %s34, 0
      %p235 = por %p233, %p234
      %p236 = scmp.ne.s32.totalorder %s224, %s225
      %p237 = scmp.eq.s32.totalorder %s35, 5
      %p238 = por %p236, %p237
      %p240 = scmp.ne.s32.totalorder %s225, %s239
      %p241 = scmp.eq.s32.totalorder %s35, 0
      %p242 = por %p240, %p241
      %s244 = sadd.s32 %s243, 1
      %p247 = scmp.eq.s32.totalorder %s29, 5
      %p248 = scmp.ne.s32.totalorder %s243, %s245
      %p249 = scmp.eq.s32.totalorder %s29, 0
      %p250 = por %p248, %p249
      %p251 = scmp.ne.s32.totalorder %s243, %s245
      %p252 = scmp.eq.s32.totalorder %s34, 5
      %p253 = por %p251, %p252
      %p254 = scmp.ne.s32.totalorder %s245, %s246
      %p255 = scmp.eq.s32.totalorder %s34, 0
      %p256 = por %p254, %p255
      %p257 = scmp.ne.s32.totalorder %s245, %s246
      %p258 = scmp.eq.s32.totalorder %s35, 5
      %p259 = por %p257, %p258
      %p261 = scmp.ne.s32.totalorder %s246, %s260
      %p262 = scmp.eq.s32.totalorder %s35, 0
      %p263 = por %p261, %p262
      %s265 = sadd.s32 %s264, 1
      %p268 = scmp.eq.s32.totalorder %s29, 5
      %p269 = scmp.ne.s32.totalorder %s264, %s266
      %p270 = scmp.eq.s32.totalorder %s29, 0
      %p271 = por %p269, %p270
      %p272 = scmp.ne.s32.totalorder %s264, %s266
      %p273 = scmp.eq.s32.totalorder %s34, 5
      %p274 = por %p272, %p273
      %p275 = scmp.ne.s32.totalorder %s266, %s267
      %p276 = scmp.eq.s32.totalorder %s34, 0
      %p277 = por %p275, %p276
      %p278 = scmp.ne.s32.totalorder %s266, %s267
      %p279 = scmp.eq.s32.totalorder %s35, 5
      %p280 = por %p278, %p279
      %p282 = scmp.ne.s32.totalorder %s267, %s281
      %p283 = scmp.eq.s32.totalorder %s35, 0
      %p284 = por %p282, %p283
      %s286 = sadd.s32 %s285, 1
      %p289 = scmp.eq.s32.totalorder %s29, 5
      %p290 = scmp.ne.s32.totalorder %s285, %s287
      %p291 = scmp.eq.s32.totalorder %s29, 0
      %p292 = por %p290, %p291
      %p293 = scmp.ne.s32.totalorder %s285, %s287
      %p294 = scmp.eq.s32.totalorder %s34, 5
      %p295 = por %p293, %p294
      %p296 = scmp.ne.s32.totalorder %s287, %s288
      %p297 = scmp.eq.s32.totalorder %s34, 0
      %p298 = por %p296, %p297
      %p299 = scmp.ne.s32.totalorder %s287, %s288
      %p300 = scmp.eq.s32.totalorder %s35, 5
      %p301 = por %p299, %p300
      %p303 = scmp.ne.s32.totalorder %s288, %s302
      %p304 = scmp.eq.s32.totalorder %s35, 0
      %p305 = por %p303, %p304
      %s307 = sadd.s32 %s306, 1
      %p310 = scmp.eq.s32.totalorder %s29, 5
      %p311 = scmp.ne.s32.totalorder %s306, %s308
      %p312 = scmp.eq.s32.totalorder %s29, 0
      %p313 = por %p311, %p312
      %p314 = scmp.ne.s32.totalorder %s306, %s308
      %p315 = scmp.eq.s32.totalorder %s34, 5
      %p316 = por %p314, %p315
      %p317 = scmp.ne.s32.totalorder %s308, %s309
      %p318 = scmp.eq.s32.totalorder %s34, 0
      %p319 = por %p317, %p318
      %p320 = scmp.ne.s32.totalorder %s308, %s309
      %p321 = scmp.eq.s32.totalorder %s35, 5
      %p322 = por %p320, %p321
      %p324 = scmp.ne.s32.totalorder %s309, %s323
      %p325 = scmp.eq.s32.totalorder %s35, 0
      %p326 = por %p324, %p325
      %s328 = sadd.s32 %s327, 1
      %p331 = scmp.eq.s32.totalorder %s29, 5
      %p332 = scmp.ne.s32.totalorder %s327, %s329
      %p333 = scmp.eq.s32.totalorder %s29, 0
      %p334 = por %p332, %p333
      %p335 = scmp.ne.s32.totalorder %s327, %s329
      %p336 = scmp.eq.s32.totalorder %s34, 5
      %p337 = por %p335, %p336
      %p338 = scmp.ne.s32.totalorder %s329, %s330
      %p339 = scmp.eq.s32.totalorder %s34, 0
      %p340 = por %p338, %p339
      %p341 = scmp.ne.s32.totalorder %s329, %s330
      %p342 = scmp.eq.s32.totalorder %s35, 5
      %p343 = por %p341, %p342
      %p345 = scmp.ne.s32.totalorder %s330, %s344
      %p346 = scmp.eq.s32.totalorder %s35, 0
      %p347 = por %p345, %p346
      %s348 = ssub.s32 %s36, %s48
      %p349 = scmp.eq.s32.totalorder %s348, 0
      %s351 = sadd.s32 %s350, 1
      %s352 = scalar_select %p349, %s350, %s351
      %p355 = pneg %p349
      %p356 = scmp.eq.s32.totalorder %s29, 5
      %p357 = por %p355, %p356
      %p358 = scmp.ne.s32.totalorder %s350, %s353
      %p359 = scmp.eq.s32.totalorder %s29, 0
      %p360 = por %p358, %p359
      %p361 = scmp.ne.s32.totalorder %s350, %s353
      %p362 = scmp.eq.s32.totalorder %s34, 5
      %p363 = por %p361, %p362
      %p364 = scmp.ne.s32.totalorder %s353, %s354
      %p365 = scmp.eq.s32.totalorder %s34, 0
      %p366 = por %p364, %p365
      %p367 = scmp.ne.s32.totalorder %s353, %s354
      %p368 = scmp.eq.s32.totalorder %s35, 5
      %p369 = por %p367, %p368
      %p371 = scmp.ne.s32.totalorder %s354, %s370
      %p372 = scmp.eq.s32.totalorder %s35, 0
      %p373 = por %p371, %p372
      %p374 = scmp.le.s32.totalorder 1, %s29
      %p375 = scmp.lt.s32.totalorder %s29, 7
      %p376 = pnand %p374, %p375
      %p377 = pneg %p376
      // Predicated region
      $region9: #{transformer_encoder.1} parent=5 // pred_check
        _
      $region10: #{transformer_encoder.1} parent=5 // pred_check_branch
        %379 = sbr.rel (%p376) target = $region12
      $region11: #{transformer_encoder.1} parent=5 // pred_region
        %s380 = ssub.s32 %s29, 1
        // Predicated region
        $region13: #{transformer_encoder.1} parent=11 // pred_check
          %p381 = pneg %p67
        $region14: #{transformer_encoder.1} parent=11 // pred_check_branch
          %383 = sbr.rel (%p381) target = $region16
        $region15: #{transformer_encoder.1} parent=11 // pred_region
          %s384 = smul.u32 2, %s38
          %s386 = ssub.s32 512, 512
          %387 = vsyncadd [#allocation3], %s386
          %s388 = smul.addr %s384, 2
          %s389 = smul.addr %s388, 128
          %s390 = scalar_lea.hbm %s0, %s389
          %s391 = sshll.u32 [#allocation2], 4
          %s392 = int_to_ptr.vmem [resolvable:$true] %s391
          %397 = dma.hbm_to_vmem [thread:$0]  %s390, 512, %s392, [#allocation3], 256, 256, 16
        $region16: #{transformer_encoder.1} parent=11 // pred_fallthru
          _
        // Predicated region
        $region17: #{transformer_encoder.1} parent=11 // pred_check
          %p398 = pneg %p88
        $region18: #{transformer_encoder.1} parent=11 // pred_check_branch
          %400 = sbr.rel (%p398) target = $region20
        $region19: #{transformer_encoder.1} parent=11 // pred_region
          %s402 = ssub.s32 256, 256
          %403 = vsyncadd [#allocation6], %s402
          %s405 = sshll.u32 [#allocation5], 4
          %s406 = int_to_ptr.vmem [resolvable:$true] %s405
          %408 = dma.hbm_to_vmem [thread:$0]  %s1, 256, %s406, [#allocation6]
        $region20: #{transformer_encoder.1} parent=11 // pred_fallthru
          _
        // Predicated region
        $region21: #{transformer_encoder.1} parent=11 // pred_check
          %p409 = pneg %p109
        $region22: #{transformer_encoder.1} parent=11 // pred_check_branch
          %411 = sbr.rel (%p409) target = $region24
        $region23: #{transformer_encoder.1} parent=11 // pred_region
          %s413 = ssub.s32 73728, 73728
          %414 = vsyncadd [#allocation6], %s413
          %s415 = sshll.u32 [#allocation7], 4
          %s416 = int_to_ptr.vmem [resolvable:$true] %s415
          %421 = dma.hbm_to_vmem [thread:$0]  %s2, 73728, %s416, [#allocation6], 384, 384, 24
        $region24: #{transformer_encoder.1} parent=11 // pred_fallthru
          _
        // Predicated region
        $region25: #{transformer_encoder.1} parent=11 // pred_check
          %p422 = pneg %p130
        $region26: #{transformer_encoder.1} parent=11 // pred_check_branch
          %424 = sbr.rel (%p422) target = $region28
        $region27: #{transformer_encoder.1} parent=11 // pred_region
          %s426 = ssub.s32 576, 576
          %427 = vsyncadd [#allocation9], %s426
          %s428 = sshll.u32 [#allocation8], 4
          %s429 = int_to_ptr.vmem [resolvable:$true] %s428
          %434 = dma.hbm_to_vmem [thread:$0]  %s3, 576, %s429, [#allocation9], 96, 96, 6
        $region28: #{transformer_encoder.1} parent=11 // pred_fallthru
          _
        // Predicated region
        $region29: #{transformer_encoder.1} parent=11 // pred_check
          %p435 = pneg %p151
        $region30: #{transformer_encoder.1} parent=11 // pred_check_branch
          %437 = sbr.rel (%p435) target = $region32
        $region31: #{transformer_encoder.1} parent=11 // pred_region
          %s439 = ssub.s32 24576, 24576
          %440 = vsyncadd [#allocation9], %s439
          %s441 = sshll.u32 [#allocation10], 4
          %s442 = int_to_ptr.vmem [resolvable:$true] %s441
          %447 = dma.hbm_to_vmem [thread:$0]  %s4, 24576, %s442, [#allocation9], 128, 128, 8
        $region32: #{transformer_encoder.1} parent=11 // pred_fallthru
          _
        // Predicated region
        $region33: #{transformer_encoder.1} parent=11 // pred_check
          %p448 = pneg %p172
        $region34: #{transformer_encoder.1} parent=11 // pred_check_branch
          %450 = sbr.rel (%p448) target = $region36
        $region35: #{transformer_encoder.1} parent=11 // pred_region
          %s452 = ssub.s32 192, 192
          %453 = vsyncadd [#allocation12], %s452
          %s454 = sshll.u32 [#allocation11], 4
          %s455 = int_to_ptr.vmem [resolvable:$true] %s454
          %460 = dma.hbm_to_vmem [thread:$0]  %s5, 192, %s455, [#allocation12], 32, 32, 2
        $region36: #{transformer_encoder.1} parent=11 // pred_fallthru
          _
        // Predicated region
        $region37: #{transformer_encoder.1} parent=11 // pred_check
          %p461 = pneg %p193
        $region38: #{transformer_encoder.1} parent=11 // pred_check_branch
          %463 = sbr.rel (%p461) target = $region40
        $region39: #{transformer_encoder.1} parent=11 // pred_region
          %s465 = ssub.s32 98304, 98304
          %466 = vsyncadd [#allocation12], %s465
          %s467 = sshll.u32 [#allocation13], 4
          %s468 = int_to_ptr.vmem [resolvable:$true] %s467
          %473 = dma.hbm_to_vmem [thread:$0]  %s6, 98304, %s468, [#allocation12], 512, 512, 32
        $region40: #{transformer_encoder.1} parent=11 // pred_fallthru
          _
        // Predicated region
        $region41: #{transformer_encoder.1} parent=11 // pred_check
          %p474 = pneg %p214
        $region42: #{transformer_encoder.1} parent=11 // pred_check_branch
          %476 = sbr.rel (%p474) target = $region44
        $region43: #{transformer_encoder.1} parent=11 // pred_region
          %s478 = ssub.s32 768, 768
          %479 = vsyncadd [#allocation15], %s478
          %s480 = sshll.u32 [#allocation14], 4
          %s481 = int_to_ptr.vmem [resolvable:$true] %s480
          %486 = dma.hbm_to_vmem [thread:$0]  %s7, 768, %s481, [#allocation15], 128, 128, 8
        $region44: #{transformer_encoder.1} parent=11 // pred_fallthru
          _
        // Predicated region
        $region45: #{transformer_encoder.1} parent=11 // pred_check
          %p487 = pneg %p235
        $region46: #{transformer_encoder.1} parent=11 // pred_check_branch
          %489 = sbr.rel (%p487) target = $region48
        $region47: #{transformer_encoder.1} parent=11 // pred_region
          %s491 = ssub.s32 98304, 98304
          %492 = vsyncadd [#allocation15], %s491
          %s493 = sshll.u32 [#allocation16], 4
          %s494 = int_to_ptr.vmem [resolvable:$true] %s493
          %499 = dma.hbm_to_vmem [thread:$0]  %s8, 98304, %s494, [#allocation15], 128, 128, 8
        $region48: #{transformer_encoder.1} parent=11 // pred_fallthru
          _
        // Predicated region
        $region49: #{transformer_encoder.1} parent=11 // pred_check
          %p500 = pneg %p256
        $region50: #{transformer_encoder.1} parent=11 // pred_check_branch
          %502 = sbr.rel (%p500) target = $region52
        $region51: #{transformer_encoder.1} parent=11 // pred_region
          %s504 = ssub.s32 192, 192
          %505 = vsyncadd [#allocation18], %s504
          %s506 = sshll.u32 [#allocation17], 4
          %s507 = int_to_ptr.vmem [resolvable:$true] %s506
          %512 = dma.hbm_to_vmem [thread:$0]  %s9, 192, %s507, [#allocation18], 32, 32, 2
        $region52: #{transformer_encoder.1} parent=11 // pred_fallthru
          _
        // Predicated region
        $region53: #{transformer_encoder.1} parent=11 // pred_check
          %p513 = pneg %p277
        $region54: #{transformer_encoder.1} parent=11 // pred_check_branch
          %515 = sbr.rel (%p513) target = $region56
        $region55: #{transformer_encoder.1} parent=11 // pred_region
          %s517 = ssub.s32 192, 192
          %518 = vsyncadd [#allocation18], %s517
          %s519 = sshll.u32 [#allocation19], 4
          %s520 = int_to_ptr.vmem [resolvable:$true] %s519
          %525 = dma.hbm_to_vmem [thread:$0]  %s10, 192, %s520, [#allocation18], 32, 32, 2
        $region56: #{transformer_encoder.1} parent=11 // pred_fallthru
          _
        // Predicated region
        $region57: #{transformer_encoder.1} parent=11 // pred_check
          %p526 = pneg %p298
        $region58: #{transformer_encoder.1} parent=11 // pred_check_branch
          %528 = sbr.rel (%p526) target = $region60
        $region59: #{transformer_encoder.1} parent=11 // pred_region
          %s530 = ssub.s32 192, 192
          %531 = vsyncadd [#allocation21], %s530
          %s532 = sshll.u32 [#allocation20], 4
          %s533 = int_to_ptr.vmem [resolvable:$true] %s532
          %538 = dma.hbm_to_vmem [thread:$0]  %s11, 192, %s533, [#allocation21], 32, 32, 2
        $region60: #{transformer_encoder.1} parent=11 // pred_fallthru
          _
        // Predicated region
        $region61: #{transformer_encoder.1} parent=11 // pred_check
          %p539 = pneg %p319
        $region62: #{transformer_encoder.1} parent=11 // pred_check_branch
          %541 = sbr.rel (%p539) target = $region64
        $region63: #{transformer_encoder.1} parent=11 // pred_region
          %s543 = ssub.s32 192, 192
          %544 = vsyncadd [#allocation21], %s543
          %s545 = sshll.u32 [#allocation22], 4
          %s546 = int_to_ptr.vmem [resolvable:$true] %s545
          %551 = dma.hbm_to_vmem [thread:$0]  %s12, 192, %s546, [#allocation21], 32, 32, 2
        $region64: #{transformer_encoder.1} parent=11 // pred_fallthru
          _
        // Predicated region
        $region65: #{transformer_encoder.1} parent=11 // pred_check
          %p552 = pneg %p340
        $region66: #{transformer_encoder.1} parent=11 // pred_check_branch
          %554 = sbr.rel (%p552) target = $region68
        $region67: #{transformer_encoder.1} parent=11 // pred_region
          %s556 = ssub.s32 192, 192
          %557 = vsyncadd [#allocation24], %s556
          %s558 = sshll.u32 [#allocation23], 4
          %s559 = int_to_ptr.vmem [resolvable:$true] %s558
          %564 = dma.hbm_to_vmem [thread:$0]  %s13, 192, %s559, [#allocation24], 32, 32, 2
        $region68: #{transformer_encoder.1} parent=11 // pred_fallthru
          _
      $region12: #{transformer_encoder.1} parent=5 // pred_fallthru
        _
      %p565 = scmp.lt.s32.totalorder %s29, 6
      // Predicated region
      $region69: #{transformer_encoder.1} parent=5 // pred_check
        %p566 = pneg %p565
      $region70: #{transformer_encoder.1} parent=5 // pred_check_branch
        %568 = sbr.rel (%p566) target = $region72
      $region71: #{transformer_encoder.1} parent=5 // pred_region
        _
      $region72: #{transformer_encoder.1} parent=5 // pred_fallthru
        _
      %p569 = scmp.le.s32.totalorder 1, %s29
      %p570 = scmp.lt.s32.totalorder %s29, 7
      %p571 = pnand %p569, %p570
      %p572 = pneg %p571
      // Predicated region
      $region73: #{transformer_encoder.1} parent=5 // pred_check
        _
      $region74: #{transformer_encoder.1} parent=5 // pred_check_branch
        %574 = sbr.rel (%p571) target = $region76
      $region75: #{transformer_encoder.1} parent=5 // pred_region
        %s575 = ssub.s32 %s29, 1
        // Predicated region
        $region77: #{transformer_encoder.1} parent=75 // pred_check
          %p576 = pneg %p67
        $region78: #{transformer_encoder.1} parent=75 // pred_check_branch
          %578 = sbr.rel (%p576) target = $region80
        $region79: #{transformer_encoder.1} parent=75 // pred_region
          %579 = dma.done [#allocation3], 512
        $region80: #{transformer_encoder.1} parent=75 // pred_fallthru
          _
        // Predicated region
        $region81: #{transformer_encoder.1} parent=75 // pred_check
          %p580 = pneg %p88
        $region82: #{transformer_encoder.1} parent=75 // pred_check_branch
          %582 = sbr.rel (%p580) target = $region84
        $region83: #{transformer_encoder.1} parent=75 // pred_region
          %583 = dma.done [#allocation6], 256
        $region84: #{transformer_encoder.1} parent=75 // pred_fallthru
          _
        // Predicated region
        $region85: #{transformer_encoder.1} parent=75 // pred_check
          %p584 = pneg %p109
        $region86: #{transformer_encoder.1} parent=75 // pred_check_branch
          %586 = sbr.rel (%p584) target = $region88
        $region87: #{transformer_encoder.1} parent=75 // pred_region
          %587 = dma.done [#allocation6], 73728
        $region88: #{transformer_encoder.1} parent=75 // pred_fallthru
          _
        // Predicated region
        $region89: #{transformer_encoder.1} parent=75 // pred_check
          %p588 = pneg %p130
        $region90: #{transformer_encoder.1} parent=75 // pred_check_branch
          %590 = sbr.rel (%p588) target = $region92
        $region91: #{transformer_encoder.1} parent=75 // pred_region
          %591 = dma.done [#allocation9], 576
        $region92: #{transformer_encoder.1} parent=75 // pred_fallthru
          _
        // Predicated region
        $region93: #{transformer_encoder.1} parent=75 // pred_check
          %p592 = pneg %p151
        $region94: #{transformer_encoder.1} parent=75 // pred_check_branch
          %594 = sbr.rel (%p592) target = $region96
        $region95: #{transformer_encoder.1} parent=75 // pred_region
          %595 = dma.done [#allocation9], 24576
        $region96: #{transformer_encoder.1} parent=75 // pred_fallthru
          _
        // Predicated region
        $region97: #{transformer_encoder.1} parent=75 // pred_check
          %p596 = pneg %p172
        $region98: #{transformer_encoder.1} parent=75 // pred_check_branch
          %598 = sbr.rel (%p596) target = $region100
        $region99: #{transformer_encoder.1} parent=75 // pred_region
          %599 = dma.done [#allocation12], 192
        $region100: #{transformer_encoder.1} parent=75 // pred_fallthru
          _
        // Predicated region
        $region101: #{transformer_encoder.1} parent=75 // pred_check
          %p600 = pneg %p193
        $region102: #{transformer_encoder.1} parent=75 // pred_check_branch
          %602 = sbr.rel (%p600) target = $region104
        $region103: #{transformer_encoder.1} parent=75 // pred_region
          %603 = dma.done [#allocation12], 98304
        $region104: #{transformer_encoder.1} parent=75 // pred_fallthru
          _
        // Predicated region
        $region105: #{transformer_encoder.1} parent=75 // pred_check
          %p604 = pneg %p214
        $region106: #{transformer_encoder.1} parent=75 // pred_check_branch
          %606 = sbr.rel (%p604) target = $region108
        $region107: #{transformer_encoder.1} parent=75 // pred_region
          %607 = dma.done [#allocation15], 768
        $region108: #{transformer_encoder.1} parent=75 // pred_fallthru
          _
        // Predicated region
        $region109: #{transformer_encoder.1} parent=75 // pred_check
          %p608 = pneg %p235
        $region110: #{transformer_encoder.1} parent=75 // pred_check_branch
          %610 = sbr.rel (%p608) target = $region112
        $region111: #{transformer_encoder.1} parent=75 // pred_region
          %611 = dma.done [#allocation15], 98304
        $region112: #{transformer_encoder.1} parent=75 // pred_fallthru
          _
        // Predicated region
        $region113: #{transformer_encoder.1} parent=75 // pred_check
          %p612 = pneg %p256
        $region114: #{transformer_encoder.1} parent=75 // pred_check_branch
          %614 = sbr.rel (%p612) target = $region116
        $region115: #{transformer_encoder.1} parent=75 // pred_region
          %615 = dma.done [#allocation18], 192
        $region116: #{transformer_encoder.1} parent=75 // pred_fallthru
          _
        // Predicated region
        $region117: #{transformer_encoder.1} parent=75 // pred_check
          %p616 = pneg %p277
        $region118: #{transformer_encoder.1} parent=75 // pred_check_branch
          %618 = sbr.rel (%p616) target = $region120
        $region119: #{transformer_encoder.1} parent=75 // pred_region
          %619 = dma.done [#allocation18], 192
        $region120: #{transformer_encoder.1} parent=75 // pred_fallthru
          _
        // Predicated region
        $region121: #{transformer_encoder.1} parent=75 // pred_check
          %p620 = pneg %p298
        $region122: #{transformer_encoder.1} parent=75 // pred_check_branch
          %622 = sbr.rel (%p620) target = $region124
        $region123: #{transformer_encoder.1} parent=75 // pred_region
          %623 = dma.done [#allocation21], 192
        $region124: #{transformer_encoder.1} parent=75 // pred_fallthru
          _
        // Predicated region
        $region125: #{transformer_encoder.1} parent=75 // pred_check
          %p624 = pneg %p319
        $region126: #{transformer_encoder.1} parent=75 // pred_check_branch
          %626 = sbr.rel (%p624) target = $region128
        $region127: #{transformer_encoder.1} parent=75 // pred_region
          %627 = dma.done [#allocation21], 192
        $region128: #{transformer_encoder.1} parent=75 // pred_fallthru
          _
        // Predicated region
        $region129: #{transformer_encoder.1} parent=75 // pred_check
          %p628 = pneg %p340
        $region130: #{transformer_encoder.1} parent=75 // pred_check_branch
          %630 = sbr.rel (%p628) target = $region132
        $region131: #{transformer_encoder.1} parent=75 // pred_region
          %631 = dma.done [#allocation24], 192
        $region132: #{transformer_encoder.1} parent=75 // pred_fallthru
          _
        %p632 = pneg %p67
        %p633 = pneg %p64
        %p634 = pneg %p88
        %p635 = pneg %p85
        %p636 = pneg %p109
        %p637 = pneg %p106
        %p638 = pneg %p130
        %p639 = pneg %p127
        %p640 = pneg %p151
        %p641 = pneg %p148
        %p642 = pneg %p172
        %p643 = pneg %p169
        %p644 = pneg %p193
        %p645 = pneg %p190
        %p646 = pneg %p214
        %p647 = pneg %p211
        %p648 = pneg %p235
        %p649 = pneg %p232
        %p650 = pneg %p256
        %p651 = pneg %p253
        %p652 = pneg %p277
        %p653 = pneg %p274
        %p654 = pneg %p298
        %p655 = pneg %p295
        %p656 = pneg %p319
        %p657 = pneg %p316
        %p658 = pneg %p340
        %p659 = pneg %p337
        %p660 = pneg %p366
        %p661 = pneg %p363
        %s662 = smul.u32 2, %s38
        %s663 = smul.u32 2, %s38
        %p665 = scmp.eq.s32.totalorder %s39, 0
        // Predicated region
        $region133: #{transformer_encoder.1} parent=75 // pred_check
          %p666 = pneg %p665
        $region134: #{transformer_encoder.1} parent=75 // pred_check_branch
          %668 = sbr.rel (%p666) target = $region136
        $region135: #{transformer_encoder.1} parent=75 // pred_region
          %v669 = vld [vmem:[#allocation2] sm:$0xff]
          %v670 = vld [vmem:[#allocation2 + $0x8] sm:$0xff]
          %v671 = vld [vmem:[#allocation2 + $0x10] sm:$0xff]
          %v672 = vld [vmem:[#allocation2 + $0x18] sm:$0xff]
          %v673 = vld [vmem:[#allocation5] sm:$0xff]
          %v674 = vld [vmem:[#allocation5 + $0x8] sm:$0xff]
          %v675 = vadd.f32 %v669, %v673
          %v676 = vadd.f32 %v670, %v674
          %v677 = vadd.f32 %v671, %v673
          %v678 = vadd.f32 %v672, %v674
          %679 = vst [vmem:[#allocation25] sm:$0xff] %v675
          %680 = vst [vmem:[#allocation25 + $0x8] sm:$0xff] %v676
          %681 = vst [vmem:[#allocation25 + $0x10] sm:$0xff] %v677
          %682 = vst [vmem:[#allocation25 + $0x18] sm:$0xff] %v678
        $region136: #{transformer_encoder.1} parent=75 // pred_fallthru
          _
        %v683 = vld [vmem:[#allocation25] sm:$0xff]
        %v684 = vld [vmem:[#allocation25 + $0x8] sm:$0xff]
        %v685 = vld [vmem:[#allocation25 + $0x10] sm:$0xff]
        %v686 = vld [vmem:[#allocation25 + $0x18] sm:$0xff]
        %v687 = vpack.c.bf16 %v685, %v683
        %v688 = vpack.c.bf16 %v686, %v684
        %s689 = smul.u32 %s39, 192
        %s690 = smul.addr %s689, 4
        %s691 = scalar_lea.vmem [#allocation7], %s690
        %v692 = vld [vmem:[%s691] sm:$0xff]
        %v693 = vld [vmem:[%s691 + $0x8] sm:$0xff]
        %v694 = vld [vmem:[%s691 + $0x10] sm:$0xff]
        %v695 = vld [vmem:[%s691 + $0x18] sm:$0xff]
        %v696 = vld [vmem:[%s691 + $0x20] sm:$0xff]
        %v697 = vld [vmem:[%s691 + $0x28] sm:$0xff]
        %v698 = vld [vmem:[%s691 + $0x30] sm:$0xff]
        %v699 = vld [vmem:[%s691 + $0x38] sm:$0xff]
        %v700 = vld [vmem:[%s691 + $0x40] sm:$0xff]
        %v701 = vld [vmem:[%s691 + $0x48] sm:$0xff]
        %v702 = vld [vmem:[%s691 + $0x50] sm:$0xff]
        %v703 = vld [vmem:[%s691 + $0x58] sm:$0xff]
        %v704 = vld [vmem:[%s691 + $0x60] sm:$0xff]
        %v705 = vld [vmem:[%s691 + $0x68] sm:$0xff]
        %v706 = vld [vmem:[%s691 + $0x70] sm:$0xff]
        %v707 = vld [vmem:[%s691 + $0x78] sm:$0xff]
        %v708 = vld [vmem:[%s691 + $0x80] sm:$0xff]
        %v709 = vld [vmem:[%s691 + $0x88] sm:$0xff]
        %v710 = vld [vmem:[%s691 + $0x90] sm:$0xff]
        %v711 = vld [vmem:[%s691 + $0x98] sm:$0xff]
        %v712 = vld [vmem:[%s691 + $0xa0] sm:$0xff]
        %v713 = vld [vmem:[%s691 + $0xa8] sm:$0xff]
        %v714 = vld [vmem:[%s691 + $0xb0] sm:$0xff]
        %v715 = vld [vmem:[%s691 + $0xb8] sm:$0xff]
        %v716 = vld [vmem:[%s691 + $0xc0] sm:$0xff]
        %v717 = vld [vmem:[%s691 + $0xc8] sm:$0xff]
        %v718 = vld [vmem:[%s691 + $0xd0] sm:$0xff]
        %v719 = vld [vmem:[%s691 + $0xd8] sm:$0xff]
        %v720 = vld [vmem:[%s691 + $0xe0] sm:$0xff]
        %v721 = vld [vmem:[%s691 + $0xe8] sm:$0xff]
        %v722 = vld [vmem:[%s691 + $0xf0] sm:$0xff]
        %v723 = vld [vmem:[%s691 + $0xf8] sm:$0xff]
        %v724 = vld [vmem:[%s691 + $0x100] sm:$0xff]
        %v725 = vld [vmem:[%s691 + $0x108] sm:$0xff]
        %v726 = vld [vmem:[%s691 + $0x110] sm:$0xff]
        %v727 = vld [vmem:[%s691 + $0x118] sm:$0xff]
        %v728 = vld [vmem:[%s691 + $0x120] sm:$0xff]
        %v729 = vld [vmem:[%s691 + $0x128] sm:$0xff]
        %v730 = vld [vmem:[%s691 + $0x130] sm:$0xff]
        %v731 = vld [vmem:[%s691 + $0x138] sm:$0xff]
        %v732 = vld [vmem:[%s691 + $0x140] sm:$0xff]
        %v733 = vld [vmem:[%s691 + $0x148] sm:$0xff]
        %v734 = vld [vmem:[%s691 + $0x150] sm:$0xff]
        %v735 = vld [vmem:[%s691 + $0x158] sm:$0xff]
        %v736 = vld [vmem:[%s691 + $0x160] sm:$0xff]
        %v737 = vld [vmem:[%s691 + $0x168] sm:$0xff]
        %v738 = vld [vmem:[%s691 + $0x170] sm:$0xff]
        %v739 = vld [vmem:[%s691 + $0x178] sm:$0xff]
        %v740 = vld [vmem:[%s691 + $0x180] sm:$0xff]
        %v741 = vld [vmem:[%s691 + $0x188] sm:$0xff]
        %v742 = vld [vmem:[%s691 + $0x190] sm:$0xff]
        %v743 = vld [vmem:[%s691 + $0x198] sm:$0xff]
        %v744 = vld [vmem:[%s691 + $0x1a0] sm:$0xff]
        %v745 = vld [vmem:[%s691 + $0x1a8] sm:$0xff]
        %v746 = vld [vmem:[%s691 + $0x1b0] sm:$0xff]
        %v747 = vld [vmem:[%s691 + $0x1b8] sm:$0xff]
        %v748 = vld [vmem:[%s691 + $0x1c0] sm:$0xff]
        %v749 = vld [vmem:[%s691 + $0x1c8] sm:$0xff]
        %v750 = vld [vmem:[%s691 + $0x1d0] sm:$0xff]
        %v751 = vld [vmem:[%s691 + $0x1d8] sm:$0xff]
        %v752 = vld [vmem:[%s691 + $0x1e0] sm:$0xff]
        %v753 = vld [vmem:[%s691 + $0x1e8] sm:$0xff]
        %v754 = vld [vmem:[%s691 + $0x1f0] sm:$0xff]
        %v755 = vld [vmem:[%s691 + $0x1f8] sm:$0xff]
        %v756 = vld [vmem:[%s691 + $0x200] sm:$0xff]
        %v757 = vld [vmem:[%s691 + $0x208] sm:$0xff]
        %v758 = vld [vmem:[%s691 + $0x210] sm:$0xff]
        %v759 = vld [vmem:[%s691 + $0x218] sm:$0xff]
        %v760 = vld [vmem:[%s691 + $0x220] sm:$0xff]
        %v761 = vld [vmem:[%s691 + $0x228] sm:$0xff]
        %v762 = vld [vmem:[%s691 + $0x230] sm:$0xff]
        %v763 = vld [vmem:[%s691 + $0x238] sm:$0xff]
        %v764 = vld [vmem:[%s691 + $0x240] sm:$0xff]
        %v765 = vld [vmem:[%s691 + $0x248] sm:$0xff]
        %v766 = vld [vmem:[%s691 + $0x250] sm:$0xff]
        %v767 = vld [vmem:[%s691 + $0x258] sm:$0xff]
        %v768 = vld [vmem:[%s691 + $0x260] sm:$0xff]
        %v769 = vld [vmem:[%s691 + $0x268] sm:$0xff]
        %v770 = vld [vmem:[%s691 + $0x270] sm:$0xff]
        %v771 = vld [vmem:[%s691 + $0x278] sm:$0xff]
        %v772 = vld [vmem:[%s691 + $0x280] sm:$0xff]
        %v773 = vld [vmem:[%s691 + $0x288] sm:$0xff]
        %v774 = vld [vmem:[%s691 + $0x290] sm:$0xff]
        %v775 = vld [vmem:[%s691 + $0x298] sm:$0xff]
        %v776 = vld [vmem:[%s691 + $0x2a0] sm:$0xff]
        %v777 = vld [vmem:[%s691 + $0x2a8] sm:$0xff]
        %v778 = vld [vmem:[%s691 + $0x2b0] sm:$0xff]
        %v779 = vld [vmem:[%s691 + $0x2b8] sm:$0xff]
        %v780 = vld [vmem:[%s691 + $0x2c0] sm:$0xff]
        %v781 = vld [vmem:[%s691 + $0x2c8] sm:$0xff]
        %v782 = vld [vmem:[%s691 + $0x2d0] sm:$0xff]
        %v783 = vld [vmem:[%s691 + $0x2d8] sm:$0xff]
        %v784 = vld [vmem:[%s691 + $0x2e0] sm:$0xff]
        %v785 = vld [vmem:[%s691 + $0x2e8] sm:$0xff]
        %v786 = vld [vmem:[%s691 + $0x2f0] sm:$0xff]
        %v787 = vld [vmem:[%s691 + $0x2f8] sm:$0xff]
        %s788 = smul.u32 %s39, 6
        %s789 = scalar_lea.vmem [#allocation8], %s788
        %v790 = vld [vmem:[%s789] sm:$0x3f]
        %v792 = vlaneseq
        %v793 = vshrl.u32 %v792, 7
        %v794 = vsub.s32 0, %v793
        %v795 = vrot.slane %v790, %v794
        %v796 = vlaneseq
        %v797 = vshrl.u32 %v796, 7
        %v798 = vsub.s32 1, %v797
        %v799 = vrot.slane %v790, %v798
        %v800 = vlaneseq
        %v801 = vshrl.u32 %v800, 7
        %v802 = vsub.s32 2, %v801
        %v803 = vrot.slane %v790, %v802
        %v804 = vlaneseq
        %v805 = vshrl.u32 %v804, 7
        %v806 = vsub.s32 3, %v805
        %v807 = vrot.slane %v790, %v806
        %v808 = vlaneseq
        %v809 = vshrl.u32 %v808, 7
        %v810 = vsub.s32 4, %v809
        %v811 = vrot.slane %v790, %v810
        %v812 = vlaneseq
        %v813 = vshrl.u32 %v812, 7
        %v814 = vsub.s32 5, %v813
        %v815 = vrot.slane %v790, %v814
        %v918 = vunpack.c.l.b16 %v692
        %v919 = vunpack.c.h.b16 %v692
        %v920 = vunpack.c.l.b16 %v693
        %v921 = vunpack.c.h.b16 %v693
        %v922 = vunpack.c.l.b16 %v694
        %v923 = vunpack.c.h.b16 %v694
        %v924 = vunpack.c.l.b16 %v695
        %v925 = vunpack.c.h.b16 %v695
        %v926 = vunpack.c.l.b16 %v696
        %v927 = vunpack.c.h.b16 %v696
        %v928 = vunpack.c.l.b16 %v697
        %v929 = vunpack.c.h.b16 %v697
        %v930 = vunpack.c.l.b16 %v698
        %v931 = vunpack.c.h.b16 %v698
        %v932 = vunpack.c.l.b16 %v699
        %v933 = vunpack.c.h.b16 %v699
        %v934 = vunpack.c.l.b16 %v700
        %v935 = vunpack.c.h.b16 %v700
        %v936 = vunpack.c.l.b16 %v701
        %v937 = vunpack.c.h.b16 %v701
        %v938 = vunpack.c.l.b16 %v702
        %v939 = vunpack.c.h.b16 %v702
        %v940 = vunpack.c.l.b16 %v703
        %v941 = vunpack.c.h.b16 %v703
        %v942 = vunpack.c.l.b16 %v704
        %v943 = vunpack.c.h.b16 %v704
        %v944 = vunpack.c.l.b16 %v705
        %v945 = vunpack.c.h.b16 %v705
        %v946 = vunpack.c.l.b16 %v706
        %v947 = vunpack.c.h.b16 %v706
        %v948 = vunpack.c.l.b16 %v707
        %v949 = vunpack.c.h.b16 %v707
        %v950 = vunpack.c.l.b16 %v708
        %v951 = vunpack.c.h.b16 %v708
        %v952 = vunpack.c.l.b16 %v709
        %v953 = vunpack.c.h.b16 %v709
        %v954 = vunpack.c.l.b16 %v710
        %v955 = vunpack.c.h.b16 %v710
        %v956 = vunpack.c.l.b16 %v711
        %v957 = vunpack.c.h.b16 %v711
        %v958 = vunpack.c.l.b16 %v712
        %v959 = vunpack.c.h.b16 %v712
        %v960 = vunpack.c.l.b16 %v713
        %v961 = vunpack.c.h.b16 %v713
        %v962 = vunpack.c.l.b16 %v714
        %v963 = vunpack.c.h.b16 %v714
        %v964 = vunpack.c.l.b16 %v715
        %v965 = vunpack.c.h.b16 %v715
        %v966 = vunpack.c.l.b16 %v716
        %v967 = vunpack.c.h.b16 %v716
        %v968 = vunpack.c.l.b16 %v717
        %v969 = vunpack.c.h.b16 %v717
        %v970 = vunpack.c.l.b16 %v718
        %v971 = vunpack.c.h.b16 %v718
        %v972 = vunpack.c.l.b16 %v719
        %v973 = vunpack.c.h.b16 %v719
        %v974 = vunpack.c.l.b16 %v720
        %v975 = vunpack.c.h.b16 %v720
        %v976 = vunpack.c.l.b16 %v721
        %v977 = vunpack.c.h.b16 %v721
        %v978 = vunpack.c.l.b16 %v722
        %v979 = vunpack.c.h.b16 %v722
        %v980 = vunpack.c.l.b16 %v723
        %v981 = vunpack.c.h.b16 %v723
        %v982 = vunpack.c.l.b16 %v724
        %v983 = vunpack.c.h.b16 %v724
        %v984 = vunpack.c.l.b16 %v725
        %v985 = vunpack.c.h.b16 %v725
        %v986 = vunpack.c.l.b16 %v726
        %v987 = vunpack.c.h.b16 %v726
        %v988 = vunpack.c.l.b16 %v727
        %v989 = vunpack.c.h.b16 %v727
        %v990 = vunpack.c.l.b16 %v728
        %v991 = vunpack.c.h.b16 %v728
        %v992 = vunpack.c.l.b16 %v729
        %v993 = vunpack.c.h.b16 %v729
        %v994 = vunpack.c.l.b16 %v730
        %v995 = vunpack.c.h.b16 %v730
        %v996 = vunpack.c.l.b16 %v731
        %v997 = vunpack.c.h.b16 %v731
        %v998 = vunpack.c.l.b16 %v732
        %v999 = vunpack.c.h.b16 %v732
        %v1000 = vunpack.c.l.b16 %v733
        %v1001 = vunpack.c.h.b16 %v733
        %v1002 = vunpack.c.l.b16 %v734
        %v1003 = vunpack.c.h.b16 %v734
        %v1004 = vunpack.c.l.b16 %v735
        %v1005 = vunpack.c.h.b16 %v735
        %v1006 = vunpack.c.l.b16 %v736
        %v1007 = vunpack.c.h.b16 %v736
        %v1008 = vunpack.c.l.b16 %v737
        %v1009 = vunpack.c.h.b16 %v737
        %v1010 = vunpack.c.l.b16 %v738
        %v1011 = vunpack.c.h.b16 %v738
        %v1012 = vunpack.c.l.b16 %v739
        %v1013 = vunpack.c.h.b16 %v739
        %v1014 = vunpack.c.l.b16 %v740
        %v1015 = vunpack.c.h.b16 %v740
        %v1016 = vunpack.c.l.b16 %v741
        %v1017 = vunpack.c.h.b16 %v741
        %v1018 = vunpack.c.l.b16 %v742
        %v1019 = vunpack.c.h.b16 %v742
        %v1020 = vunpack.c.l.b16 %v743
        %v1021 = vunpack.c.h.b16 %v743
        %v1022 = vunpack.c.l.b16 %v744
        %v1023 = vunpack.c.h.b16 %v744
        %v1024 = vunpack.c.l.b16 %v745
        %v1025 = vunpack.c.h.b16 %v745
        %v1026 = vunpack.c.l.b16 %v746
        %v1027 = vunpack.c.h.b16 %v746
        %v1028 = vunpack.c.l.b16 %v747
        %v1029 = vunpack.c.h.b16 %v747
        %v1030 = vunpack.c.l.b16 %v748
        %v1031 = vunpack.c.h.b16 %v748
        %v1032 = vunpack.c.l.b16 %v749
        %v1033 = vunpack.c.h.b16 %v749
        %v1034 = vunpack.c.l.b16 %v750
        %v1035 = vunpack.c.h.b16 %v750
        %v1036 = vunpack.c.l.b16 %v751
        %v1037 = vunpack.c.h.b16 %v751
        %v1038 = vunpack.c.l.b16 %v752
        %v1039 = vunpack.c.h.b16 %v752
        %v1040 = vunpack.c.l.b16 %v753
        %v1041 = vunpack.c.h.b16 %v753
        %v1042 = vunpack.c.l.b16 %v754
        %v1043 = vunpack.c.h.b16 %v754
        %v1044 = vunpack.c.l.b16 %v755
        %v1045 = vunpack.c.h.b16 %v755
        %v1046 = vunpack.c.l.b16 %v756
        %v1047 = vunpack.c.h.b16 %v756
        %v1048 = vunpack.c.l.b16 %v757
        %v1049 = vunpack.c.h.b16 %v757
        %v1050 = vunpack.c.l.b16 %v758
        %v1051 = vunpack.c.h.b16 %v758
        %v1052 = vunpack.c.l.b16 %v759
        %v1053 = vunpack.c.h.b16 %v759
        %v1054 = vunpack.c.l.b16 %v760
        %v1055 = vunpack.c.h.b16 %v760
        %v1056 = vunpack.c.l.b16 %v761
        %v1057 = vunpack.c.h.b16 %v761
        %v1058 = vunpack.c.l.b16 %v762
        %v1059 = vunpack.c.h.b16 %v762
        %v1060 = vunpack.c.l.b16 %v763
        %v1061 = vunpack.c.h.b16 %v763
        %v1062 = vunpack.c.l.b16 %v764
        %v1063 = vunpack.c.h.b16 %v764
        %v1064 = vunpack.c.l.b16 %v765
        %v1065 = vunpack.c.h.b16 %v765
        %v1066 = vunpack.c.l.b16 %v766
        %v1067 = vunpack.c.h.b16 %v766
        %v1068 = vunpack.c.l.b16 %v767
        %v1069 = vunpack.c.h.b16 %v767
        %v1070 = vunpack.c.l.b16 %v768
        %v1071 = vunpack.c.h.b16 %v768
        %v1072 = vunpack.c.l.b16 %v769
        %v1073 = vunpack.c.h.b16 %v769
        %v1074 = vunpack.c.l.b16 %v770
        %v1075 = vunpack.c.h.b16 %v770
        %v1076 = vunpack.c.l.b16 %v771
        %v1077 = vunpack.c.h.b16 %v771
        %v1078 = vunpack.c.l.b16 %v772
        %v1079 = vunpack.c.h.b16 %v772
        %v1080 = vunpack.c.l.b16 %v773
        %v1081 = vunpack.c.h.b16 %v773
        %v1082 = vunpack.c.l.b16 %v774
        %v1083 = vunpack.c.h.b16 %v774
        %v1084 = vunpack.c.l.b16 %v775
        %v1085 = vunpack.c.h.b16 %v775
        %v1086 = vunpack.c.l.b16 %v776
        %v1087 = vunpack.c.h.b16 %v776
        %v1088 = vunpack.c.l.b16 %v777
        %v1089 = vunpack.c.h.b16 %v777
        %v1090 = vunpack.c.l.b16 %v778
        %v1091 = vunpack.c.h.b16 %v778
        %v1092 = vunpack.c.l.b16 %v779
        %v1093 = vunpack.c.h.b16 %v779
        %v1094 = vunpack.c.l.b16 %v780
        %v1095 = vunpack.c.h.b16 %v780
        %v1096 = vunpack.c.l.b16 %v781
        %v1097 = vunpack.c.h.b16 %v781
        %v1098 = vunpack.c.l.b16 %v782
        %v1099 = vunpack.c.h.b16 %v782
        %v1100 = vunpack.c.l.b16 %v783
        %v1101 = vunpack.c.h.b16 %v783
        %v1102 = vunpack.c.l.b16 %v784
        %v1103 = vunpack.c.h.b16 %v784
        %v1104 = vunpack.c.l.b16 %v785
        %v1105 = vunpack.c.h.b16 %v785
        %v1106 = vunpack.c.l.b16 %v786
        %v1107 = vunpack.c.h.b16 %v786
        %v1108 = vunpack.c.l.b16 %v787
        %v1109 = vunpack.c.h.b16 %v787
        %v1110 = vpack.c.b16 %v924, %v918
        %v1111 = vpack.c.b16 %v925, %v919
        %v1112 = vpack.c.b16 %v926, %v920
        %v1113 = vpack.c.b16 %v927, %v921
        %v1114 = vpack.c.b16 %v928, %v922
        %v1115 = vpack.c.b16 %v929, %v923
        %v1116 = vpack.c.b16 %v936, %v930
        %v1117 = vpack.c.b16 %v937, %v931
        %v1118 = vpack.c.b16 %v938, %v932
        %v1119 = vpack.c.b16 %v939, %v933
        %v1120 = vpack.c.b16 %v940, %v934
        %v1121 = vpack.c.b16 %v941, %v935
        %v1122 = vpack.c.b16 %v948, %v942
        %v1123 = vpack.c.b16 %v949, %v943
        %v1124 = vpack.c.b16 %v950, %v944
        %v1125 = vpack.c.b16 %v951, %v945
        %v1126 = vpack.c.b16 %v952, %v946
        %v1127 = vpack.c.b16 %v953, %v947
        %v1128 = vpack.c.b16 %v960, %v954
        %v1129 = vpack.c.b16 %v961, %v955
        %v1130 = vpack.c.b16 %v962, %v956
        %v1131 = vpack.c.b16 %v963, %v957
        %v1132 = vpack.c.b16 %v964, %v958
        %v1133 = vpack.c.b16 %v965, %v959
        %v1134 = vpack.c.b16 %v972, %v966
        %v1135 = vpack.c.b16 %v973, %v967
        %v1136 = vpack.c.b16 %v974, %v968
        %v1137 = vpack.c.b16 %v975, %v969
        %v1138 = vpack.c.b16 %v976, %v970
        %v1139 = vpack.c.b16 %v977, %v971
        %v1140 = vpack.c.b16 %v984, %v978
        %v1141 = vpack.c.b16 %v985, %v979
        %v1142 = vpack.c.b16 %v986, %v980
        %v1143 = vpack.c.b16 %v987, %v981
        %v1144 = vpack.c.b16 %v988, %v982
        %v1145 = vpack.c.b16 %v989, %v983
        %v1146 = vpack.c.b16 %v996, %v990
        %v1147 = vpack.c.b16 %v997, %v991
        %v1148 = vpack.c.b16 %v998, %v992
        %v1149 = vpack.c.b16 %v999, %v993
        %v1150 = vpack.c.b16 %v1000, %v994
        %v1151 = vpack.c.b16 %v1001, %v995
        %v1152 = vpack.c.b16 %v1008, %v1002
        %v1153 = vpack.c.b16 %v1009, %v1003
        %v1154 = vpack.c.b16 %v1010, %v1004
        %v1155 = vpack.c.b16 %v1011, %v1005
        %v1156 = vpack.c.b16 %v1012, %v1006
        %v1157 = vpack.c.b16 %v1013, %v1007
        %v1158 = vpack.c.b16 %v1020, %v1014
        %v1159 = vpack.c.b16 %v1021, %v1015
        %v1160 = vpack.c.b16 %v1022, %v1016
        %v1161 = vpack.c.b16 %v1023, %v1017
        %v1162 = vpack.c.b16 %v1024, %v1018
        %v1163 = vpack.c.b16 %v1025, %v1019
        %v1164 = vpack.c.b16 %v1032, %v1026
        %v1165 = vpack.c.b16 %v1033, %v1027
        %v1166 = vpack.c.b16 %v1034, %v1028
        %v1167 = vpack.c.b16 %v1035, %v1029
        %v1168 = vpack.c.b16 %v1036, %v1030
        %v1169 = vpack.c.b16 %v1037, %v1031
        %v1170 = vpack.c.b16 %v1044, %v1038
        %v1171 = vpack.c.b16 %v1045, %v1039
        %v1172 = vpack.c.b16 %v1046, %v1040
        %v1173 = vpack.c.b16 %v1047, %v1041
        %v1174 = vpack.c.b16 %v1048, %v1042
        %v1175 = vpack.c.b16 %v1049, %v1043
        %v1176 = vpack.c.b16 %v1056, %v1050
        %v1177 = vpack.c.b16 %v1057, %v1051
        %v1178 = vpack.c.b16 %v1058, %v1052
        %v1179 = vpack.c.b16 %v1059, %v1053
        %v1180 = vpack.c.b16 %v1060, %v1054
        %v1181 = vpack.c.b16 %v1061, %v1055
        %v1182 = vpack.c.b16 %v1068, %v1062
        %v1183 = vpack.c.b16 %v1069, %v1063
        %v1184 = vpack.c.b16 %v1070, %v1064
        %v1185 = vpack.c.b16 %v1071, %v1065
        %v1186 = vpack.c.b16 %v1072, %v1066
        %v1187 = vpack.c.b16 %v1073, %v1067
        %v1188 = vpack.c.b16 %v1080, %v1074
        %v1189 = vpack.c.b16 %v1081, %v1075
        %v1190 = vpack.c.b16 %v1082, %v1076
        %v1191 = vpack.c.b16 %v1083, %v1077
        %v1192 = vpack.c.b16 %v1084, %v1078
        %v1193 = vpack.c.b16 %v1085, %v1079
        %v1194 = vpack.c.b16 %v1092, %v1086
        %v1195 = vpack.c.b16 %v1093, %v1087
        %v1196 = vpack.c.b16 %v1094, %v1088
        %v1197 = vpack.c.b16 %v1095, %v1089
        %v1198 = vpack.c.b16 %v1096, %v1090
        %v1199 = vpack.c.b16 %v1097, %v1091
        %v1200 = vpack.c.b16 %v1104, %v1098
        %v1201 = vpack.c.b16 %v1105, %v1099
        %v1202 = vpack.c.b16 %v1106, %v1100
        %v1203 = vpack.c.b16 %v1107, %v1101
        %v1204 = vpack.c.b16 %v1108, %v1102
        %v1205 = vpack.c.b16 %v1109, %v1103
        %1302 = vmatprep.subr.bf16.mxu0 %v1111
        %1303 = vmatpush1.bf16.msra.mxu0 %v1110
        %1304 = vmatprep.subr.bf16.mxu0 %v1117
        %1305 = vmatpush1.bf16.msra.mxu0 %v1116
        %1306 = vmatprep.subr.bf16.mxu0 %v1123
        %1307 = vmatpush1.bf16.msra.mxu0 %v1122
        %1308 = vmatprep.subr.bf16.mxu0 %v1129
        %1309 = vmatpush1.bf16.msra.mxu0 %v1128
        %1310 = vmatprep.subr.bf16.mxu0 %v1135
        %1311 = vmatpush1.bf16.msra.mxu0 %v1134
        %1312 = vmatprep.subr.bf16.mxu0 %v1141
        %1313 = vmatpush1.bf16.msra.mxu0 %v1140
        %1314 = vmatprep.subr.bf16.mxu0 %v1147
        %1315 = vmatpush1.bf16.msra.mxu0 %v1146
        %1316 = vmatprep.subr.bf16.mxu0 %v1153
        %1317 = vmatpush1.bf16.msra.mxu0 %v1152
        %1318 = vmatprep.subr.bf16.mxu0 %v1159
        %1319 = vmatpush1.bf16.msra.mxu0 %v1158
        %1320 = vmatprep.subr.bf16.mxu0 %v1165
        %1321 = vmatpush1.bf16.msra.mxu0 %v1164
        %1322 = vmatprep.subr.bf16.mxu0 %v1171
        %1323 = vmatpush1.bf16.msra.mxu0 %v1170
        %1324 = vmatprep.subr.bf16.mxu0 %v1177
        %1325 = vmatpush1.bf16.msra.mxu0 %v1176
        %1326 = vmatprep.subr.bf16.mxu0 %v1183
        %1327 = vmatpush1.bf16.msra.mxu0 %v1182
        %1328 = vmatprep.subr.bf16.mxu0 %v1189
        %1329 = vmatpush1.bf16.msra.mxu0 %v1188
        %1330 = vmatprep.subr.bf16.mxu0 %v1195
        %1331 = vmatpush1.bf16.msra.mxu0 %v1194
        %1332 = vmatprep.subr.bf16.mxu0 %v1201
        %1333 = vmatpush1.bf16.msra.mxu0 %v1200
        %1334 = vmatprep.mubr.bf16.mxu0 %v688
        %1335 = vmatmul.mubr.bf16.gmra.mrb[0].mxu0 %v687
        %v1336 = vpop.f32.mrb[0].mxu0
        %v1337 = vadd.f32 %v795, %v1336
        %v1338 = vpop.f32.mrb[0].mxu0
        %v1339 = vadd.f32 %v799, %v1338
        %v1340 = vpop.f32.mrb[0].mxu0
        %v1341 = vadd.f32 %v795, %v1340
        %v1342 = vpop.f32.mrb[0].mxu0
        %v1343 = vadd.f32 %v799, %v1342
        %1344 = vdwg.mxu0
        %1345 = vmatprep.subr.bf16.mxu0 %v1113
        %1346 = vmatpush1.bf16.msra.mxu0 %v1112
        %1347 = vmatprep.subr.bf16.mxu0 %v1119
        %1348 = vmatpush1.bf16.msra.mxu0 %v1118
        %1349 = vmatprep.subr.bf16.mxu0 %v1125
        %1350 = vmatpush1.bf16.msra.mxu0 %v1124
        %1351 = vmatprep.subr.bf16.mxu0 %v1131
        %1352 = vmatpush1.bf16.msra.mxu0 %v1130
        %1353 = vmatprep.subr.bf16.mxu0 %v1137
        %1354 = vmatpush1.bf16.msra.mxu0 %v1136
        %1355 = vmatprep.subr.bf16.mxu0 %v1143
        %1356 = vmatpush1.bf16.msra.mxu0 %v1142
        %1357 = vmatprep.subr.bf16.mxu0 %v1149
        %1358 = vmatpush1.bf16.msra.mxu0 %v1148
        %1359 = vmatprep.subr.bf16.mxu0 %v1155
        %1360 = vmatpush1.bf16.msra.mxu0 %v1154
        %1361 = vmatprep.subr.bf16.mxu0 %v1161
        %1362 = vmatpush1.bf16.msra.mxu0 %v1160
        %1363 = vmatprep.subr.bf16.mxu0 %v1167
        %1364 = vmatpush1.bf16.msra.mxu0 %v1166
        %1365 = vmatprep.subr.bf16.mxu0 %v1173
        %1366 = vmatpush1.bf16.msra.mxu0 %v1172
        %1367 = vmatprep.subr.bf16.mxu0 %v1179
        %1368 = vmatpush1.bf16.msra.mxu0 %v1178
        %1369 = vmatprep.subr.bf16.mxu0 %v1185
        %1370 = vmatpush1.bf16.msra.mxu0 %v1184
        %1371 = vmatprep.subr.bf16.mxu0 %v1191
        %1372 = vmatpush1.bf16.msra.mxu0 %v1190
        %1373 = vmatprep.subr.bf16.mxu0 %v1197
        %1374 = vmatpush1.bf16.msra.mxu0 %v1196
        %1375 = vmatprep.subr.bf16.mxu0 %v1203
        %1376 = vmatpush1.bf16.msra.mxu0 %v1202
        %1377 = vmatprep.mubr.bf16.mxu0 %v688
        %1378 = vmatmul.mubr.bf16.gmra.mrb[0].mxu0 %v687
        %v1379 = vpop.f32.mrb[0].mxu0
        %v1380 = vadd.f32 %v803, %v1379
        %v1381 = vpop.f32.mrb[0].mxu0
        %v1382 = vadd.f32 %v807, %v1381
        %v1383 = vpop.f32.mrb[0].mxu0
        %v1384 = vadd.f32 %v803, %v1383
        %v1385 = vpop.f32.mrb[0].mxu0
        %v1386 = vadd.f32 %v807, %v1385
        %1387 = vdwg.mxu0
        %1388 = vmatprep.subr.bf16.mxu0 %v1115
        %1389 = vmatpush1.bf16.msra.mxu0 %v1114
        %1390 = vmatprep.subr.bf16.mxu0 %v1121
        %1391 = vmatpush1.bf16.msra.mxu0 %v1120
        %1392 = vmatprep.subr.bf16.mxu0 %v1127
        %1393 = vmatpush1.bf16.msra.mxu0 %v1126
        %1394 = vmatprep.subr.bf16.mxu0 %v1133
        %1395 = vmatpush1.bf16.msra.mxu0 %v1132
        %1396 = vmatprep.subr.bf16.mxu0 %v1139
        %1397 = vmatpush1.bf16.msra.mxu0 %v1138
        %1398 = vmatprep.subr.bf16.mxu0 %v1145
        %1399 = vmatpush1.bf16.msra.mxu0 %v1144
        %1400 = vmatprep.subr.bf16.mxu0 %v1151
        %1401 = vmatpush1.bf16.msra.mxu0 %v1150
        %1402 = vmatprep.subr.bf16.mxu0 %v1157
        %1403 = vmatpush1.bf16.msra.mxu0 %v1156
        %1404 = vmatprep.subr.bf16.mxu0 %v1163
        %1405 = vmatpush1.bf16.msra.mxu0 %v1162
        %1406 = vmatprep.subr.bf16.mxu0 %v1169
        %1407 = vmatpush1.bf16.msra.mxu0 %v1168
        %1408 = vmatprep.subr.bf16.mxu0 %v1175
        %1409 = vmatpush1.bf16.msra.mxu0 %v1174
        %1410 = vmatprep.subr.bf16.mxu0 %v1181
        %1411 = vmatpush1.bf16.msra.mxu0 %v1180
        %1412 = vmatprep.subr.bf16.mxu0 %v1187
        %1413 = vmatpush1.bf16.msra.mxu0 %v1186
        %1414 = vmatprep.subr.bf16.mxu0 %v1193
        %1415 = vmatpush1.bf16.msra.mxu0 %v1192
        %1416 = vmatprep.subr.bf16.mxu0 %v1199
        %1417 = vmatpush1.bf16.msra.mxu0 %v1198
        %1418 = vmatprep.subr.bf16.mxu0 %v1205
        %1419 = vmatpush1.bf16.msra.mxu0 %v1204
        %1420 = vmatprep.mubr.bf16.mxu0 %v688
        %1421 = vmatmul.mubr.bf16.gmra.mrb[0].mxu0 %v687
        %v1422 = vpop.f32.mrb[0].mxu0
        %v1423 = vadd.f32 %v811, %v1422
        %v1424 = vpop.f32.mrb[0].mxu0
        %v1425 = vadd.f32 %v815, %v1424
        %v1426 = vpop.f32.mrb[0].mxu0
        %v1427 = vadd.f32 %v811, %v1426
        %v1428 = vpop.f32.mrb[0].mxu0
        %v1429 = vadd.f32 %v815, %v1428
        %1430 = vdwg.mxu0
        %v1431 = vpack.c.bf16 %v1341, %v1337
        %v1432 = vpack.c.bf16 %v1343, %v1339
        %v1435 = vunpack.c.l.b16 %v1431
        %v1436 = vunpack.c.l.b16 %v1432
        %v1437 = vunpack.c.h.b16 %v1431
        %v1438 = vunpack.c.h.b16 %v1432
        %v1439 = vpack.c.b16 %v1436, %v1435
        %v1440 = vpack.c.b16 %v1438, %v1437
        %v1441 = vpack.c.bf16 %v1384, %v1380
        %v1442 = vpack.c.bf16 %v1386, %v1382
        %v1445 = vunpack.c.l.b16 %v1441
        %v1446 = vunpack.c.l.b16 %v1442
        %v1447 = vunpack.c.h.b16 %v1441
        %v1448 = vunpack.c.h.b16 %v1442
        %v1449 = vpack.c.b16 %v1446, %v1445
        %v1450 = vpack.c.b16 %v1448, %v1447
        %v1451 = vpack.c.bf16 %v1427, %v1423
        %v1452 = vpack.c.bf16 %v1429, %v1425
        %v1455 = vunpack.c.l.b16 %v1451
        %v1456 = vunpack.c.l.b16 %v1452
        %v1457 = vunpack.c.h.b16 %v1451
        %v1458 = vunpack.c.h.b16 %v1452
        %v1459 = vpack.c.b16 %v1456, %v1455
        %v1460 = vpack.c.b16 %v1458, %v1457
        %vm1461 = vcmask 261120
        %v1463 = vsel %vm1461, %v1439, 0
        %v1466 = vsel %vm1461, %v1449, 0
        %1468 = vmatprep.subr.bf16.mxu0 0
        %1469 = vmatpush1.bf16.xpose.msra.mxu0 %v1466
        %1470 = vmatprep.subr.bf16.mxu0 0
        %1471 = vmatpush1.bf16.xpose.msra.mxu0 0
        %1472 = vmatprep.subr.bf16.mxu0 0
        %1473 = vmatpush1.bf16.xpose.msra.mxu0 0
        %1474 = vmatprep.subr.bf16.mxu0 0
        %1475 = vmatpush1.bf16.xpose.msra.mxu0 0
        %1476 = vmatprep.subr.bf16.mxu0 0
        %1477 = vmatpush1.bf16.xpose.msra.mxu0 0
        %1478 = vmatprep.subr.bf16.mxu0 0
        %1479 = vmatpush1.bf16.xpose.msra.mxu0 0
        %1480 = vmatprep.subr.bf16.mxu0 0
        %1481 = vmatpush1.bf16.xpose.msra.mxu0 0
        %1482 = vmatprep.subr.bf16.mxu0 0
        %1483 = vmatpush1.bf16.xpose.msra.mxu0 0
        %1484 = vmatprep.subr.bf16.mxu0 0
        %1485 = vmatpush1.bf16.xpose.msra.mxu0 0
        %1486 = vmatprep.subr.bf16.mxu0 0
        %1487 = vmatpush1.bf16.xpose.msra.mxu0 0
        %1488 = vmatprep.subr.bf16.mxu0 0
        %1489 = vmatpush1.bf16.xpose.msra.mxu0 0
        %1490 = vmatprep.subr.bf16.mxu0 0
        %1491 = vmatpush1.bf16.xpose.msra.mxu0 0
        %1492 = vmatprep.subr.bf16.mxu0 0
        %1493 = vmatpush1.bf16.xpose.msra.mxu0 0
        %1494 = vmatprep.subr.bf16.mxu0 0
        %1495 = vmatpush1.bf16.xpose.msra.mxu0 0
        %1496 = vmatprep.subr.bf16.mxu0 0
        %1497 = vmatpush1.bf16.xpose.msra.mxu0 0
        %1498 = vmatprep.subr.bf16.mxu0 0
        %1499 = vmatpush1.bf16.xpose.msra.mxu0 0
        %1500 = vmatprep.mubr.bf16.mxu0 0
        %1501 = vmatmul.mubr.bf16.gmra.mrb[0].mxu0 %v1463
        %v1502 = vpop.f32.mrb[0].mxu0
        %v1503 = vadd.f32 0.0, %v1502
        %v1504 = vpop.f32.mrb[0].mxu0
        %v1505 = vpop.f32.mrb[0].mxu0
        %v1506 = vpop.f32.mrb[0].mxu0
        %1507 = vdwg.mxu0
        %v1509 = vsel %vm1461, %v1440, 0
        %v1512 = vsel %vm1461, %v1450, 0
        %1514 = vmatprep.subr.bf16.mxu0 0
        %1515 = vmatpush1.bf16.xpose.msra.mxu0 %v1512
        %1516 = vmatprep.subr.bf16.mxu0 0
        %1517 = vmatpush1.bf16.xpose.msra.mxu0 0
        %1518 = vmatprep.subr.bf16.mxu0 0
        %1519 = vmatpush1.bf16.xpose.msra.mxu0 0
        %1520 = vmatprep.subr.bf16.mxu0 0
        %1521 = vmatpush1.bf16.xpose.msra.mxu0 0
        %1522 = vmatprep.subr.bf16.mxu0 0
        %1523 = vmatpush1.bf16.xpose.msra.mxu0 0
        %1524 = vmatprep.subr.bf16.mxu0 0
        %1525 = vmatpush1.bf16.xpose.msra.mxu0 0
        %1526 = vmatprep.subr.bf16.mxu0 0
        %1527 = vmatpush1.bf16.xpose.msra.mxu0 0
        %1528 = vmatprep.subr.bf16.mxu0 0
        %1529 = vmatpush1.bf16.xpose.msra.mxu0 0
        %1530 = vmatprep.subr.bf16.mxu0 0
        %1531 = vmatpush1.bf16.xpose.msra.mxu0 0
        %1532 = vmatprep.subr.bf16.mxu0 0
        %1533 = vmatpush1.bf16.xpose.msra.mxu0 0
        %1534 = vmatprep.subr.bf16.mxu0 0
        %1535 = vmatpush1.bf16.xpose.msra.mxu0 0
        %1536 = vmatprep.subr.bf16.mxu0 0
        %1537 = vmatpush1.bf16.xpose.msra.mxu0 0
        %1538 = vmatprep.subr.bf16.mxu0 0
        %1539 = vmatpush1.bf16.xpose.msra.mxu0 0
        %1540 = vmatprep.subr.bf16.mxu0 0
        %1541 = vmatpush1.bf16.xpose.msra.mxu0 0
        %1542 = vmatprep.subr.bf16.mxu0 0
        %1543 = vmatpush1.bf16.xpose.msra.mxu0 0
        %1544 = vmatprep.subr.bf16.mxu0 0
        %1545 = vmatpush1.bf16.xpose.msra.mxu0 0
        %1546 = vmatprep.mubr.bf16.mxu0 0
        %1547 = vmatmul.mubr.bf16.gmra.mrb[0].mxu0 %v1509
        %v1548 = vpop.f32.mrb[0].mxu0
        %v1549 = vadd.f32 0.0, %v1548
        %v1550 = vpop.f32.mrb[0].mxu0
        %v1551 = vpop.f32.mrb[0].mxu0
        %v1552 = vpop.f32.mrb[0].mxu0
        %1553 = vdwg.mxu0
        %v1554 = vmul.f32 %v1503, 0.17677669
        %v1555 = vmul.f32 %v1549, 0.17677669
        %vm1556 = vcmask 64512
        %v1557 = vsel %vm1556, %v1554, -inf
        %1558 = vmax.xlane.f32.xlu0 %v1557
        %v1559 = vpop.xlane.xlu0 %1558
        %v1560 = vsel %vm1556, %v1555, -inf
        %1561 = vmax.xlane.f32.xlu0 %v1560
        %v1562 = vpop.xlane.xlu0 %1561
        %v1563 = vsub.f32 %v1554, %v1559
        %v1564 = vsub.f32 %v1555, %v1562
        %v1565 = vmul.f32 %v1563, 1.442695
        %v1566 = vpow.pop %v1565
        %v1567 = vmul.f32 %v1564, 1.442695
        %v1568 = vpow.pop %v1567
        %v1569 = vsel %vm1556, %v1566, 0.0
        %1570 = vadd.xlane.f32.xlu0 %v1569
        %v1571 = vpop.xlane.xlu0 %1570
        %v1572 = vsel %vm1556, %v1568, 0.0
        %1573 = vadd.xlane.f32.xlu0 %v1572
        %v1574 = vpop.xlane.xlu0 %1573
        %v1575 = vrcp.pop %v1571
        %v1576 = vmul.f32 %v1566, %v1575
        %v1577 = vrcp.pop %v1574
        %v1578 = vmul.f32 %v1568, %v1577
        %v1579 = vpack.c.bf16 %v1576, %v1576
        %v1580 = vpack.c.bf16 %v1578, %v1578
        %v1582 = vsel %vm1556, %v1579, 0
        %vm1584 = vcmask 1043456
        %v1586 = vsel %vm1584, %v1459, 0
        %1588 = vmatprep.subr.bf16.mxu0 0
        %1589 = vmatpush1.bf16.msra.mxu0 %v1586
        %1590 = vmatprep.subr.bf16.mxu0 0
        %1591 = vmatpush1.bf16.msra.mxu0 0
        %1592 = vmatprep.subr.bf16.mxu0 0
        %1593 = vmatpush1.bf16.msra.mxu0 0
        %1594 = vmatprep.subr.bf16.mxu0 0
        %1595 = vmatpush1.bf16.msra.mxu0 0
        %1596 = vmatprep.subr.bf16.mxu0 0
        %1597 = vmatpush1.bf16.msra.mxu0 0
        %1598 = vmatprep.subr.bf16.mxu0 0
        %1599 = vmatpush1.bf16.msra.mxu0 0
        %1600 = vmatprep.subr.bf16.mxu0 0
        %1601 = vmatpush1.bf16.msra.mxu0 0
        %1602 = vmatprep.subr.bf16.mxu0 0
        %1603 = vmatpush1.bf16.msra.mxu0 0
        %1604 = vmatprep.subr.bf16.mxu0 0
        %1605 = vmatpush1.bf16.msra.mxu0 0
        %1606 = vmatprep.subr.bf16.mxu0 0
        %1607 = vmatpush1.bf16.msra.mxu0 0
        %1608 = vmatprep.subr.bf16.mxu0 0
        %1609 = vmatpush1.bf16.msra.mxu0 0
        %1610 = vmatprep.subr.bf16.mxu0 0
        %1611 = vmatpush1.bf16.msra.mxu0 0
        %1612 = vmatprep.subr.bf16.mxu0 0
        %1613 = vmatpush1.bf16.msra.mxu0 0
        %1614 = vmatprep.subr.bf16.mxu0 0
        %1615 = vmatpush1.bf16.msra.mxu0 0
        %1616 = vmatprep.subr.bf16.mxu0 0
        %1617 = vmatpush1.bf16.msra.mxu0 0
        %1618 = vmatprep.subr.bf16.mxu0 0
        %1619 = vmatpush1.bf16.msra.mxu0 0
        %1620 = vmatprep.mubr.bf16.mxu0 0
        %1621 = vmatmul.mubr.bf16.gmra.mrb[0].mxu0 %v1582
        %v1622 = vpop.f32.mrb[0].mxu0
        %v1623 = vadd.f32 0.0, %v1622
        %v1624 = vpop.f32.mrb[0].mxu0
        %v1625 = vpop.f32.mrb[0].mxu0
        %v1626 = vpop.f32.mrb[0].mxu0
        %1627 = vdwg.mxu0
        %v1629 = vsel %vm1556, %v1580, 0
        %v1632 = vsel %vm1584, %v1460, 0
        %1634 = vmatprep.subr.bf16.mxu0 0
        %1635 = vmatpush1.bf16.msra.mxu0 %v1632
        %1636 = vmatprep.subr.bf16.mxu0 0
        %1637 = vmatpush1.bf16.msra.mxu0 0
        %1638 = vmatprep.subr.bf16.mxu0 0
        %1639 = vmatpush1.bf16.msra.mxu0 0
        %1640 = vmatprep.subr.bf16.mxu0 0
        %1641 = vmatpush1.bf16.msra.mxu0 0
        %1642 = vmatprep.subr.bf16.mxu0 0
        %1643 = vmatpush1.bf16.msra.mxu0 0
        %1644 = vmatprep.subr.bf16.mxu0 0
        %1645 = vmatpush1.bf16.msra.mxu0 0
        %1646 = vmatprep.subr.bf16.mxu0 0
        %1647 = vmatpush1.bf16.msra.mxu0 0
        %1648 = vmatprep.subr.bf16.mxu0 0
        %1649 = vmatpush1.bf16.msra.mxu0 0
        %1650 = vmatprep.subr.bf16.mxu0 0
        %1651 = vmatpush1.bf16.msra.mxu0 0
        %1652 = vmatprep.subr.bf16.mxu0 0
        %1653 = vmatpush1.bf16.msra.mxu0 0
        %1654 = vmatprep.subr.bf16.mxu0 0
        %1655 = vmatpush1.bf16.msra.mxu0 0
        %1656 = vmatprep.subr.bf16.mxu0 0
        %1657 = vmatpush1.bf16.msra.mxu0 0
        %1658 = vmatprep.subr.bf16.mxu0 0
        %1659 = vmatpush1.bf16.msra.mxu0 0
        %1660 = vmatprep.subr.bf16.mxu0 0
        %1661 = vmatpush1.bf16.msra.mxu0 0
        %1662 = vmatprep.subr.bf16.mxu0 0
        %1663 = vmatpush1.bf16.msra.mxu0 0
        %1664 = vmatprep.subr.bf16.mxu0 0
        %1665 = vmatpush1.bf16.msra.mxu0 0
        %1666 = vmatprep.mubr.bf16.mxu0 0
        %1667 = vmatmul.mubr.bf16.gmra.mrb[0].mxu0 %v1629
        %v1668 = vpop.f32.mrb[0].mxu0
        %v1669 = vadd.f32 0.0, %v1668
        %v1670 = vpop.f32.mrb[0].mxu0
        %v1671 = vpop.f32.mrb[0].mxu0
        %v1672 = vpop.f32.mrb[0].mxu0
        %1673 = vdwg.mxu0
        %v1674 = vpack.c.b16 %v1435, %v1435
        %1675 = vrot.lane.b32.xlu0 %v1674, 96
        %v1676 = vpop.permute.xlu0 %1675
        %v1677 = vpack.c.b16 %v1445, %v1445
        %1678 = vrot.lane.b32.xlu0 %v1677, 96
        %v1679 = vpop.permute.xlu0 %1678
        %v1681 = vsel %vm1461, %v1676, 0
        %v1684 = vsel %vm1461, %v1679, 0
        %1686 = vmatprep.subr.bf16.mxu0 0
        %1687 = vmatpush1.bf16.xpose.msra.mxu0 %v1684
        %1688 = vmatprep.subr.bf16.mxu0 0
        %1689 = vmatpush1.bf16.xpose.msra.mxu0 0
        %1690 = vmatprep.subr.bf16.mxu0 0
        %1691 = vmatpush1.bf16.xpose.msra.mxu0 0
        %1692 = vmatprep.subr.bf16.mxu0 0
        %1693 = vmatpush1.bf16.xpose.msra.mxu0 0
        %1694 = vmatprep.subr.bf16.mxu0 0
        %1695 = vmatpush1.bf16.xpose.msra.mxu0 0
        %1696 = vmatprep.subr.bf16.mxu0 0
        %1697 = vmatpush1.bf16.xpose.msra.mxu0 0
        %1698 = vmatprep.subr.bf16.mxu0 0
        %1699 = vmatpush1.bf16.xpose.msra.mxu0 0
        %1700 = vmatprep.subr.bf16.mxu0 0
        %1701 = vmatpush1.bf16.xpose.msra.mxu0 0
        %1702 = vmatprep.subr.bf16.mxu0 0
        %1703 = vmatpush1.bf16.xpose.msra.mxu0 0
        %1704 = vmatprep.subr.bf16.mxu0 0
        %1705 = vmatpush1.bf16.xpose.msra.mxu0 0
        %1706 = vmatprep.subr.bf16.mxu0 0
        %1707 = vmatpush1.bf16.xpose.msra.mxu0 0
        %1708 = vmatprep.subr.bf16.mxu0 0
        %1709 = vmatpush1.bf16.xpose.msra.mxu0 0
        %1710 = vmatprep.subr.bf16.mxu0 0
        %1711 = vmatpush1.bf16.xpose.msra.mxu0 0
        %1712 = vmatprep.subr.bf16.mxu0 0
        %1713 = vmatpush1.bf16.xpose.msra.mxu0 0
        %1714 = vmatprep.subr.bf16.mxu0 0
        %1715 = vmatpush1.bf16.xpose.msra.mxu0 0
        %1716 = vmatprep.subr.bf16.mxu0 0
        %1717 = vmatpush1.bf16.xpose.msra.mxu0 0
        %1718 = vmatprep.mubr.bf16.mxu0 0
        %1719 = vmatmul.mubr.bf16.gmra.mrb[0].mxu0 %v1681
        %v1720 = vpop.f32.mrb[0].mxu0
        %v1721 = vadd.f32 0.0, %v1720
        %v1722 = vpop.f32.mrb[0].mxu0
        %v1723 = vpop.f32.mrb[0].mxu0
        %v1724 = vpop.f32.mrb[0].mxu0
        %1725 = vdwg.mxu0
        %v1726 = vpack.c.b16 %v1437, %v1437
        %1727 = vrot.lane.b32.xlu0 %v1726, 96
        %v1728 = vpop.permute.xlu0 %1727
        %v1729 = vpack.c.b16 %v1447, %v1447
        %1730 = vrot.lane.b32.xlu0 %v1729, 96
        %v1731 = vpop.permute.xlu0 %1730
        %v1733 = vsel %vm1461, %v1728, 0
        %v1736 = vsel %vm1461, %v1731, 0
        %1738 = vmatprep.subr.bf16.mxu0 0
        %1739 = vmatpush1.bf16.xpose.msra.mxu0 %v1736
        %1740 = vmatprep.subr.bf16.mxu0 0
        %1741 = vmatpush1.bf16.xpose.msra.mxu0 0
        %1742 = vmatprep.subr.bf16.mxu0 0
        %1743 = vmatpush1.bf16.xpose.msra.mxu0 0
        %1744 = vmatprep.subr.bf16.mxu0 0
        %1745 = vmatpush1.bf16.xpose.msra.mxu0 0
        %1746 = vmatprep.subr.bf16.mxu0 0
        %1747 = vmatpush1.bf16.xpose.msra.mxu0 0
        %1748 = vmatprep.subr.bf16.mxu0 0
        %1749 = vmatpush1.bf16.xpose.msra.mxu0 0
        %1750 = vmatprep.subr.bf16.mxu0 0
        %1751 = vmatpush1.bf16.xpose.msra.mxu0 0
        %1752 = vmatprep.subr.bf16.mxu0 0
        %1753 = vmatpush1.bf16.xpose.msra.mxu0 0
        %1754 = vmatprep.subr.bf16.mxu0 0
        %1755 = vmatpush1.bf16.xpose.msra.mxu0 0
        %1756 = vmatprep.subr.bf16.mxu0 0
        %1757 = vmatpush1.bf16.xpose.msra.mxu0 0
        %1758 = vmatprep.subr.bf16.mxu0 0
        %1759 = vmatpush1.bf16.xpose.msra.mxu0 0
        %1760 = vmatprep.subr.bf16.mxu0 0
        %1761 = vmatpush1.bf16.xpose.msra.mxu0 0
        %1762 = vmatprep.subr.bf16.mxu0 0
        %1763 = vmatpush1.bf16.xpose.msra.mxu0 0
        %1764 = vmatprep.subr.bf16.mxu0 0
        %1765 = vmatpush1.bf16.xpose.msra.mxu0 0
        %1766 = vmatprep.subr.bf16.mxu0 0
        %1767 = vmatpush1.bf16.xpose.msra.mxu0 0
        %1768 = vmatprep.subr.bf16.mxu0 0
        %1769 = vmatpush1.bf16.xpose.msra.mxu0 0
        %1770 = vmatprep.mubr.bf16.mxu0 0
        %1771 = vmatmul.mubr.bf16.gmra.mrb[0].mxu0 %v1733
        %v1772 = vpop.f32.mrb[0].mxu0
        %v1773 = vadd.f32 0.0, %v1772
        %v1774 = vpop.f32.mrb[0].mxu0
        %v1775 = vpop.f32.mrb[0].mxu0
        %v1776 = vpop.f32.mrb[0].mxu0
        %1777 = vdwg.mxu0
        %v1778 = vmul.f32 %v1721, 0.17677669
        %v1779 = vmul.f32 %v1773, 0.17677669
        %v1780 = vsel %vm1556, %v1778, -inf
        %1781 = vmax.xlane.f32.xlu0 %v1780
        %v1782 = vpop.xlane.xlu0 %1781
        %v1783 = vsel %vm1556, %v1779, -inf
        %1784 = vmax.xlane.f32.xlu0 %v1783
        %v1785 = vpop.xlane.xlu0 %1784
        %v1786 = vsub.f32 %v1778, %v1782
        %v1787 = vsub.f32 %v1779, %v1785
        %v1788 = vmul.f32 %v1786, 1.442695
        %v1789 = vpow.pop %v1788
        %v1790 = vmul.f32 %v1787, 1.442695
        %v1791 = vpow.pop %v1790
        %v1792 = vsel %vm1556, %v1789, 0.0
        %1793 = vadd.xlane.f32.xlu0 %v1792
        %v1794 = vpop.xlane.xlu0 %1793
        %v1795 = vsel %vm1556, %v1791, 0.0
        %1796 = vadd.xlane.f32.xlu0 %v1795
        %v1797 = vpop.xlane.xlu0 %1796
        %v1798 = vrcp.pop %v1794
        %v1799 = vmul.f32 %v1789, %v1798
        %v1800 = vrcp.pop %v1797
        %v1801 = vmul.f32 %v1791, %v1800
        %v1802 = vpack.c.bf16 %v1799, %v1799
        %v1803 = vpack.c.bf16 %v1801, %v1801
        %v1804 = vpack.c.b16 %v1455, %v1455
        %1805 = vrot.lane.b32.xlu0 %v1804, 96
        %v1806 = vpop.permute.xlu0 %1805
        %v1808 = vsel %vm1556, %v1802, 0
        %v1811 = vsel %vm1584, %v1806, 0
        %1813 = vmatprep.subr.bf16.mxu0 0
        %1814 = vmatpush1.bf16.msra.mxu0 %v1811
        %1815 = vmatprep.subr.bf16.mxu0 0
        %1816 = vmatpush1.bf16.msra.mxu0 0
        %1817 = vmatprep.subr.bf16.mxu0 0
        %1818 = vmatpush1.bf16.msra.mxu0 0
        %1819 = vmatprep.subr.bf16.mxu0 0
        %1820 = vmatpush1.bf16.msra.mxu0 0
        %1821 = vmatprep.subr.bf16.mxu0 0
        %1822 = vmatpush1.bf16.msra.mxu0 0
        %1823 = vmatprep.subr.bf16.mxu0 0
        %1824 = vmatpush1.bf16.msra.mxu0 0
        %1825 = vmatprep.subr.bf16.mxu0 0
        %1826 = vmatpush1.bf16.msra.mxu0 0
        %1827 = vmatprep.subr.bf16.mxu0 0
        %1828 = vmatpush1.bf16.msra.mxu0 0
        %1829 = vmatprep.subr.bf16.mxu0 0
        %1830 = vmatpush1.bf16.msra.mxu0 0
        %1831 = vmatprep.subr.bf16.mxu0 0
        %1832 = vmatpush1.bf16.msra.mxu0 0
        %1833 = vmatprep.subr.bf16.mxu0 0
        %1834 = vmatpush1.bf16.msra.mxu0 0
        %1835 = vmatprep.subr.bf16.mxu0 0
        %1836 = vmatpush1.bf16.msra.mxu0 0
        %1837 = vmatprep.subr.bf16.mxu0 0
        %1838 = vmatpush1.bf16.msra.mxu0 0
        %1839 = vmatprep.subr.bf16.mxu0 0
        %1840 = vmatpush1.bf16.msra.mxu0 0
        %1841 = vmatprep.subr.bf16.mxu0 0
        %1842 = vmatpush1.bf16.msra.mxu0 0
        %1843 = vmatprep.subr.bf16.mxu0 0
        %1844 = vmatpush1.bf16.msra.mxu0 0
        %1845 = vmatprep.mubr.bf16.mxu0 0
        %1846 = vmatmul.mubr.bf16.gmra.mrb[0].mxu0 %v1808
        %v1847 = vpop.f32.mrb[0].mxu0
        %v1848 = vadd.f32 0.0, %v1847
        %v1849 = vpop.f32.mrb[0].mxu0
        %v1850 = vpop.f32.mrb[0].mxu0
        %v1851 = vpop.f32.mrb[0].mxu0
        %1852 = vdwg.mxu0
        %v1853 = vpack.c.b16 %v1457, %v1457
        %1854 = vrot.lane.b32.xlu0 %v1853, 96
        %v1855 = vpop.permute.xlu0 %1854
        %v1857 = vsel %vm1556, %v1803, 0
        %v1860 = vsel %vm1584, %v1855, 0
        %1862 = vmatprep.subr.bf16.mxu0 0
        %1863 = vmatpush1.bf16.msra.mxu0 %v1860
        %1864 = vmatprep.subr.bf16.mxu0 0
        %1865 = vmatpush1.bf16.msra.mxu0 0
        %1866 = vmatprep.subr.bf16.mxu0 0
        %1867 = vmatpush1.bf16.msra.mxu0 0
        %1868 = vmatprep.subr.bf16.mxu0 0
        %1869 = vmatpush1.bf16.msra.mxu0 0
        %1870 = vmatprep.subr.bf16.mxu0 0
        %1871 = vmatpush1.bf16.msra.mxu0 0
        %1872 = vmatprep.subr.bf16.mxu0 0
        %1873 = vmatpush1.bf16.msra.mxu0 0
        %1874 = vmatprep.subr.bf16.mxu0 0
        %1875 = vmatpush1.bf16.msra.mxu0 0
        %1876 = vmatprep.subr.bf16.mxu0 0
        %1877 = vmatpush1.bf16.msra.mxu0 0
        %1878 = vmatprep.subr.bf16.mxu0 0
        %1879 = vmatpush1.bf16.msra.mxu0 0
        %1880 = vmatprep.subr.bf16.mxu0 0
        %1881 = vmatpush1.bf16.msra.mxu0 0
        %1882 = vmatprep.subr.bf16.mxu0 0
        %1883 = vmatpush1.bf16.msra.mxu0 0
        %1884 = vmatprep.subr.bf16.mxu0 0
        %1885 = vmatpush1.bf16.msra.mxu0 0
        %1886 = vmatprep.subr.bf16.mxu0 0
        %1887 = vmatpush1.bf16.msra.mxu0 0
        %1888 = vmatprep.subr.bf16.mxu0 0
        %1889 = vmatpush1.bf16.msra.mxu0 0
        %1890 = vmatprep.subr.bf16.mxu0 0
        %1891 = vmatpush1.bf16.msra.mxu0 0
        %1892 = vmatprep.subr.bf16.mxu0 0
        %1893 = vmatpush1.bf16.msra.mxu0 0
        %1894 = vmatprep.mubr.bf16.mxu0 0
        %1895 = vmatmul.mubr.bf16.gmra.mrb[0].mxu0 %v1857
        %v1896 = vpop.f32.mrb[0].mxu0
        %v1897 = vadd.f32 0.0, %v1896
        %v1898 = vpop.f32.mrb[0].mxu0
        %v1899 = vpop.f32.mrb[0].mxu0
        %v1900 = vpop.f32.mrb[0].mxu0
        %1901 = vdwg.mxu0
        %1902 = vrot.lane.b32.xlu0 %v1674, 64
        %v1903 = vpop.permute.xlu0 %1902
        %1904 = vrot.lane.b32.xlu0 %v1677, 64
        %v1905 = vpop.permute.xlu0 %1904
        %v1907 = vsel %vm1461, %v1903, 0
        %v1910 = vsel %vm1461, %v1905, 0
        %1912 = vmatprep.subr.bf16.mxu0 0
        %1913 = vmatpush1.bf16.xpose.msra.mxu0 %v1910
        %1914 = vmatprep.subr.bf16.mxu0 0
        %1915 = vmatpush1.bf16.xpose.msra.mxu0 0
        %1916 = vmatprep.subr.bf16.mxu0 0
        %1917 = vmatpush1.bf16.xpose.msra.mxu0 0
        %1918 = vmatprep.subr.bf16.mxu0 0
        %1919 = vmatpush1.bf16.xpose.msra.mxu0 0
        %1920 = vmatprep.subr.bf16.mxu0 0
        %1921 = vmatpush1.bf16.xpose.msra.mxu0 0
        %1922 = vmatprep.subr.bf16.mxu0 0
        %1923 = vmatpush1.bf16.xpose.msra.mxu0 0
        %1924 = vmatprep.subr.bf16.mxu0 0
        %1925 = vmatpush1.bf16.xpose.msra.mxu0 0
        %1926 = vmatprep.subr.bf16.mxu0 0
        %1927 = vmatpush1.bf16.xpose.msra.mxu0 0
        %1928 = vmatprep.subr.bf16.mxu0 0
        %1929 = vmatpush1.bf16.xpose.msra.mxu0 0
        %1930 = vmatprep.subr.bf16.mxu0 0
        %1931 = vmatpush1.bf16.xpose.msra.mxu0 0
        %1932 = vmatprep.subr.bf16.mxu0 0
        %1933 = vmatpush1.bf16.xpose.msra.mxu0 0
        %1934 = vmatprep.subr.bf16.mxu0 0
        %1935 = vmatpush1.bf16.xpose.msra.mxu0 0
        %1936 = vmatprep.subr.bf16.mxu0 0
        %1937 = vmatpush1.bf16.xpose.msra.mxu0 0
        %1938 = vmatprep.subr.bf16.mxu0 0
        %1939 = vmatpush1.bf16.xpose.msra.mxu0 0
        %1940 = vmatprep.subr.bf16.mxu0 0
        %1941 = vmatpush1.bf16.xpose.msra.mxu0 0
        %1942 = vmatprep.subr.bf16.mxu0 0
        %1943 = vmatpush1.bf16.xpose.msra.mxu0 0
        %1944 = vmatprep.mubr.bf16.mxu0 0
        %1945 = vmatmul.mubr.bf16.gmra.mrb[0].mxu0 %v1907
        %v1946 = vpop.f32.mrb[0].mxu0
        %v1947 = vadd.f32 0.0, %v1946
        %v1948 = vpop.f32.mrb[0].mxu0
        %v1949 = vpop.f32.mrb[0].mxu0
        %v1950 = vpop.f32.mrb[0].mxu0
        %1951 = vdwg.mxu0
        %1952 = vrot.lane.b32.xlu0 %v1726, 64
        %v1953 = vpop.permute.xlu0 %1952
        %1954 = vrot.lane.b32.xlu0 %v1729, 64
        %v1955 = vpop.permute.xlu0 %1954
        %v1957 = vsel %vm1461, %v1953, 0
        %v1960 = vsel %vm1461, %v1955, 0
        %1962 = vmatprep.subr.bf16.mxu0 0
        %1963 = vmatpush1.bf16.xpose.msra.mxu0 %v1960
        %1964 = vmatprep.subr.bf16.mxu0 0
        %1965 = vmatpush1.bf16.xpose.msra.mxu0 0
        %1966 = vmatprep.subr.bf16.mxu0 0
        %1967 = vmatpush1.bf16.xpose.msra.mxu0 0
        %1968 = vmatprep.subr.bf16.mxu0 0
        %1969 = vmatpush1.bf16.xpose.msra.mxu0 0
        %1970 = vmatprep.subr.bf16.mxu0 0
        %1971 = vmatpush1.bf16.xpose.msra.mxu0 0
        %1972 = vmatprep.subr.bf16.mxu0 0
        %1973 = vmatpush1.bf16.xpose.msra.mxu0 0
        %1974 = vmatprep.subr.bf16.mxu0 0
        %1975 = vmatpush1.bf16.xpose.msra.mxu0 0
        %1976 = vmatprep.subr.bf16.mxu0 0
        %1977 = vmatpush1.bf16.xpose.msra.mxu0 0
        %1978 = vmatprep.subr.bf16.mxu0 0
        %1979 = vmatpush1.bf16.xpose.msra.mxu0 0
        %1980 = vmatprep.subr.bf16.mxu0 0
        %1981 = vmatpush1.bf16.xpose.msra.mxu0 0
        %1982 = vmatprep.subr.bf16.mxu0 0
        %1983 = vmatpush1.bf16.xpose.msra.mxu0 0
        %1984 = vmatprep.subr.bf16.mxu0 0
        %1985 = vmatpush1.bf16.xpose.msra.mxu0 0
        %1986 = vmatprep.subr.bf16.mxu0 0
        %1987 = vmatpush1.bf16.xpose.msra.mxu0 0
        %1988 = vmatprep.subr.bf16.mxu0 0
        %1989 = vmatpush1.bf16.xpose.msra.mxu0 0
        %1990 = vmatprep.subr.bf16.mxu0 0
        %1991 = vmatpush1.bf16.xpose.msra.mxu0 0
        %1992 = vmatprep.subr.bf16.mxu0 0
        %1993 = vmatpush1.bf16.xpose.msra.mxu0 0
        %1994 = vmatprep.mubr.bf16.mxu0 0
        %1995 = vmatmul.mubr.bf16.gmra.mrb[0].mxu0 %v1957
        %v1996 = vpop.f32.mrb[0].mxu0
        %v1997 = vadd.f32 0.0, %v1996
        %v1998 = vpop.f32.mrb[0].mxu0
        %v1999 = vpop.f32.mrb[0].mxu0
        %v2000 = vpop.f32.mrb[0].mxu0
        %2001 = vdwg.mxu0
        %v2002 = vmul.f32 %v1947, 0.17677669
        %v2003 = vmul.f32 %v1997, 0.17677669
        %v2004 = vsel %vm1556, %v2002, -inf
        %2005 = vmax.xlane.f32.xlu0 %v2004
        %v2006 = vpop.xlane.xlu0 %2005
        %v2007 = vsel %vm1556, %v2003, -inf
        %2008 = vmax.xlane.f32.xlu0 %v2007
        %v2009 = vpop.xlane.xlu0 %2008
        %v2010 = vsub.f32 %v2002, %v2006
        %v2011 = vsub.f32 %v2003, %v2009
        %v2012 = vmul.f32 %v2010, 1.442695
        %v2013 = vpow.pop %v2012
        %v2014 = vmul.f32 %v2011, 1.442695
        %v2015 = vpow.pop %v2014
        %v2016 = vsel %vm1556, %v2013, 0.0
        %2017 = vadd.xlane.f32.xlu0 %v2016
        %v2018 = vpop.xlane.xlu0 %2017
        %v2019 = vsel %vm1556, %v2015, 0.0
        %2020 = vadd.xlane.f32.xlu0 %v2019
        %v2021 = vpop.xlane.xlu0 %2020
        %v2022 = vrcp.pop %v2018
        %v2023 = vmul.f32 %v2013, %v2022
        %v2024 = vrcp.pop %v2021
        %v2025 = vmul.f32 %v2015, %v2024
        %v2026 = vpack.c.bf16 %v2023, %v2023
        %v2027 = vpack.c.bf16 %v2025, %v2025
        %2028 = vrot.lane.b32.xlu0 %v1804, 64
        %v2029 = vpop.permute.xlu0 %2028
        %v2031 = vsel %vm1556, %v2026, 0
        %v2034 = vsel %vm1584, %v2029, 0
        %2036 = vmatprep.subr.bf16.mxu0 0
        %2037 = vmatpush1.bf16.msra.mxu0 %v2034
        %2038 = vmatprep.subr.bf16.mxu0 0
        %2039 = vmatpush1.bf16.msra.mxu0 0
        %2040 = vmatprep.subr.bf16.mxu0 0
        %2041 = vmatpush1.bf16.msra.mxu0 0
        %2042 = vmatprep.subr.bf16.mxu0 0
        %2043 = vmatpush1.bf16.msra.mxu0 0
        %2044 = vmatprep.subr.bf16.mxu0 0
        %2045 = vmatpush1.bf16.msra.mxu0 0
        %2046 = vmatprep.subr.bf16.mxu0 0
        %2047 = vmatpush1.bf16.msra.mxu0 0
        %2048 = vmatprep.subr.bf16.mxu0 0
        %2049 = vmatpush1.bf16.msra.mxu0 0
        %2050 = vmatprep.subr.bf16.mxu0 0
        %2051 = vmatpush1.bf16.msra.mxu0 0
        %2052 = vmatprep.subr.bf16.mxu0 0
        %2053 = vmatpush1.bf16.msra.mxu0 0
        %2054 = vmatprep.subr.bf16.mxu0 0
        %2055 = vmatpush1.bf16.msra.mxu0 0
        %2056 = vmatprep.subr.bf16.mxu0 0
        %2057 = vmatpush1.bf16.msra.mxu0 0
        %2058 = vmatprep.subr.bf16.mxu0 0
        %2059 = vmatpush1.bf16.msra.mxu0 0
        %2060 = vmatprep.subr.bf16.mxu0 0
        %2061 = vmatpush1.bf16.msra.mxu0 0
        %2062 = vmatprep.subr.bf16.mxu0 0
        %2063 = vmatpush1.bf16.msra.mxu0 0
        %2064 = vmatprep.subr.bf16.mxu0 0
        %2065 = vmatpush1.bf16.msra.mxu0 0
        %2066 = vmatprep.subr.bf16.mxu0 0
        %2067 = vmatpush1.bf16.msra.mxu0 0
        %2068 = vmatprep.mubr.bf16.mxu0 0
        %2069 = vmatmul.mubr.bf16.gmra.mrb[0].mxu0 %v2031
        %v2070 = vpop.f32.mrb[0].mxu0
        %v2071 = vadd.f32 0.0, %v2070
        %v2072 = vpop.f32.mrb[0].mxu0
        %v2073 = vpop.f32.mrb[0].mxu0
        %v2074 = vpop.f32.mrb[0].mxu0
        %2075 = vdwg.mxu0
        %2076 = vrot.lane.b32.xlu0 %v1853, 64
        %v2077 = vpop.permute.xlu0 %2076
        %v2079 = vsel %vm1556, %v2027, 0
        %v2082 = vsel %vm1584, %v2077, 0
        %2084 = vmatprep.subr.bf16.mxu0 0
        %2085 = vmatpush1.bf16.msra.mxu0 %v2082
        %2086 = vmatprep.subr.bf16.mxu0 0
        %2087 = vmatpush1.bf16.msra.mxu0 0
        %2088 = vmatprep.subr.bf16.mxu0 0
        %2089 = vmatpush1.bf16.msra.mxu0 0
        %2090 = vmatprep.subr.bf16.mxu0 0
        %2091 = vmatpush1.bf16.msra.mxu0 0
        %2092 = vmatprep.subr.bf16.mxu0 0
        %2093 = vmatpush1.bf16.msra.mxu0 0
        %2094 = vmatprep.subr.bf16.mxu0 0
        %2095 = vmatpush1.bf16.msra.mxu0 0
        %2096 = vmatprep.subr.bf16.mxu0 0
        %2097 = vmatpush1.bf16.msra.mxu0 0
        %2098 = vmatprep.subr.bf16.mxu0 0
        %2099 = vmatpush1.bf16.msra.mxu0 0
        %2100 = vmatprep.subr.bf16.mxu0 0
        %2101 = vmatpush1.bf16.msra.mxu0 0
        %2102 = vmatprep.subr.bf16.mxu0 0
        %2103 = vmatpush1.bf16.msra.mxu0 0
        %2104 = vmatprep.subr.bf16.mxu0 0
        %2105 = vmatpush1.bf16.msra.mxu0 0
        %2106 = vmatprep.subr.bf16.mxu0 0
        %2107 = vmatpush1.bf16.msra.mxu0 0
        %2108 = vmatprep.subr.bf16.mxu0 0
        %2109 = vmatpush1.bf16.msra.mxu0 0
        %2110 = vmatprep.subr.bf16.mxu0 0
        %2111 = vmatpush1.bf16.msra.mxu0 0
        %2112 = vmatprep.subr.bf16.mxu0 0
        %2113 = vmatpush1.bf16.msra.mxu0 0
        %2114 = vmatprep.subr.bf16.mxu0 0
        %2115 = vmatpush1.bf16.msra.mxu0 0
        %2116 = vmatprep.mubr.bf16.mxu0 0
        %2117 = vmatmul.mubr.bf16.gmra.mrb[0].mxu0 %v2079
        %v2118 = vpop.f32.mrb[0].mxu0
        %v2119 = vadd.f32 0.0, %v2118
        %v2120 = vpop.f32.mrb[0].mxu0
        %v2121 = vpop.f32.mrb[0].mxu0
        %v2122 = vpop.f32.mrb[0].mxu0
        %2123 = vdwg.mxu0
        %2124 = vrot.lane.b32.xlu0 %v1674, 32
        %v2125 = vpop.permute.xlu0 %2124
        %2126 = vrot.lane.b32.xlu0 %v1677, 32
        %v2127 = vpop.permute.xlu0 %2126
        %v2129 = vsel %vm1461, %v2125, 0
        %v2132 = vsel %vm1461, %v2127, 0
        %2134 = vmatprep.subr.bf16.mxu0 0
        %2135 = vmatpush1.bf16.xpose.msra.mxu0 %v2132
        %2136 = vmatprep.subr.bf16.mxu0 0
        %2137 = vmatpush1.bf16.xpose.msra.mxu0 0
        %2138 = vmatprep.subr.bf16.mxu0 0
        %2139 = vmatpush1.bf16.xpose.msra.mxu0 0
        %2140 = vmatprep.subr.bf16.mxu0 0
        %2141 = vmatpush1.bf16.xpose.msra.mxu0 0
        %2142 = vmatprep.subr.bf16.mxu0 0
        %2143 = vmatpush1.bf16.xpose.msra.mxu0 0
        %2144 = vmatprep.subr.bf16.mxu0 0
        %2145 = vmatpush1.bf16.xpose.msra.mxu0 0
        %2146 = vmatprep.subr.bf16.mxu0 0
        %2147 = vmatpush1.bf16.xpose.msra.mxu0 0
        %2148 = vmatprep.subr.bf16.mxu0 0
        %2149 = vmatpush1.bf16.xpose.msra.mxu0 0
        %2150 = vmatprep.subr.bf16.mxu0 0
        %2151 = vmatpush1.bf16.xpose.msra.mxu0 0
        %2152 = vmatprep.subr.bf16.mxu0 0
        %2153 = vmatpush1.bf16.xpose.msra.mxu0 0
        %2154 = vmatprep.subr.bf16.mxu0 0
        %2155 = vmatpush1.bf16.xpose.msra.mxu0 0
        %2156 = vmatprep.subr.bf16.mxu0 0
        %2157 = vmatpush1.bf16.xpose.msra.mxu0 0
        %2158 = vmatprep.subr.bf16.mxu0 0
        %2159 = vmatpush1.bf16.xpose.msra.mxu0 0
        %2160 = vmatprep.subr.bf16.mxu0 0
        %2161 = vmatpush1.bf16.xpose.msra.mxu0 0
        %2162 = vmatprep.subr.bf16.mxu0 0
        %2163 = vmatpush1.bf16.xpose.msra.mxu0 0
        %2164 = vmatprep.subr.bf16.mxu0 0
        %2165 = vmatpush1.bf16.xpose.msra.mxu0 0
        %2166 = vmatprep.mubr.bf16.mxu0 0
        %2167 = vmatmul.mubr.bf16.gmra.mrb[0].mxu0 %v2129
        %v2168 = vpop.f32.mrb[0].mxu0
        %v2169 = vadd.f32 0.0, %v2168
        %v2170 = vpop.f32.mrb[0].mxu0
        %v2171 = vpop.f32.mrb[0].mxu0
        %v2172 = vpop.f32.mrb[0].mxu0
        %2173 = vdwg.mxu0
        %2174 = vrot.lane.b32.xlu0 %v1726, 32
        %v2175 = vpop.permute.xlu0 %2174
        %2176 = vrot.lane.b32.xlu0 %v1729, 32
        %v2177 = vpop.permute.xlu0 %2176
        %v2179 = vsel %vm1461, %v2175, 0
        %v2182 = vsel %vm1461, %v2177, 0
        %2184 = vmatprep.subr.bf16.mxu0 0
        %2185 = vmatpush1.bf16.xpose.msra.mxu0 %v2182
        %2186 = vmatprep.subr.bf16.mxu0 0
        %2187 = vmatpush1.bf16.xpose.msra.mxu0 0
        %2188 = vmatprep.subr.bf16.mxu0 0
        %2189 = vmatpush1.bf16.xpose.msra.mxu0 0
        %2190 = vmatprep.subr.bf16.mxu0 0
        %2191 = vmatpush1.bf16.xpose.msra.mxu0 0
        %2192 = vmatprep.subr.bf16.mxu0 0
        %2193 = vmatpush1.bf16.xpose.msra.mxu0 0
        %2194 = vmatprep.subr.bf16.mxu0 0
        %2195 = vmatpush1.bf16.xpose.msra.mxu0 0
        %2196 = vmatprep.subr.bf16.mxu0 0
        %2197 = vmatpush1.bf16.xpose.msra.mxu0 0
        %2198 = vmatprep.subr.bf16.mxu0 0
        %2199 = vmatpush1.bf16.xpose.msra.mxu0 0
        %2200 = vmatprep.subr.bf16.mxu0 0
        %2201 = vmatpush1.bf16.xpose.msra.mxu0 0
        %2202 = vmatprep.subr.bf16.mxu0 0
        %2203 = vmatpush1.bf16.xpose.msra.mxu0 0
        %2204 = vmatprep.subr.bf16.mxu0 0
        %2205 = vmatpush1.bf16.xpose.msra.mxu0 0
        %2206 = vmatprep.subr.bf16.mxu0 0
        %2207 = vmatpush1.bf16.xpose.msra.mxu0 0
        %2208 = vmatprep.subr.bf16.mxu0 0
        %2209 = vmatpush1.bf16.xpose.msra.mxu0 0
        %2210 = vmatprep.subr.bf16.mxu0 0
        %2211 = vmatpush1.bf16.xpose.msra.mxu0 0
        %2212 = vmatprep.subr.bf16.mxu0 0
        %2213 = vmatpush1.bf16.xpose.msra.mxu0 0
        %2214 = vmatprep.subr.bf16.mxu0 0
        %2215 = vmatpush1.bf16.xpose.msra.mxu0 0
        %2216 = vmatprep.mubr.bf16.mxu0 0
        %2217 = vmatmul.mubr.bf16.gmra.mrb[0].mxu0 %v2179
        %v2218 = vpop.f32.mrb[0].mxu0
        %v2219 = vadd.f32 0.0, %v2218
        %v2220 = vpop.f32.mrb[0].mxu0
        %v2221 = vpop.f32.mrb[0].mxu0
        %v2222 = vpop.f32.mrb[0].mxu0
        %2223 = vdwg.mxu0
        %v2224 = vmul.f32 %v2169, 0.17677669
        %v2225 = vmul.f32 %v2219, 0.17677669
        %v2226 = vsel %vm1556, %v2224, -inf
        %2227 = vmax.xlane.f32.xlu0 %v2226
        %v2228 = vpop.xlane.xlu0 %2227
        %v2229 = vsel %vm1556, %v2225, -inf
        %2230 = vmax.xlane.f32.xlu0 %v2229
        %v2231 = vpop.xlane.xlu0 %2230
        %v2232 = vsub.f32 %v2224, %v2228
        %v2233 = vsub.f32 %v2225, %v2231
        %v2234 = vmul.f32 %v2232, 1.442695
        %v2235 = vpow.pop %v2234
        %v2236 = vmul.f32 %v2233, 1.442695
        %v2237 = vpow.pop %v2236
        %v2238 = vsel %vm1556, %v2235, 0.0
        %2239 = vadd.xlane.f32.xlu0 %v2238
        %v2240 = vpop.xlane.xlu0 %2239
        %v2241 = vsel %vm1556, %v2237, 0.0
        %2242 = vadd.xlane.f32.xlu0 %v2241
        %v2243 = vpop.xlane.xlu0 %2242
        %v2244 = vrcp.pop %v2240
        %v2245 = vmul.f32 %v2235, %v2244
        %v2246 = vrcp.pop %v2243
        %v2247 = vmul.f32 %v2237, %v2246
        %v2248 = vpack.c.bf16 %v2245, %v2245
        %v2249 = vpack.c.bf16 %v2247, %v2247
        %2250 = vrot.lane.b32.xlu0 %v1804, 32
        %v2251 = vpop.permute.xlu0 %2250
        %v2253 = vsel %vm1556, %v2248, 0
        %v2256 = vsel %vm1584, %v2251, 0
        %2258 = vmatprep.subr.bf16.mxu0 0
        %2259 = vmatpush1.bf16.msra.mxu0 %v2256
        %2260 = vmatprep.subr.bf16.mxu0 0
        %2261 = vmatpush1.bf16.msra.mxu0 0
        %2262 = vmatprep.subr.bf16.mxu0 0
        %2263 = vmatpush1.bf16.msra.mxu0 0
        %2264 = vmatprep.subr.bf16.mxu0 0
        %2265 = vmatpush1.bf16.msra.mxu0 0
        %2266 = vmatprep.subr.bf16.mxu0 0
        %2267 = vmatpush1.bf16.msra.mxu0 0
        %2268 = vmatprep.subr.bf16.mxu0 0
        %2269 = vmatpush1.bf16.msra.mxu0 0
        %2270 = vmatprep.subr.bf16.mxu0 0
        %2271 = vmatpush1.bf16.msra.mxu0 0
        %2272 = vmatprep.subr.bf16.mxu0 0
        %2273 = vmatpush1.bf16.msra.mxu0 0
        %2274 = vmatprep.subr.bf16.mxu0 0
        %2275 = vmatpush1.bf16.msra.mxu0 0
        %2276 = vmatprep.subr.bf16.mxu0 0
        %2277 = vmatpush1.bf16.msra.mxu0 0
        %2278 = vmatprep.subr.bf16.mxu0 0
        %2279 = vmatpush1.bf16.msra.mxu0 0
        %2280 = vmatprep.subr.bf16.mxu0 0
        %2281 = vmatpush1.bf16.msra.mxu0 0
        %2282 = vmatprep.subr.bf16.mxu0 0
        %2283 = vmatpush1.bf16.msra.mxu0 0
        %2284 = vmatprep.subr.bf16.mxu0 0
        %2285 = vmatpush1.bf16.msra.mxu0 0
        %2286 = vmatprep.subr.bf16.mxu0 0
        %2287 = vmatpush1.bf16.msra.mxu0 0
        %2288 = vmatprep.subr.bf16.mxu0 0
        %2289 = vmatpush1.bf16.msra.mxu0 0
        %2290 = vmatprep.mubr.bf16.mxu0 0
        %2291 = vmatmul.mubr.bf16.gmra.mrb[0].mxu0 %v2253
        %v2292 = vpop.f32.mrb[0].mxu0
        %v2293 = vadd.f32 0.0, %v2292
        %v2294 = vpop.f32.mrb[0].mxu0
        %v2295 = vpop.f32.mrb[0].mxu0
        %v2296 = vpop.f32.mrb[0].mxu0
        %2297 = vdwg.mxu0
        %2298 = vrot.lane.b32.xlu0 %v1853, 32
        %v2299 = vpop.permute.xlu0 %2298
        %v2301 = vsel %vm1556, %v2249, 0
        %v2304 = vsel %vm1584, %v2299, 0
        %2306 = vmatprep.subr.bf16.mxu0 0
        %2307 = vmatpush1.bf16.msra.mxu0 %v2304
        %2308 = vmatprep.subr.bf16.mxu0 0
        %2309 = vmatpush1.bf16.msra.mxu0 0
        %2310 = vmatprep.subr.bf16.mxu0 0
        %2311 = vmatpush1.bf16.msra.mxu0 0
        %2312 = vmatprep.subr.bf16.mxu0 0
        %2313 = vmatpush1.bf16.msra.mxu0 0
        %2314 = vmatprep.subr.bf16.mxu0 0
        %2315 = vmatpush1.bf16.msra.mxu0 0
        %2316 = vmatprep.subr.bf16.mxu0 0
        %2317 = vmatpush1.bf16.msra.mxu0 0
        %2318 = vmatprep.subr.bf16.mxu0 0
        %2319 = vmatpush1.bf16.msra.mxu0 0
        %2320 = vmatprep.subr.bf16.mxu0 0
        %2321 = vmatpush1.bf16.msra.mxu0 0
        %2322 = vmatprep.subr.bf16.mxu0 0
        %2323 = vmatpush1.bf16.msra.mxu0 0
        %2324 = vmatprep.subr.bf16.mxu0 0
        %2325 = vmatpush1.bf16.msra.mxu0 0
        %2326 = vmatprep.subr.bf16.mxu0 0
        %2327 = vmatpush1.bf16.msra.mxu0 0
        %2328 = vmatprep.subr.bf16.mxu0 0
        %2329 = vmatpush1.bf16.msra.mxu0 0
        %2330 = vmatprep.subr.bf16.mxu0 0
        %2331 = vmatpush1.bf16.msra.mxu0 0
        %2332 = vmatprep.subr.bf16.mxu0 0
        %2333 = vmatpush1.bf16.msra.mxu0 0
        %2334 = vmatprep.subr.bf16.mxu0 0
        %2335 = vmatpush1.bf16.msra.mxu0 0
        %2336 = vmatprep.subr.bf16.mxu0 0
        %2337 = vmatpush1.bf16.msra.mxu0 0
        %2338 = vmatprep.mubr.bf16.mxu0 0
        %2339 = vmatmul.mubr.bf16.gmra.mrb[0].mxu0 %v2301
        %v2340 = vpop.f32.mrb[0].mxu0
        %v2341 = vadd.f32 0.0, %v2340
        %v2342 = vpop.f32.mrb[0].mxu0
        %v2343 = vpop.f32.mrb[0].mxu0
        %v2344 = vpop.f32.mrb[0].mxu0
        %2345 = vdwg.mxu0
        %v2346 = vrot.slane %v1439, 4
        %v2347 = vrot.slane %v1449, 4
        %v2349 = vsel %vm1461, %v2346, 0
        %v2352 = vsel %vm1461, %v2347, 0
        %2354 = vmatprep.subr.bf16.mxu0 0
        %2355 = vmatpush1.bf16.xpose.msra.mxu0 %v2352
        %2356 = vmatprep.subr.bf16.mxu0 0
        %2357 = vmatpush1.bf16.xpose.msra.mxu0 0
        %2358 = vmatprep.subr.bf16.mxu0 0
        %2359 = vmatpush1.bf16.xpose.msra.mxu0 0
        %2360 = vmatprep.subr.bf16.mxu0 0
        %2361 = vmatpush1.bf16.xpose.msra.mxu0 0
        %2362 = vmatprep.subr.bf16.mxu0 0
        %2363 = vmatpush1.bf16.xpose.msra.mxu0 0
        %2364 = vmatprep.subr.bf16.mxu0 0
        %2365 = vmatpush1.bf16.xpose.msra.mxu0 0
        %2366 = vmatprep.subr.bf16.mxu0 0
        %2367 = vmatpush1.bf16.xpose.msra.mxu0 0
        %2368 = vmatprep.subr.bf16.mxu0 0
        %2369 = vmatpush1.bf16.xpose.msra.mxu0 0
        %2370 = vmatprep.subr.bf16.mxu0 0
        %2371 = vmatpush1.bf16.xpose.msra.mxu0 0
        %2372 = vmatprep.subr.bf16.mxu0 0
        %2373 = vmatpush1.bf16.xpose.msra.mxu0 0
        %2374 = vmatprep.subr.bf16.mxu0 0
        %2375 = vmatpush1.bf16.xpose.msra.mxu0 0
        %2376 = vmatprep.subr.bf16.mxu0 0
        %2377 = vmatpush1.bf16.xpose.msra.mxu0 0
        %2378 = vmatprep.subr.bf16.mxu0 0
        %2379 = vmatpush1.bf16.xpose.msra.mxu0 0
        %2380 = vmatprep.subr.bf16.mxu0 0
        %2381 = vmatpush1.bf16.xpose.msra.mxu0 0
        %2382 = vmatprep.subr.bf16.mxu0 0
        %2383 = vmatpush1.bf16.xpose.msra.mxu0 0
        %2384 = vmatprep.subr.bf16.mxu0 0
        %2385 = vmatpush1.bf16.xpose.msra.mxu0 0
        %2386 = vmatprep.mubr.bf16.mxu0 0
        %2387 = vmatmul.mubr.bf16.gmra.mrb[0].mxu0 %v2349
        %v2388 = vpop.f32.mrb[0].mxu0
        %v2389 = vadd.f32 0.0, %v2388
        %v2390 = vpop.f32.mrb[0].mxu0
        %v2391 = vpop.f32.mrb[0].mxu0
        %v2392 = vpop.f32.mrb[0].mxu0
        %2393 = vdwg.mxu0
        %v2394 = vrot.slane %v1440, 4
        %v2395 = vrot.slane %v1450, 4
        %v2397 = vsel %vm1461, %v2394, 0
        %v2400 = vsel %vm1461, %v2395, 0
        %2402 = vmatprep.subr.bf16.mxu0 0
        %2403 = vmatpush1.bf16.xpose.msra.mxu0 %v2400
        %2404 = vmatprep.subr.bf16.mxu0 0
        %2405 = vmatpush1.bf16.xpose.msra.mxu0 0
        %2406 = vmatprep.subr.bf16.mxu0 0
        %2407 = vmatpush1.bf16.xpose.msra.mxu0 0
        %2408 = vmatprep.subr.bf16.mxu0 0
        %2409 = vmatpush1.bf16.xpose.msra.mxu0 0
        %2410 = vmatprep.subr.bf16.mxu0 0
        %2411 = vmatpush1.bf16.xpose.msra.mxu0 0
        %2412 = vmatprep.subr.bf16.mxu0 0
        %2413 = vmatpush1.bf16.xpose.msra.mxu0 0
        %2414 = vmatprep.subr.bf16.mxu0 0
        %2415 = vmatpush1.bf16.xpose.msra.mxu0 0
        %2416 = vmatprep.subr.bf16.mxu0 0
        %2417 = vmatpush1.bf16.xpose.msra.mxu0 0
        %2418 = vmatprep.subr.bf16.mxu0 0
        %2419 = vmatpush1.bf16.xpose.msra.mxu0 0
        %2420 = vmatprep.subr.bf16.mxu0 0
        %2421 = vmatpush1.bf16.xpose.msra.mxu0 0
        %2422 = vmatprep.subr.bf16.mxu0 0
        %2423 = vmatpush1.bf16.xpose.msra.mxu0 0
        %2424 = vmatprep.subr.bf16.mxu0 0
        %2425 = vmatpush1.bf16.xpose.msra.mxu0 0
        %2426 = vmatprep.subr.bf16.mxu0 0
        %2427 = vmatpush1.bf16.xpose.msra.mxu0 0
        %2428 = vmatprep.subr.bf16.mxu0 0
        %2429 = vmatpush1.bf16.xpose.msra.mxu0 0
        %2430 = vmatprep.subr.bf16.mxu0 0
        %2431 = vmatpush1.bf16.xpose.msra.mxu0 0
        %2432 = vmatprep.subr.bf16.mxu0 0
        %2433 = vmatpush1.bf16.xpose.msra.mxu0 0
        %2434 = vmatprep.mubr.bf16.mxu0 0
        %2435 = vmatmul.mubr.bf16.gmra.mrb[0].mxu0 %v2397
        %v2436 = vpop.f32.mrb[0].mxu0
        %v2437 = vadd.f32 0.0, %v2436
        %v2438 = vpop.f32.mrb[0].mxu0
        %v2439 = vpop.f32.mrb[0].mxu0
        %v2440 = vpop.f32.mrb[0].mxu0
        %2441 = vdwg.mxu0
        %v2442 = vmul.f32 %v2389, 0.17677669
        %v2443 = vmul.f32 %v2437, 0.17677669
        %v2444 = vsel %vm1556, %v2442, -inf
        %2445 = vmax.xlane.f32.xlu0 %v2444
        %v2446 = vpop.xlane.xlu0 %2445
        %v2447 = vsel %vm1556, %v2443, -inf
        %2448 = vmax.xlane.f32.xlu0 %v2447
        %v2449 = vpop.xlane.xlu0 %2448
        %v2450 = vsub.f32 %v2442, %v2446
        %v2451 = vsub.f32 %v2443, %v2449
        %v2452 = vmul.f32 %v2450, 1.442695
        %v2453 = vpow.pop %v2452
        %v2454 = vmul.f32 %v2451, 1.442695
        %v2455 = vpow.pop %v2454
        %v2456 = vsel %vm1556, %v2453, 0.0
        %2457 = vadd.xlane.f32.xlu0 %v2456
        %v2458 = vpop.xlane.xlu0 %2457
        %v2459 = vsel %vm1556, %v2455, 0.0
        %2460 = vadd.xlane.f32.xlu0 %v2459
        %v2461 = vpop.xlane.xlu0 %2460
        %v2462 = vrcp.pop %v2458
        %v2463 = vmul.f32 %v2453, %v2462
        %v2464 = vrcp.pop %v2461
        %v2465 = vmul.f32 %v2455, %v2464
        %v2466 = vpack.c.bf16 %v2463, %v2463
        %v2467 = vpack.c.bf16 %v2465, %v2465
        %v2468 = vrot.slane %v1459, 4
        %v2470 = vsel %vm1556, %v2466, 0
        %v2473 = vsel %vm1584, %v2468, 0
        %2475 = vmatprep.subr.bf16.mxu0 0
        %2476 = vmatpush1.bf16.msra.mxu0 %v2473
        %2477 = vmatprep.subr.bf16.mxu0 0
        %2478 = vmatpush1.bf16.msra.mxu0 0
        %2479 = vmatprep.subr.bf16.mxu0 0
        %2480 = vmatpush1.bf16.msra.mxu0 0
        %2481 = vmatprep.subr.bf16.mxu0 0
        %2482 = vmatpush1.bf16.msra.mxu0 0
        %2483 = vmatprep.subr.bf16.mxu0 0
        %2484 = vmatpush1.bf16.msra.mxu0 0
        %2485 = vmatprep.subr.bf16.mxu0 0
        %2486 = vmatpush1.bf16.msra.mxu0 0
        %2487 = vmatprep.subr.bf16.mxu0 0
        %2488 = vmatpush1.bf16.msra.mxu0 0
        %2489 = vmatprep.subr.bf16.mxu0 0
        %2490 = vmatpush1.bf16.msra.mxu0 0
        %2491 = vmatprep.subr.bf16.mxu0 0
        %2492 = vmatpush1.bf16.msra.mxu0 0
        %2493 = vmatprep.subr.bf16.mxu0 0
        %2494 = vmatpush1.bf16.msra.mxu0 0
        %2495 = vmatprep.subr.bf16.mxu0 0
        %2496 = vmatpush1.bf16.msra.mxu0 0
        %2497 = vmatprep.subr.bf16.mxu0 0
        %2498 = vmatpush1.bf16.msra.mxu0 0
        %2499 = vmatprep.subr.bf16.mxu0 0
        %2500 = vmatpush1.bf16.msra.mxu0 0
        %2501 = vmatprep.subr.bf16.mxu0 0
        %2502 = vmatpush1.bf16.msra.mxu0 0
        %2503 = vmatprep.subr.bf16.mxu0 0
        %2504 = vmatpush1.bf16.msra.mxu0 0
        %2505 = vmatprep.subr.bf16.mxu0 0
        %2506 = vmatpush1.bf16.msra.mxu0 0
        %2507 = vmatprep.mubr.bf16.mxu0 0
        %2508 = vmatmul.mubr.bf16.gmra.mrb[0].mxu0 %v2470
        %v2509 = vpop.f32.mrb[0].mxu0
        %v2510 = vadd.f32 0.0, %v2509
        %v2511 = vpop.f32.mrb[0].mxu0
        %v2512 = vpop.f32.mrb[0].mxu0
        %v2513 = vpop.f32.mrb[0].mxu0
        %2514 = vdwg.mxu0
        %v2515 = vrot.slane %v1460, 4
        %v2517 = vsel %vm1556, %v2467, 0
        %v2520 = vsel %vm1584, %v2515, 0
        %2522 = vmatprep.subr.bf16.mxu0 0
        %2523 = vmatpush1.bf16.msra.mxu0 %v2520
        %2524 = vmatprep.subr.bf16.mxu0 0
        %2525 = vmatpush1.bf16.msra.mxu0 0
        %2526 = vmatprep.subr.bf16.mxu0 0
        %2527 = vmatpush1.bf16.msra.mxu0 0
        %2528 = vmatprep.subr.bf16.mxu0 0
        %2529 = vmatpush1.bf16.msra.mxu0 0
        %2530 = vmatprep.subr.bf16.mxu0 0
        %2531 = vmatpush1.bf16.msra.mxu0 0
        %2532 = vmatprep.subr.bf16.mxu0 0
        %2533 = vmatpush1.bf16.msra.mxu0 0
        %2534 = vmatprep.subr.bf16.mxu0 0
        %2535 = vmatpush1.bf16.msra.mxu0 0
        %2536 = vmatprep.subr.bf16.mxu0 0
        %2537 = vmatpush1.bf16.msra.mxu0 0
        %2538 = vmatprep.subr.bf16.mxu0 0
        %2539 = vmatpush1.bf16.msra.mxu0 0
        %2540 = vmatprep.subr.bf16.mxu0 0
        %2541 = vmatpush1.bf16.msra.mxu0 0
        %2542 = vmatprep.subr.bf16.mxu0 0
        %2543 = vmatpush1.bf16.msra.mxu0 0
        %2544 = vmatprep.subr.bf16.mxu0 0
        %2545 = vmatpush1.bf16.msra.mxu0 0
        %2546 = vmatprep.subr.bf16.mxu0 0
        %2547 = vmatpush1.bf16.msra.mxu0 0
        %2548 = vmatprep.subr.bf16.mxu0 0
        %2549 = vmatpush1.bf16.msra.mxu0 0
        %2550 = vmatprep.subr.bf16.mxu0 0
        %2551 = vmatpush1.bf16.msra.mxu0 0
        %2552 = vmatprep.subr.bf16.mxu0 0
        %2553 = vmatpush1.bf16.msra.mxu0 0
        %2554 = vmatprep.mubr.bf16.mxu0 0
        %2555 = vmatmul.mubr.bf16.gmra.mrb[0].mxu0 %v2517
        %v2556 = vpop.f32.mrb[0].mxu0
        %v2557 = vadd.f32 0.0, %v2556
        %v2558 = vpop.f32.mrb[0].mxu0
        %v2559 = vpop.f32.mrb[0].mxu0
        %v2560 = vpop.f32.mrb[0].mxu0
        %2561 = vdwg.mxu0
        %2562 = vrot.lane.b32.xlu0 %v1439, 96
        %v2563 = vpop.permute.xlu0 %2562
        %v2564 = vrot.slane %v2563, 4
        %2565 = vrot.lane.b32.xlu0 %v1449, 96
        %v2566 = vpop.permute.xlu0 %2565
        %v2567 = vrot.slane %v2566, 4
        %v2569 = vsel %vm1461, %v2564, 0
        %v2572 = vsel %vm1461, %v2567, 0
        %2574 = vmatprep.subr.bf16.mxu0 0
        %2575 = vmatpush1.bf16.xpose.msra.mxu0 %v2572
        %2576 = vmatprep.subr.bf16.mxu0 0
        %2577 = vmatpush1.bf16.xpose.msra.mxu0 0
        %2578 = vmatprep.subr.bf16.mxu0 0
        %2579 = vmatpush1.bf16.xpose.msra.mxu0 0
        %2580 = vmatprep.subr.bf16.mxu0 0
        %2581 = vmatpush1.bf16.xpose.msra.mxu0 0
        %2582 = vmatprep.subr.bf16.mxu0 0
        %2583 = vmatpush1.bf16.xpose.msra.mxu0 0
        %2584 = vmatprep.subr.bf16.mxu0 0
        %2585 = vmatpush1.bf16.xpose.msra.mxu0 0
        %2586 = vmatprep.subr.bf16.mxu0 0
        %2587 = vmatpush1.bf16.xpose.msra.mxu0 0
        %2588 = vmatprep.subr.bf16.mxu0 0
        %2589 = vmatpush1.bf16.xpose.msra.mxu0 0
        %2590 = vmatprep.subr.bf16.mxu0 0
        %2591 = vmatpush1.bf16.xpose.msra.mxu0 0
        %2592 = vmatprep.subr.bf16.mxu0 0
        %2593 = vmatpush1.bf16.xpose.msra.mxu0 0
        %2594 = vmatprep.subr.bf16.mxu0 0
        %2595 = vmatpush1.bf16.xpose.msra.mxu0 0
        %2596 = vmatprep.subr.bf16.mxu0 0
        %2597 = vmatpush1.bf16.xpose.msra.mxu0 0
        %2598 = vmatprep.subr.bf16.mxu0 0
        %2599 = vmatpush1.bf16.xpose.msra.mxu0 0
        %2600 = vmatprep.subr.bf16.mxu0 0
        %2601 = vmatpush1.bf16.xpose.msra.mxu0 0
        %2602 = vmatprep.subr.bf16.mxu0 0
        %2603 = vmatpush1.bf16.xpose.msra.mxu0 0
        %2604 = vmatprep.subr.bf16.mxu0 0
        %2605 = vmatpush1.bf16.xpose.msra.mxu0 0
        %2606 = vmatprep.mubr.bf16.mxu0 0
        %2607 = vmatmul.mubr.bf16.gmra.mrb[0].mxu0 %v2569
        %v2608 = vpop.f32.mrb[0].mxu0
        %v2609 = vadd.f32 0.0, %v2608
        %v2610 = vpop.f32.mrb[0].mxu0
        %v2611 = vpop.f32.mrb[0].mxu0
        %v2612 = vpop.f32.mrb[0].mxu0
        %2613 = vdwg.mxu0
        %2614 = vrot.lane.b32.xlu0 %v1440, 96
        %v2615 = vpop.permute.xlu0 %2614
        %v2616 = vrot.slane %v2615, 4
        %2617 = vrot.lane.b32.xlu0 %v1450, 96
        %v2618 = vpop.permute.xlu0 %2617
        %v2619 = vrot.slane %v2618, 4
        %v2621 = vsel %vm1461, %v2616, 0
        %v2624 = vsel %vm1461, %v2619, 0
        %2626 = vmatprep.subr.bf16.mxu0 0
        %2627 = vmatpush1.bf16.xpose.msra.mxu0 %v2624
        %2628 = vmatprep.subr.bf16.mxu0 0
        %2629 = vmatpush1.bf16.xpose.msra.mxu0 0
        %2630 = vmatprep.subr.bf16.mxu0 0
        %2631 = vmatpush1.bf16.xpose.msra.mxu0 0
        %2632 = vmatprep.subr.bf16.mxu0 0
        %2633 = vmatpush1.bf16.xpose.msra.mxu0 0
        %2634 = vmatprep.subr.bf16.mxu0 0
        %2635 = vmatpush1.bf16.xpose.msra.mxu0 0
        %2636 = vmatprep.subr.bf16.mxu0 0
        %2637 = vmatpush1.bf16.xpose.msra.mxu0 0
        %2638 = vmatprep.subr.bf16.mxu0 0
        %2639 = vmatpush1.bf16.xpose.msra.mxu0 0
        %2640 = vmatprep.subr.bf16.mxu0 0
        %2641 = vmatpush1.bf16.xpose.msra.mxu0 0
        %2642 = vmatprep.subr.bf16.mxu0 0
        %2643 = vmatpush1.bf16.xpose.msra.mxu0 0
        %2644 = vmatprep.subr.bf16.mxu0 0
        %2645 = vmatpush1.bf16.xpose.msra.mxu0 0
        %2646 = vmatprep.subr.bf16.mxu0 0
        %2647 = vmatpush1.bf16.xpose.msra.mxu0 0
        %2648 = vmatprep.subr.bf16.mxu0 0
        %2649 = vmatpush1.bf16.xpose.msra.mxu0 0
        %2650 = vmatprep.subr.bf16.mxu0 0
        %2651 = vmatpush1.bf16.xpose.msra.mxu0 0
        %2652 = vmatprep.subr.bf16.mxu0 0
        %2653 = vmatpush1.bf16.xpose.msra.mxu0 0
        %2654 = vmatprep.subr.bf16.mxu0 0
        %2655 = vmatpush1.bf16.xpose.msra.mxu0 0
        %2656 = vmatprep.subr.bf16.mxu0 0
        %2657 = vmatpush1.bf16.xpose.msra.mxu0 0
        %2658 = vmatprep.mubr.bf16.mxu0 0
        %2659 = vmatmul.mubr.bf16.gmra.mrb[0].mxu0 %v2621
        %v2660 = vpop.f32.mrb[0].mxu0
        %v2661 = vadd.f32 0.0, %v2660
        %v2662 = vpop.f32.mrb[0].mxu0
        %v2663 = vpop.f32.mrb[0].mxu0
        %v2664 = vpop.f32.mrb[0].mxu0
        %2665 = vdwg.mxu0
        %v2666 = vmul.f32 %v2609, 0.17677669
        %v2667 = vmul.f32 %v2661, 0.17677669
        %v2668 = vsel %vm1556, %v2666, -inf
        %2669 = vmax.xlane.f32.xlu0 %v2668
        %v2670 = vpop.xlane.xlu0 %2669
        %v2671 = vsel %vm1556, %v2667, -inf
        %2672 = vmax.xlane.f32.xlu0 %v2671
        %v2673 = vpop.xlane.xlu0 %2672
        %v2674 = vsub.f32 %v2666, %v2670
        %v2675 = vsub.f32 %v2667, %v2673
        %v2676 = vmul.f32 %v2674, 1.442695
        %v2677 = vpow.pop %v2676
        %v2678 = vmul.f32 %v2675, 1.442695
        %v2679 = vpow.pop %v2678
        %v2680 = vsel %vm1556, %v2677, 0.0
        %2681 = vadd.xlane.f32.xlu0 %v2680
        %v2682 = vpop.xlane.xlu0 %2681
        %v2683 = vsel %vm1556, %v2679, 0.0
        %2684 = vadd.xlane.f32.xlu0 %v2683
        %v2685 = vpop.xlane.xlu0 %2684
        %v2686 = vrcp.pop %v2682
        %v2687 = vmul.f32 %v2677, %v2686
        %v2688 = vrcp.pop %v2685
        %v2689 = vmul.f32 %v2679, %v2688
        %v2690 = vpack.c.bf16 %v2687, %v2687
        %v2691 = vpack.c.bf16 %v2689, %v2689
        %2692 = vrot.lane.b32.xlu0 %v1459, 96
        %v2693 = vpop.permute.xlu0 %2692
        %v2694 = vrot.slane %v2693, 4
        %v2696 = vsel %vm1556, %v2690, 0
        %v2699 = vsel %vm1584, %v2694, 0
        %2701 = vmatprep.subr.bf16.mxu0 0
        %2702 = vmatpush1.bf16.msra.mxu0 %v2699
        %2703 = vmatprep.subr.bf16.mxu0 0
        %2704 = vmatpush1.bf16.msra.mxu0 0
        %2705 = vmatprep.subr.bf16.mxu0 0
        %2706 = vmatpush1.bf16.msra.mxu0 0
        %2707 = vmatprep.subr.bf16.mxu0 0
        %2708 = vmatpush1.bf16.msra.mxu0 0
        %2709 = vmatprep.subr.bf16.mxu0 0
        %2710 = vmatpush1.bf16.msra.mxu0 0
        %2711 = vmatprep.subr.bf16.mxu0 0
        %2712 = vmatpush1.bf16.msra.mxu0 0
        %2713 = vmatprep.subr.bf16.mxu0 0
        %2714 = vmatpush1.bf16.msra.mxu0 0
        %2715 = vmatprep.subr.bf16.mxu0 0
        %2716 = vmatpush1.bf16.msra.mxu0 0
        %2717 = vmatprep.subr.bf16.mxu0 0
        %2718 = vmatpush1.bf16.msra.mxu0 0
        %2719 = vmatprep.subr.bf16.mxu0 0
        %2720 = vmatpush1.bf16.msra.mxu0 0
        %2721 = vmatprep.subr.bf16.mxu0 0
        %2722 = vmatpush1.bf16.msra.mxu0 0
        %2723 = vmatprep.subr.bf16.mxu0 0
        %2724 = vmatpush1.bf16.msra.mxu0 0
        %2725 = vmatprep.subr.bf16.mxu0 0
        %2726 = vmatpush1.bf16.msra.mxu0 0
        %2727 = vmatprep.subr.bf16.mxu0 0
        %2728 = vmatpush1.bf16.msra.mxu0 0
        %2729 = vmatprep.subr.bf16.mxu0 0
        %2730 = vmatpush1.bf16.msra.mxu0 0
        %2731 = vmatprep.subr.bf16.mxu0 0
        %2732 = vmatpush1.bf16.msra.mxu0 0
        %2733 = vmatprep.mubr.bf16.mxu0 0
        %2734 = vmatmul.mubr.bf16.gmra.mrb[0].mxu0 %v2696
        %v2735 = vpop.f32.mrb[0].mxu0
        %v2736 = vadd.f32 0.0, %v2735
        %v2737 = vpop.f32.mrb[0].mxu0
        %v2738 = vpop.f32.mrb[0].mxu0
        %v2739 = vpop.f32.mrb[0].mxu0
        %2740 = vdwg.mxu0
        %2741 = vrot.lane.b32.xlu0 %v1460, 96
        %v2742 = vpop.permute.xlu0 %2741
        %v2743 = vrot.slane %v2742, 4
        %v2745 = vsel %vm1556, %v2691, 0
        %v2748 = vsel %vm1584, %v2743, 0
        %2750 = vmatprep.subr.bf16.mxu0 0
        %2751 = vmatpush1.bf16.msra.mxu0 %v2748
        %2752 = vmatprep.subr.bf16.mxu0 0
        %2753 = vmatpush1.bf16.msra.mxu0 0
        %2754 = vmatprep.subr.bf16.mxu0 0
        %2755 = vmatpush1.bf16.msra.mxu0 0
        %2756 = vmatprep.subr.bf16.mxu0 0
        %2757 = vmatpush1.bf16.msra.mxu0 0
        %2758 = vmatprep.subr.bf16.mxu0 0
        %2759 = vmatpush1.bf16.msra.mxu0 0
        %2760 = vmatprep.subr.bf16.mxu0 0
        %2761 = vmatpush1.bf16.msra.mxu0 0
        %2762 = vmatprep.subr.bf16.mxu0 0
        %2763 = vmatpush1.bf16.msra.mxu0 0
        %2764 = vmatprep.subr.bf16.mxu0 0
        %2765 = vmatpush1.bf16.msra.mxu0 0
        %2766 = vmatprep.subr.bf16.mxu0 0
        %2767 = vmatpush1.bf16.msra.mxu0 0
        %2768 = vmatprep.subr.bf16.mxu0 0
        %2769 = vmatpush1.bf16.msra.mxu0 0
        %2770 = vmatprep.subr.bf16.mxu0 0
        %2771 = vmatpush1.bf16.msra.mxu0 0
        %2772 = vmatprep.subr.bf16.mxu0 0
        %2773 = vmatpush1.bf16.msra.mxu0 0
        %2774 = vmatprep.subr.bf16.mxu0 0
        %2775 = vmatpush1.bf16.msra.mxu0 0
        %2776 = vmatprep.subr.bf16.mxu0 0
        %2777 = vmatpush1.bf16.msra.mxu0 0
        %2778 = vmatprep.subr.bf16.mxu0 0
        %2779 = vmatpush1.bf16.msra.mxu0 0
        %2780 = vmatprep.subr.bf16.mxu0 0
        %2781 = vmatpush1.bf16.msra.mxu0 0
        %2782 = vmatprep.mubr.bf16.mxu0 0
        %2783 = vmatmul.mubr.bf16.gmra.mrb[0].mxu0 %v2745
        %v2784 = vpop.f32.mrb[0].mxu0
        %v2785 = vadd.f32 0.0, %v2784
        %v2786 = vpop.f32.mrb[0].mxu0
        %v2787 = vpop.f32.mrb[0].mxu0
        %v2788 = vpop.f32.mrb[0].mxu0
        %2789 = vdwg.mxu0
        %2790 = vrot.lane.b32.xlu0 %v1439, 64
        %v2791 = vpop.permute.xlu0 %2790
        %v2792 = vrot.slane %v2791, 4
        %2793 = vrot.lane.b32.xlu0 %v1449, 64
        %v2794 = vpop.permute.xlu0 %2793
        %v2795 = vrot.slane %v2794, 4
        %v2797 = vsel %vm1461, %v2792, 0
        %v2800 = vsel %vm1461, %v2795, 0
        %2802 = vmatprep.subr.bf16.mxu0 0
        %2803 = vmatpush1.bf16.xpose.msra.mxu0 %v2800
        %2804 = vmatprep.subr.bf16.mxu0 0
        %2805 = vmatpush1.bf16.xpose.msra.mxu0 0
        %2806 = vmatprep.subr.bf16.mxu0 0
        %2807 = vmatpush1.bf16.xpose.msra.mxu0 0
        %2808 = vmatprep.subr.bf16.mxu0 0
        %2809 = vmatpush1.bf16.xpose.msra.mxu0 0
        %2810 = vmatprep.subr.bf16.mxu0 0
        %2811 = vmatpush1.bf16.xpose.msra.mxu0 0
        %2812 = vmatprep.subr.bf16.mxu0 0
        %2813 = vmatpush1.bf16.xpose.msra.mxu0 0
        %2814 = vmatprep.subr.bf16.mxu0 0
        %2815 = vmatpush1.bf16.xpose.msra.mxu0 0
        %2816 = vmatprep.subr.bf16.mxu0 0
        %2817 = vmatpush1.bf16.xpose.msra.mxu0 0
        %2818 = vmatprep.subr.bf16.mxu0 0
        %2819 = vmatpush1.bf16.xpose.msra.mxu0 0
        %2820 = vmatprep.subr.bf16.mxu0 0
        %2821 = vmatpush1.bf16.xpose.msra.mxu0 0
        %2822 = vmatprep.subr.bf16.mxu0 0
        %2823 = vmatpush1.bf16.xpose.msra.mxu0 0
        %2824 = vmatprep.subr.bf16.mxu0 0
        %2825 = vmatpush1.bf16.xpose.msra.mxu0 0
        %2826 = vmatprep.subr.bf16.mxu0 0
        %2827 = vmatpush1.bf16.xpose.msra.mxu0 0
        %2828 = vmatprep.subr.bf16.mxu0 0
        %2829 = vmatpush1.bf16.xpose.msra.mxu0 0
        %2830 = vmatprep.subr.bf16.mxu0 0
        %2831 = vmatpush1.bf16.xpose.msra.mxu0 0
        %2832 = vmatprep.subr.bf16.mxu0 0
        %2833 = vmatpush1.bf16.xpose.msra.mxu0 0
        %2834 = vmatprep.mubr.bf16.mxu0 0
        %2835 = vmatmul.mubr.bf16.gmra.mrb[0].mxu0 %v2797
        %v2836 = vpop.f32.mrb[0].mxu0
        %v2837 = vadd.f32 0.0, %v2836
        %v2838 = vpop.f32.mrb[0].mxu0
        %v2839 = vpop.f32.mrb[0].mxu0
        %v2840 = vpop.f32.mrb[0].mxu0
        %2841 = vdwg.mxu0
        %2842 = vrot.lane.b32.xlu0 %v1440, 64
        %v2843 = vpop.permute.xlu0 %2842
        %v2844 = vrot.slane %v2843, 4
        %2845 = vrot.lane.b32.xlu0 %v1450, 64
        %v2846 = vpop.permute.xlu0 %2845
        %v2847 = vrot.slane %v2846, 4
        %v2849 = vsel %vm1461, %v2844, 0
        %v2852 = vsel %vm1461, %v2847, 0
        %2854 = vmatprep.subr.bf16.mxu0 0
        %2855 = vmatpush1.bf16.xpose.msra.mxu0 %v2852
        %2856 = vmatprep.subr.bf16.mxu0 0
        %2857 = vmatpush1.bf16.xpose.msra.mxu0 0
        %2858 = vmatprep.subr.bf16.mxu0 0
        %2859 = vmatpush1.bf16.xpose.msra.mxu0 0
        %2860 = vmatprep.subr.bf16.mxu0 0
        %2861 = vmatpush1.bf16.xpose.msra.mxu0 0
        %2862 = vmatprep.subr.bf16.mxu0 0
        %2863 = vmatpush1.bf16.xpose.msra.mxu0 0
        %2864 = vmatprep.subr.bf16.mxu0 0
        %2865 = vmatpush1.bf16.xpose.msra.mxu0 0
        %2866 = vmatprep.subr.bf16.mxu0 0
        %2867 = vmatpush1.bf16.xpose.msra.mxu0 0
        %2868 = vmatprep.subr.bf16.mxu0 0
        %2869 = vmatpush1.bf16.xpose.msra.mxu0 0
        %2870 = vmatprep.subr.bf16.mxu0 0
        %2871 = vmatpush1.bf16.xpose.msra.mxu0 0
        %2872 = vmatprep.subr.bf16.mxu0 0
        %2873 = vmatpush1.bf16.xpose.msra.mxu0 0
        %2874 = vmatprep.subr.bf16.mxu0 0
        %2875 = vmatpush1.bf16.xpose.msra.mxu0 0
        %2876 = vmatprep.subr.bf16.mxu0 0
        %2877 = vmatpush1.bf16.xpose.msra.mxu0 0
        %2878 = vmatprep.subr.bf16.mxu0 0
        %2879 = vmatpush1.bf16.xpose.msra.mxu0 0
        %2880 = vmatprep.subr.bf16.mxu0 0
        %2881 = vmatpush1.bf16.xpose.msra.mxu0 0
        %2882 = vmatprep.subr.bf16.mxu0 0
        %2883 = vmatpush1.bf16.xpose.msra.mxu0 0
        %2884 = vmatprep.subr.bf16.mxu0 0
        %2885 = vmatpush1.bf16.xpose.msra.mxu0 0
        %2886 = vmatprep.mubr.bf16.mxu0 0
        %2887 = vmatmul.mubr.bf16.gmra.mrb[0].mxu0 %v2849
        %v2888 = vpop.f32.mrb[0].mxu0
        %v2889 = vadd.f32 0.0, %v2888
        %v2890 = vpop.f32.mrb[0].mxu0
        %v2891 = vpop.f32.mrb[0].mxu0
        %v2892 = vpop.f32.mrb[0].mxu0
        %2893 = vdwg.mxu0
        %v2894 = vmul.f32 %v2837, 0.17677669
        %v2895 = vmul.f32 %v2889, 0.17677669
        %v2896 = vsel %vm1556, %v2894, -inf
        %2897 = vmax.xlane.f32.xlu0 %v2896
        %v2898 = vpop.xlane.xlu0 %2897
        %v2899 = vsel %vm1556, %v2895, -inf
        %2900 = vmax.xlane.f32.xlu0 %v2899
        %v2901 = vpop.xlane.xlu0 %2900
        %v2902 = vsub.f32 %v2894, %v2898
        %v2903 = vsub.f32 %v2895, %v2901
        %v2904 = vmul.f32 %v2902, 1.442695
        %v2905 = vpow.pop %v2904
        %v2906 = vmul.f32 %v2903, 1.442695
        %v2907 = vpow.pop %v2906
        %v2908 = vsel %vm1556, %v2905, 0.0
        %2909 = vadd.xlane.f32.xlu0 %v2908
        %v2910 = vpop.xlane.xlu0 %2909
        %v2911 = vsel %vm1556, %v2907, 0.0
        %2912 = vadd.xlane.f32.xlu0 %v2911
        %v2913 = vpop.xlane.xlu0 %2912
        %v2914 = vrcp.pop %v2910
        %v2915 = vmul.f32 %v2905, %v2914
        %v2916 = vrcp.pop %v2913
        %v2917 = vmul.f32 %v2907, %v2916
        %v2918 = vpack.c.bf16 %v2915, %v2915
        %v2919 = vpack.c.bf16 %v2917, %v2917
        %2920 = vrot.lane.b32.xlu0 %v1459, 64
        %v2921 = vpop.permute.xlu0 %2920
        %v2922 = vrot.slane %v2921, 4
        %v2924 = vsel %vm1556, %v2918, 0
        %v2927 = vsel %vm1584, %v2922, 0
        %2929 = vmatprep.subr.bf16.mxu0 0
        %2930 = vmatpush1.bf16.msra.mxu0 %v2927
        %2931 = vmatprep.subr.bf16.mxu0 0
        %2932 = vmatpush1.bf16.msra.mxu0 0
        %2933 = vmatprep.subr.bf16.mxu0 0
        %2934 = vmatpush1.bf16.msra.mxu0 0
        %2935 = vmatprep.subr.bf16.mxu0 0
        %2936 = vmatpush1.bf16.msra.mxu0 0
        %2937 = vmatprep.subr.bf16.mxu0 0
        %2938 = vmatpush1.bf16.msra.mxu0 0
        %2939 = vmatprep.subr.bf16.mxu0 0
        %2940 = vmatpush1.bf16.msra.mxu0 0
        %2941 = vmatprep.subr.bf16.mxu0 0
        %2942 = vmatpush1.bf16.msra.mxu0 0
        %2943 = vmatprep.subr.bf16.mxu0 0
        %2944 = vmatpush1.bf16.msra.mxu0 0
        %2945 = vmatprep.subr.bf16.mxu0 0
        %2946 = vmatpush1.bf16.msra.mxu0 0
        %2947 = vmatprep.subr.bf16.mxu0 0
        %2948 = vmatpush1.bf16.msra.mxu0 0
        %2949 = vmatprep.subr.bf16.mxu0 0
        %2950 = vmatpush1.bf16.msra.mxu0 0
        %2951 = vmatprep.subr.bf16.mxu0 0
        %2952 = vmatpush1.bf16.msra.mxu0 0
        %2953 = vmatprep.subr.bf16.mxu0 0
        %2954 = vmatpush1.bf16.msra.mxu0 0
        %2955 = vmatprep.subr.bf16.mxu0 0
        %2956 = vmatpush1.bf16.msra.mxu0 0
        %2957 = vmatprep.subr.bf16.mxu0 0
        %2958 = vmatpush1.bf16.msra.mxu0 0
        %2959 = vmatprep.subr.bf16.mxu0 0
        %2960 = vmatpush1.bf16.msra.mxu0 0
        %2961 = vmatprep.mubr.bf16.mxu0 0
        %2962 = vmatmul.mubr.bf16.gmra.mrb[0].mxu0 %v2924
        %v2963 = vpop.f32.mrb[0].mxu0
        %v2964 = vadd.f32 0.0, %v2963
        %v2965 = vpop.f32.mrb[0].mxu0
        %v2966 = vpop.f32.mrb[0].mxu0
        %v2967 = vpop.f32.mrb[0].mxu0
        %2968 = vdwg.mxu0
        %2969 = vrot.lane.b32.xlu0 %v1460, 64
        %v2970 = vpop.permute.xlu0 %2969
        %v2971 = vrot.slane %v2970, 4
        %v2973 = vsel %vm1556, %v2919, 0
        %v2976 = vsel %vm1584, %v2971, 0
        %2978 = vmatprep.subr.bf16.mxu0 0
        %2979 = vmatpush1.bf16.msra.mxu0 %v2976
        %2980 = vmatprep.subr.bf16.mxu0 0
        %2981 = vmatpush1.bf16.msra.mxu0 0
        %2982 = vmatprep.subr.bf16.mxu0 0
        %2983 = vmatpush1.bf16.msra.mxu0 0
        %2984 = vmatprep.subr.bf16.mxu0 0
        %2985 = vmatpush1.bf16.msra.mxu0 0
        %2986 = vmatprep.subr.bf16.mxu0 0
        %2987 = vmatpush1.bf16.msra.mxu0 0
        %2988 = vmatprep.subr.bf16.mxu0 0
        %2989 = vmatpush1.bf16.msra.mxu0 0
        %2990 = vmatprep.subr.bf16.mxu0 0
        %2991 = vmatpush1.bf16.msra.mxu0 0
        %2992 = vmatprep.subr.bf16.mxu0 0
        %2993 = vmatpush1.bf16.msra.mxu0 0
        %2994 = vmatprep.subr.bf16.mxu0 0
        %2995 = vmatpush1.bf16.msra.mxu0 0
        %2996 = vmatprep.subr.bf16.mxu0 0
        %2997 = vmatpush1.bf16.msra.mxu0 0
        %2998 = vmatprep.subr.bf16.mxu0 0
        %2999 = vmatpush1.bf16.msra.mxu0 0
        %3000 = vmatprep.subr.bf16.mxu0 0
        %3001 = vmatpush1.bf16.msra.mxu0 0
        %3002 = vmatprep.subr.bf16.mxu0 0
        %3003 = vmatpush1.bf16.msra.mxu0 0
        %3004 = vmatprep.subr.bf16.mxu0 0
        %3005 = vmatpush1.bf16.msra.mxu0 0
        %3006 = vmatprep.subr.bf16.mxu0 0
        %3007 = vmatpush1.bf16.msra.mxu0 0
        %3008 = vmatprep.subr.bf16.mxu0 0
        %3009 = vmatpush1.bf16.msra.mxu0 0
        %3010 = vmatprep.mubr.bf16.mxu0 0
        %3011 = vmatmul.mubr.bf16.gmra.mrb[0].mxu0 %v2973
        %v3012 = vpop.f32.mrb[0].mxu0
        %v3013 = vadd.f32 0.0, %v3012
        %v3014 = vpop.f32.mrb[0].mxu0
        %v3015 = vpop.f32.mrb[0].mxu0
        %v3016 = vpop.f32.mrb[0].mxu0
        %3017 = vdwg.mxu0
        %3018 = vrot.lane.b32.xlu0 %v1439, 32
        %v3019 = vpop.permute.xlu0 %3018
        %v3020 = vrot.slane %v3019, 4
        %3021 = vrot.lane.b32.xlu0 %v1449, 32
        %v3022 = vpop.permute.xlu0 %3021
        %v3023 = vrot.slane %v3022, 4
        %v3025 = vsel %vm1461, %v3020, 0
        %v3028 = vsel %vm1461, %v3023, 0
        %3030 = vmatprep.subr.bf16.mxu0 0
        %3031 = vmatpush1.bf16.xpose.msra.mxu0 %v3028
        %3032 = vmatprep.subr.bf16.mxu0 0
        %3033 = vmatpush1.bf16.xpose.msra.mxu0 0
        %3034 = vmatprep.subr.bf16.mxu0 0
        %3035 = vmatpush1.bf16.xpose.msra.mxu0 0
        %3036 = vmatprep.subr.bf16.mxu0 0
        %3037 = vmatpush1.bf16.xpose.msra.mxu0 0
        %3038 = vmatprep.subr.bf16.mxu0 0
        %3039 = vmatpush1.bf16.xpose.msra.mxu0 0
        %3040 = vmatprep.subr.bf16.mxu0 0
        %3041 = vmatpush1.bf16.xpose.msra.mxu0 0
        %3042 = vmatprep.subr.bf16.mxu0 0
        %3043 = vmatpush1.bf16.xpose.msra.mxu0 0
        %3044 = vmatprep.subr.bf16.mxu0 0
        %3045 = vmatpush1.bf16.xpose.msra.mxu0 0
        %3046 = vmatprep.subr.bf16.mxu0 0
        %3047 = vmatpush1.bf16.xpose.msra.mxu0 0
        %3048 = vmatprep.subr.bf16.mxu0 0
        %3049 = vmatpush1.bf16.xpose.msra.mxu0 0
        %3050 = vmatprep.subr.bf16.mxu0 0
        %3051 = vmatpush1.bf16.xpose.msra.mxu0 0
        %3052 = vmatprep.subr.bf16.mxu0 0
        %3053 = vmatpush1.bf16.xpose.msra.mxu0 0
        %3054 = vmatprep.subr.bf16.mxu0 0
        %3055 = vmatpush1.bf16.xpose.msra.mxu0 0
        %3056 = vmatprep.subr.bf16.mxu0 0
        %3057 = vmatpush1.bf16.xpose.msra.mxu0 0
        %3058 = vmatprep.subr.bf16.mxu0 0
        %3059 = vmatpush1.bf16.xpose.msra.mxu0 0
        %3060 = vmatprep.subr.bf16.mxu0 0
        %3061 = vmatpush1.bf16.xpose.msra.mxu0 0
        %3062 = vmatprep.mubr.bf16.mxu0 0
        %3063 = vmatmul.mubr.bf16.gmra.mrb[0].mxu0 %v3025
        %v3064 = vpop.f32.mrb[0].mxu0
        %v3065 = vadd.f32 0.0, %v3064
        %v3066 = vpop.f32.mrb[0].mxu0
        %v3067 = vpop.f32.mrb[0].mxu0
        %v3068 = vpop.f32.mrb[0].mxu0
        %3069 = vdwg.mxu0
        %3070 = vrot.lane.b32.xlu0 %v1440, 32
        %v3071 = vpop.permute.xlu0 %3070
        %v3072 = vrot.slane %v3071, 4
        %3073 = vrot.lane.b32.xlu0 %v1450, 32
        %v3074 = vpop.permute.xlu0 %3073
        %v3075 = vrot.slane %v3074, 4
        %v3077 = vsel %vm1461, %v3072, 0
        %v3080 = vsel %vm1461, %v3075, 0
        %3082 = vmatprep.subr.bf16.mxu0 0
        %3083 = vmatpush1.bf16.xpose.msra.mxu0 %v3080
        %3084 = vmatprep.subr.bf16.mxu0 0
        %3085 = vmatpush1.bf16.xpose.msra.mxu0 0
        %3086 = vmatprep.subr.bf16.mxu0 0
        %3087 = vmatpush1.bf16.xpose.msra.mxu0 0
        %3088 = vmatprep.subr.bf16.mxu0 0
        %3089 = vmatpush1.bf16.xpose.msra.mxu0 0
        %3090 = vmatprep.subr.bf16.mxu0 0
        %3091 = vmatpush1.bf16.xpose.msra.mxu0 0
        %3092 = vmatprep.subr.bf16.mxu0 0
        %3093 = vmatpush1.bf16.xpose.msra.mxu0 0
        %3094 = vmatprep.subr.bf16.mxu0 0
        %3095 = vmatpush1.bf16.xpose.msra.mxu0 0
        %3096 = vmatprep.subr.bf16.mxu0 0
        %3097 = vmatpush1.bf16.xpose.msra.mxu0 0
        %3098 = vmatprep.subr.bf16.mxu0 0
        %3099 = vmatpush1.bf16.xpose.msra.mxu0 0
        %3100 = vmatprep.subr.bf16.mxu0 0
        %3101 = vmatpush1.bf16.xpose.msra.mxu0 0
        %3102 = vmatprep.subr.bf16.mxu0 0
        %3103 = vmatpush1.bf16.xpose.msra.mxu0 0
        %3104 = vmatprep.subr.bf16.mxu0 0
        %3105 = vmatpush1.bf16.xpose.msra.mxu0 0
        %3106 = vmatprep.subr.bf16.mxu0 0
        %3107 = vmatpush1.bf16.xpose.msra.mxu0 0
        %3108 = vmatprep.subr.bf16.mxu0 0
        %3109 = vmatpush1.bf16.xpose.msra.mxu0 0
        %3110 = vmatprep.subr.bf16.mxu0 0
        %3111 = vmatpush1.bf16.xpose.msra.mxu0 0
        %3112 = vmatprep.subr.bf16.mxu0 0
        %3113 = vmatpush1.bf16.xpose.msra.mxu0 0
        %3114 = vmatprep.mubr.bf16.mxu0 0
        %3115 = vmatmul.mubr.bf16.gmra.mrb[0].mxu0 %v3077
        %v3116 = vpop.f32.mrb[0].mxu0
        %v3117 = vadd.f32 0.0, %v3116
        %v3118 = vpop.f32.mrb[0].mxu0
        %v3119 = vpop.f32.mrb[0].mxu0
        %v3120 = vpop.f32.mrb[0].mxu0
        %3121 = vdwg.mxu0
        %v3122 = vmul.f32 %v3065, 0.17677669
        %v3123 = vmul.f32 %v3117, 0.17677669
        %v3124 = vsel %vm1556, %v3122, -inf
        %3125 = vmax.xlane.f32.xlu0 %v3124
        %v3126 = vpop.xlane.xlu0 %3125
        %v3127 = vsel %vm1556, %v3123, -inf
        %3128 = vmax.xlane.f32.xlu0 %v3127
        %v3129 = vpop.xlane.xlu0 %3128
        %v3130 = vsub.f32 %v3122, %v3126
        %v3131 = vsub.f32 %v3123, %v3129
        %v3132 = vmul.f32 %v3130, 1.442695
        %v3133 = vpow.pop %v3132
        %v3134 = vmul.f32 %v3131, 1.442695
        %v3135 = vpow.pop %v3134
        %v3136 = vsel %vm1556, %v3133, 0.0
        %3137 = vadd.xlane.f32.xlu0 %v3136
        %v3138 = vpop.xlane.xlu0 %3137
        %v3139 = vsel %vm1556, %v3135, 0.0
        %3140 = vadd.xlane.f32.xlu0 %v3139
        %v3141 = vpop.xlane.xlu0 %3140
        %v3142 = vrcp.pop %v3138
        %v3143 = vmul.f32 %v3133, %v3142
        %v3144 = vrcp.pop %v3141
        %v3145 = vmul.f32 %v3135, %v3144
        %v3146 = vpack.c.bf16 %v3143, %v3143
        %v3147 = vpack.c.bf16 %v3145, %v3145
        %3148 = vrot.lane.b32.xlu0 %v1459, 32
        %v3149 = vpop.permute.xlu0 %3148
        %v3150 = vrot.slane %v3149, 4
        %v3152 = vsel %vm1556, %v3146, 0
        %v3155 = vsel %vm1584, %v3150, 0
        %3157 = vmatprep.subr.bf16.mxu0 0
        %3158 = vmatpush1.bf16.msra.mxu0 %v3155
        %3159 = vmatprep.subr.bf16.mxu0 0
        %3160 = vmatpush1.bf16.msra.mxu0 0
        %3161 = vmatprep.subr.bf16.mxu0 0
        %3162 = vmatpush1.bf16.msra.mxu0 0
        %3163 = vmatprep.subr.bf16.mxu0 0
        %3164 = vmatpush1.bf16.msra.mxu0 0
        %3165 = vmatprep.subr.bf16.mxu0 0
        %3166 = vmatpush1.bf16.msra.mxu0 0
        %3167 = vmatprep.subr.bf16.mxu0 0
        %3168 = vmatpush1.bf16.msra.mxu0 0
        %3169 = vmatprep.subr.bf16.mxu0 0
        %3170 = vmatpush1.bf16.msra.mxu0 0
        %3171 = vmatprep.subr.bf16.mxu0 0
        %3172 = vmatpush1.bf16.msra.mxu0 0
        %3173 = vmatprep.subr.bf16.mxu0 0
        %3174 = vmatpush1.bf16.msra.mxu0 0
        %3175 = vmatprep.subr.bf16.mxu0 0
        %3176 = vmatpush1.bf16.msra.mxu0 0
        %3177 = vmatprep.subr.bf16.mxu0 0
        %3178 = vmatpush1.bf16.msra.mxu0 0
        %3179 = vmatprep.subr.bf16.mxu0 0
        %3180 = vmatpush1.bf16.msra.mxu0 0
        %3181 = vmatprep.subr.bf16.mxu0 0
        %3182 = vmatpush1.bf16.msra.mxu0 0
        %3183 = vmatprep.subr.bf16.mxu0 0
        %3184 = vmatpush1.bf16.msra.mxu0 0
        %3185 = vmatprep.subr.bf16.mxu0 0
        %3186 = vmatpush1.bf16.msra.mxu0 0
        %3187 = vmatprep.subr.bf16.mxu0 0
        %3188 = vmatpush1.bf16.msra.mxu0 0
        %3189 = vmatprep.mubr.bf16.mxu0 0
        %3190 = vmatmul.mubr.bf16.gmra.mrb[0].mxu0 %v3152
        %v3191 = vpop.f32.mrb[0].mxu0
        %v3192 = vadd.f32 0.0, %v3191
        %v3193 = vpop.f32.mrb[0].mxu0
        %v3194 = vpop.f32.mrb[0].mxu0
        %v3195 = vpop.f32.mrb[0].mxu0
        %3196 = vdwg.mxu0
        %3197 = vrot.lane.b32.xlu0 %v1460, 32
        %v3198 = vpop.permute.xlu0 %3197
        %v3199 = vrot.slane %v3198, 4
        %v3201 = vsel %vm1556, %v3147, 0
        %v3204 = vsel %vm1584, %v3199, 0
        %3206 = vmatprep.subr.bf16.mxu0 0
        %3207 = vmatpush1.bf16.msra.mxu0 %v3204
        %3208 = vmatprep.subr.bf16.mxu0 0
        %3209 = vmatpush1.bf16.msra.mxu0 0
        %3210 = vmatprep.subr.bf16.mxu0 0
        %3211 = vmatpush1.bf16.msra.mxu0 0
        %3212 = vmatprep.subr.bf16.mxu0 0
        %3213 = vmatpush1.bf16.msra.mxu0 0
        %3214 = vmatprep.subr.bf16.mxu0 0
        %3215 = vmatpush1.bf16.msra.mxu0 0
        %3216 = vmatprep.subr.bf16.mxu0 0
        %3217 = vmatpush1.bf16.msra.mxu0 0
        %3218 = vmatprep.subr.bf16.mxu0 0
        %3219 = vmatpush1.bf16.msra.mxu0 0
        %3220 = vmatprep.subr.bf16.mxu0 0
        %3221 = vmatpush1.bf16.msra.mxu0 0
        %3222 = vmatprep.subr.bf16.mxu0 0
        %3223 = vmatpush1.bf16.msra.mxu0 0
        %3224 = vmatprep.subr.bf16.mxu0 0
        %3225 = vmatpush1.bf16.msra.mxu0 0
        %3226 = vmatprep.subr.bf16.mxu0 0
        %3227 = vmatpush1.bf16.msra.mxu0 0
        %3228 = vmatprep.subr.bf16.mxu0 0
        %3229 = vmatpush1.bf16.msra.mxu0 0
        %3230 = vmatprep.subr.bf16.mxu0 0
        %3231 = vmatpush1.bf16.msra.mxu0 0
        %3232 = vmatprep.subr.bf16.mxu0 0
        %3233 = vmatpush1.bf16.msra.mxu0 0
        %3234 = vmatprep.subr.bf16.mxu0 0
        %3235 = vmatpush1.bf16.msra.mxu0 0
        %3236 = vmatprep.subr.bf16.mxu0 0
        %3237 = vmatpush1.bf16.msra.mxu0 0
        %3238 = vmatprep.mubr.bf16.mxu0 0
        %3239 = vmatmul.mubr.bf16.gmra.mrb[0].mxu0 %v3201
        %v3240 = vpop.f32.mrb[0].mxu0
        %v3241 = vadd.f32 0.0, %v3240
        %v3242 = vpop.f32.mrb[0].mxu0
        %v3243 = vpop.f32.mrb[0].mxu0
        %v3244 = vpop.f32.mrb[0].mxu0
        %3245 = vdwg.mxu0
        %3248 = vrot.lane.b32.xlu0 %v1848, 32
        %v3249 = vpop.permute.xlu0 %3248
        %3250 = vrot.lane.b32.xlu0 %v1897, 32
        %v3251 = vpop.permute.xlu0 %3250
        %3256 = vrot.lane.b32.xlu0 %v2071, 64
        %v3257 = vpop.permute.xlu0 %3256
        %3258 = vrot.lane.b32.xlu0 %v2119, 64
        %v3259 = vpop.permute.xlu0 %3258
        %3264 = vrot.lane.b32.xlu0 %v2293, 96
        %v3265 = vpop.permute.xlu0 %3264
        %3266 = vrot.lane.b32.xlu0 %v2341, 96
        %v3267 = vpop.permute.xlu0 %3266
        %3272 = vrot.lane.b32.xlu0 %v2736, 32
        %v3273 = vpop.permute.xlu0 %3272
        %3274 = vrot.lane.b32.xlu0 %v2785, 32
        %v3275 = vpop.permute.xlu0 %3274
        %3280 = vrot.lane.b32.xlu0 %v2964, 64
        %v3281 = vpop.permute.xlu0 %3280
        %3282 = vrot.lane.b32.xlu0 %v3013, 64
        %v3283 = vpop.permute.xlu0 %3282
        %3288 = vrot.lane.b32.xlu0 %v3192, 96
        %v3289 = vpop.permute.xlu0 %3288
        %3290 = vrot.lane.b32.xlu0 %v3241, 96
        %v3291 = vpop.permute.xlu0 %3290
        %v3294 = vsel %vm1461, %v1623, %v3249
        %v3295 = vsel %vm1461, %v1669, %v3251
        %vm3296 = vcmask 523264
        %v3297 = vsel %vm3296, %v3294, %v3257
        %v3298 = vsel %vm3296, %v3295, %v3259
        %vm3299 = vcmask 785408
        %v3300 = vsel %vm3299, %v3297, %v3265
        %v3301 = vsel %vm3299, %v3298, %v3267
        %v3302 = vsel %vm1461, %v2510, %v3273
        %v3303 = vsel %vm1461, %v2557, %v3275
        %v3304 = vsel %vm3296, %v3302, %v3281
        %v3305 = vsel %vm3296, %v3303, %v3283
        %v3306 = vsel %vm3299, %v3304, %v3289
        %v3307 = vsel %vm3299, %v3305, %v3291
        %v3308 = vpack.c.bf16 %v3301, %v3300
        %v3309 = vpack.c.bf16 %v3307, %v3306
        %s3310 = smul.u32 %s39, 64
        %s3311 = smul.addr %s3310, 4
        %s3312 = scalar_lea.vmem [#allocation10], %s3311
        %v3313 = vld [vmem:[%s3312] sm:$0xff]
        %v3314 = vld [vmem:[%s3312 + $0x8] sm:$0xff]
        %v3315 = vld [vmem:[%s3312 + $0x10] sm:$0xff]
        %v3316 = vld [vmem:[%s3312 + $0x18] sm:$0xff]
        %v3317 = vld [vmem:[%s3312 + $0x20] sm:$0xff]
        %v3318 = vld [vmem:[%s3312 + $0x28] sm:$0xff]
        %v3319 = vld [vmem:[%s3312 + $0x30] sm:$0xff]
        %v3320 = vld [vmem:[%s3312 + $0x38] sm:$0xff]
        %v3321 = vld [vmem:[%s3312 + $0x40] sm:$0xff]
        %v3322 = vld [vmem:[%s3312 + $0x48] sm:$0xff]
        %v3323 = vld [vmem:[%s3312 + $0x50] sm:$0xff]
        %v3324 = vld [vmem:[%s3312 + $0x58] sm:$0xff]
        %v3325 = vld [vmem:[%s3312 + $0x60] sm:$0xff]
        %v3326 = vld [vmem:[%s3312 + $0x68] sm:$0xff]
        %v3327 = vld [vmem:[%s3312 + $0x70] sm:$0xff]
        %v3328 = vld [vmem:[%s3312 + $0x78] sm:$0xff]
        %v3329 = vld [vmem:[%s3312 + $0x80] sm:$0xff]
        %v3330 = vld [vmem:[%s3312 + $0x88] sm:$0xff]
        %v3331 = vld [vmem:[%s3312 + $0x90] sm:$0xff]
        %v3332 = vld [vmem:[%s3312 + $0x98] sm:$0xff]
        %v3333 = vld [vmem:[%s3312 + $0xa0] sm:$0xff]
        %v3334 = vld [vmem:[%s3312 + $0xa8] sm:$0xff]
        %v3335 = vld [vmem:[%s3312 + $0xb0] sm:$0xff]
        %v3336 = vld [vmem:[%s3312 + $0xb8] sm:$0xff]
        %v3337 = vld [vmem:[%s3312 + $0xc0] sm:$0xff]
        %v3338 = vld [vmem:[%s3312 + $0xc8] sm:$0xff]
        %v3339 = vld [vmem:[%s3312 + $0xd0] sm:$0xff]
        %v3340 = vld [vmem:[%s3312 + $0xd8] sm:$0xff]
        %v3341 = vld [vmem:[%s3312 + $0xe0] sm:$0xff]
        %v3342 = vld [vmem:[%s3312 + $0xe8] sm:$0xff]
        %v3343 = vld [vmem:[%s3312 + $0xf0] sm:$0xff]
        %v3344 = vld [vmem:[%s3312 + $0xf8] sm:$0xff]
        %s3345 = smul.u32 %s39, 2
        %s3346 = scalar_lea.vmem [#allocation11], %s3345
        %v3347 = vld [vmem:[%s3346] sm:$0x3]
        %v3349 = vlaneseq
        %v3350 = vshrl.u32 %v3349, 7
        %v3351 = vsub.s32 0, %v3350
        %v3352 = vrot.slane %v3347, %v3351
        %v3353 = vlaneseq
        %v3354 = vshrl.u32 %v3353, 7
        %v3355 = vsub.s32 1, %v3354
        %v3356 = vrot.slane %v3347, %v3355
        %v3391 = vunpack.c.l.b16 %v3313
        %v3392 = vunpack.c.h.b16 %v3313
        %v3393 = vunpack.c.l.b16 %v3314
        %v3394 = vunpack.c.h.b16 %v3314
        %v3395 = vunpack.c.l.b16 %v3315
        %v3396 = vunpack.c.h.b16 %v3315
        %v3397 = vunpack.c.l.b16 %v3316
        %v3398 = vunpack.c.h.b16 %v3316
        %v3399 = vunpack.c.l.b16 %v3317
        %v3400 = vunpack.c.h.b16 %v3317
        %v3401 = vunpack.c.l.b16 %v3318
        %v3402 = vunpack.c.h.b16 %v3318
        %v3403 = vunpack.c.l.b16 %v3319
        %v3404 = vunpack.c.h.b16 %v3319
        %v3405 = vunpack.c.l.b16 %v3320
        %v3406 = vunpack.c.h.b16 %v3320
        %v3407 = vunpack.c.l.b16 %v3321
        %v3408 = vunpack.c.h.b16 %v3321
        %v3409 = vunpack.c.l.b16 %v3322
        %v3410 = vunpack.c.h.b16 %v3322
        %v3411 = vunpack.c.l.b16 %v3323
        %v3412 = vunpack.c.h.b16 %v3323
        %v3413 = vunpack.c.l.b16 %v3324
        %v3414 = vunpack.c.h.b16 %v3324
        %v3415 = vunpack.c.l.b16 %v3325
        %v3416 = vunpack.c.h.b16 %v3325
        %v3417 = vunpack.c.l.b16 %v3326
        %v3418 = vunpack.c.h.b16 %v3326
        %v3419 = vunpack.c.l.b16 %v3327
        %v3420 = vunpack.c.h.b16 %v3327
        %v3421 = vunpack.c.l.b16 %v3328
        %v3422 = vunpack.c.h.b16 %v3328
        %v3423 = vunpack.c.l.b16 %v3329
        %v3424 = vunpack.c.h.b16 %v3329
        %v3425 = vunpack.c.l.b16 %v3330
        %v3426 = vunpack.c.h.b16 %v3330
        %v3427 = vunpack.c.l.b16 %v3331
        %v3428 = vunpack.c.h.b16 %v3331
        %v3429 = vunpack.c.l.b16 %v3332
        %v3430 = vunpack.c.h.b16 %v3332
        %v3431 = vunpack.c.l.b16 %v3333
        %v3432 = vunpack.c.h.b16 %v3333
        %v3433 = vunpack.c.l.b16 %v3334
        %v3434 = vunpack.c.h.b16 %v3334
        %v3435 = vunpack.c.l.b16 %v3335
        %v3436 = vunpack.c.h.b16 %v3335
        %v3437 = vunpack.c.l.b16 %v3336
        %v3438 = vunpack.c.h.b16 %v3336
        %v3439 = vunpack.c.l.b16 %v3337
        %v3440 = vunpack.c.h.b16 %v3337
        %v3441 = vunpack.c.l.b16 %v3338
        %v3442 = vunpack.c.h.b16 %v3338
        %v3443 = vunpack.c.l.b16 %v3339
        %v3444 = vunpack.c.h.b16 %v3339
        %v3445 = vunpack.c.l.b16 %v3340
        %v3446 = vunpack.c.h.b16 %v3340
        %v3447 = vunpack.c.l.b16 %v3341
        %v3448 = vunpack.c.h.b16 %v3341
        %v3449 = vunpack.c.l.b16 %v3342
        %v3450 = vunpack.c.h.b16 %v3342
        %v3451 = vunpack.c.l.b16 %v3343
        %v3452 = vunpack.c.h.b16 %v3343
        %v3453 = vunpack.c.l.b16 %v3344
        %v3454 = vunpack.c.h.b16 %v3344
        %v3455 = vpack.c.b16 %v3393, %v3391
        %v3456 = vpack.c.b16 %v3394, %v3392
        %v3457 = vpack.c.b16 %v3397, %v3395
        %v3458 = vpack.c.b16 %v3398, %v3396
        %v3459 = vpack.c.b16 %v3401, %v3399
        %v3460 = vpack.c.b16 %v3402, %v3400
        %v3461 = vpack.c.b16 %v3405, %v3403
        %v3462 = vpack.c.b16 %v3406, %v3404
        %v3463 = vpack.c.b16 %v3409, %v3407
        %v3464 = vpack.c.b16 %v3410, %v3408
        %v3465 = vpack.c.b16 %v3413, %v3411
        %v3466 = vpack.c.b16 %v3414, %v3412
        %v3467 = vpack.c.b16 %v3417, %v3415
        %v3468 = vpack.c.b16 %v3418, %v3416
        %v3469 = vpack.c.b16 %v3421, %v3419
        %v3470 = vpack.c.b16 %v3422, %v3420
        %v3471 = vpack.c.b16 %v3425, %v3423
        %v3472 = vpack.c.b16 %v3426, %v3424
        %v3473 = vpack.c.b16 %v3429, %v3427
        %v3474 = vpack.c.b16 %v3430, %v3428
        %v3475 = vpack.c.b16 %v3433, %v3431
        %v3476 = vpack.c.b16 %v3434, %v3432
        %v3477 = vpack.c.b16 %v3437, %v3435
        %v3478 = vpack.c.b16 %v3438, %v3436
        %v3479 = vpack.c.b16 %v3441, %v3439
        %v3480 = vpack.c.b16 %v3442, %v3440
        %v3481 = vpack.c.b16 %v3445, %v3443
        %v3482 = vpack.c.b16 %v3446, %v3444
        %v3483 = vpack.c.b16 %v3449, %v3447
        %v3484 = vpack.c.b16 %v3450, %v3448
        %v3485 = vpack.c.b16 %v3453, %v3451
        %v3486 = vpack.c.b16 %v3454, %v3452
        %3519 = vmatprep.subr.bf16.mxu0 %v3456
        %3520 = vmatpush1.bf16.msra.mxu0 %v3455
        %3521 = vmatprep.subr.bf16.mxu0 %v3458
        %3522 = vmatpush1.bf16.msra.mxu0 %v3457
        %3523 = vmatprep.subr.bf16.mxu0 %v3460
        %3524 = vmatpush1.bf16.msra.mxu0 %v3459
        %3525 = vmatprep.subr.bf16.mxu0 %v3462
        %3526 = vmatpush1.bf16.msra.mxu0 %v3461
        %3527 = vmatprep.subr.bf16.mxu0 %v3464
        %3528 = vmatpush1.bf16.msra.mxu0 %v3463
        %3529 = vmatprep.subr.bf16.mxu0 %v3466
        %3530 = vmatpush1.bf16.msra.mxu0 %v3465
        %3531 = vmatprep.subr.bf16.mxu0 %v3468
        %3532 = vmatpush1.bf16.msra.mxu0 %v3467
        %3533 = vmatprep.subr.bf16.mxu0 %v3470
        %3534 = vmatpush1.bf16.msra.mxu0 %v3469
        %3535 = vmatprep.subr.bf16.mxu0 %v3472
        %3536 = vmatpush1.bf16.msra.mxu0 %v3471
        %3537 = vmatprep.subr.bf16.mxu0 %v3474
        %3538 = vmatpush1.bf16.msra.mxu0 %v3473
        %3539 = vmatprep.subr.bf16.mxu0 %v3476
        %3540 = vmatpush1.bf16.msra.mxu0 %v3475
        %3541 = vmatprep.subr.bf16.mxu0 %v3478
        %3542 = vmatpush1.bf16.msra.mxu0 %v3477
        %3543 = vmatprep.subr.bf16.mxu0 %v3480
        %3544 = vmatpush1.bf16.msra.mxu0 %v3479
        %3545 = vmatprep.subr.bf16.mxu0 %v3482
        %3546 = vmatpush1.bf16.msra.mxu0 %v3481
        %3547 = vmatprep.subr.bf16.mxu0 %v3484
        %3548 = vmatpush1.bf16.msra.mxu0 %v3483
        %3549 = vmatprep.subr.bf16.mxu0 %v3486
        %3550 = vmatpush1.bf16.msra.mxu0 %v3485
        %3551 = vmatprep.mubr.bf16.mxu0 %v3309
        %3552 = vmatmul.mubr.bf16.gmra.mrb[0].mxu0 %v3308
        %v3553 = vpop.f32.mrb[0].mxu0
        %v3554 = vadd.f32 %v3352, %v3553
        %v3555 = vpop.f32.mrb[0].mxu0
        %v3556 = vadd.f32 %v3356, %v3555
        %v3557 = vpop.f32.mrb[0].mxu0
        %v3558 = vadd.f32 %v3352, %v3557
        %v3559 = vpop.f32.mrb[0].mxu0
        %v3560 = vadd.f32 %v3356, %v3559
        %3561 = vdwg.mxu0
        %v3562 = vadd.f32 %v683, %v3554
        %v3563 = vadd.f32 %v684, %v3556
        %v3564 = vadd.f32 %v685, %v3558
        %v3565 = vadd.f32 %v686, %v3560
        %s3566 = scalar_lea.vmem [#allocation19], %s3345
        %v3567 = vld [vmem:[%s3566] sm:$0x3]
        %s3568 = scalar_lea.vmem [#allocation20], %s3345
        %v3569 = vld [vmem:[%s3568] sm:$0x3]
        %v3570 = vadd.f32 %v3562, %v3563
        %3571 = vadd.xlane.f32.xlu0 %v3570
        %v3572 = vpop.xlane.xlu0 %3571
        %v3573 = vadd.f32 %v3564, %v3565
        %3574 = vadd.xlane.f32.xlu0 %v3573
        %v3575 = vpop.xlane.xlu0 %3574
        %v3576 = vrcp.pop 256.0
        %v3577 = vmul.f32 %v3572, %v3576
        %v3578 = vmul.f32 %v3575, %v3576
        %v3579 = vsub.f32 %v3562, %v3577
        %v3580 = vsub.f32 %v3563, %v3577
        %v3581 = vsub.f32 %v3564, %v3578
        %v3582 = vsub.f32 %v3565, %v3578
        %v3583 = vmul.f32 %v3579, %v3579
        %v3584 = vmul.f32 %v3580, %v3580
        %v3585 = vmul.f32 %v3581, %v3581
        %v3586 = vmul.f32 %v3582, %v3582
        %v3587 = vadd.f32 %v3583, %v3584
        %3588 = vadd.xlane.f32.xlu0 %v3587
        %v3589 = vpop.xlane.xlu0 %3588
        %v3590 = vadd.f32 %v3585, %v3586
        %3591 = vadd.xlane.f32.xlu0 %v3590
        %v3592 = vpop.xlane.xlu0 %3591
        %v3593 = vmul.f32 %v3589, %v3576
        %v3594 = vmul.f32 %v3592, %v3576
        %v3595 = vadd.f32 %v3593, 1e-05
        %v3596 = vadd.f32 %v3594, 1e-05
        %v3597 = vrsqrt.pop %v3595
        %v3598 = vrsqrt.pop %v3596
        %v3599 = vmul.f32 %v3579, %v3597
        %v3600 = vmul.f32 %v3580, %v3597
        %v3601 = vmul.f32 %v3581, %v3598
        %v3602 = vmul.f32 %v3582, %v3598
        %v3604 = vlaneseq
        %v3605 = vshrl.u32 %v3604, 7
        %v3606 = vsub.s32 0, %v3605
        %v3607 = vrot.slane %v3567, %v3606
        %v3608 = vlaneseq
        %v3609 = vshrl.u32 %v3608, 7
        %v3610 = vsub.s32 1, %v3609
        %v3611 = vrot.slane %v3567, %v3610
        %v3614 = vmul.f32 %v3599, %v3607
        %v3615 = vmul.f32 %v3600, %v3611
        %v3616 = vmul.f32 %v3601, %v3607
        %v3617 = vmul.f32 %v3602, %v3611
        %v3619 = vlaneseq
        %v3620 = vshrl.u32 %v3619, 7
        %v3621 = vsub.s32 0, %v3620
        %v3622 = vrot.slane %v3569, %v3621
        %v3623 = vlaneseq
        %v3624 = vshrl.u32 %v3623, 7
        %v3625 = vsub.s32 1, %v3624
        %v3626 = vrot.slane %v3569, %v3625
        %v3629 = vadd.f32 %v3614, %v3622
        %v3630 = vadd.f32 %v3615, %v3626
        %v3631 = vadd.f32 %v3616, %v3622
        %v3632 = vadd.f32 %v3617, %v3626
        %v3633 = vpack.c.bf16 %v3631, %v3629
        %v3634 = vpack.c.bf16 %v3632, %v3630
        %s3635 = smul.u32 %s39, 256
        %s3636 = smul.addr %s3635, 4
        %s3637 = scalar_lea.vmem [#allocation13], %s3636
        %v3638 = vld [vmem:[%s3637] sm:$0xff]
        %v3639 = vld [vmem:[%s3637 + $0x8] sm:$0xff]
        %v3640 = vld [vmem:[%s3637 + $0x10] sm:$0xff]
        %v3641 = vld [vmem:[%s3637 + $0x18] sm:$0xff]
        %v3642 = vld [vmem:[%s3637 + $0x20] sm:$0xff]
        %v3643 = vld [vmem:[%s3637 + $0x28] sm:$0xff]
        %v3644 = vld [vmem:[%s3637 + $0x30] sm:$0xff]
        %v3645 = vld [vmem:[%s3637 + $0x38] sm:$0xff]
        %v3646 = vld [vmem:[%s3637 + $0x40] sm:$0xff]
        %v3647 = vld [vmem:[%s3637 + $0x48] sm:$0xff]
        %v3648 = vld [vmem:[%s3637 + $0x50] sm:$0xff]
        %v3649 = vld [vmem:[%s3637 + $0x58] sm:$0xff]
        %v3650 = vld [vmem:[%s3637 + $0x60] sm:$0xff]
        %v3651 = vld [vmem:[%s3637 + $0x68] sm:$0xff]
        %v3652 = vld [vmem:[%s3637 + $0x70] sm:$0xff]
        %v3653 = vld [vmem:[%s3637 + $0x78] sm:$0xff]
        %v3654 = vld [vmem:[%s3637 + $0x80] sm:$0xff]
        %v3655 = vld [vmem:[%s3637 + $0x88] sm:$0xff]
        %v3656 = vld [vmem:[%s3637 + $0x90] sm:$0xff]
        %v3657 = vld [vmem:[%s3637 + $0x98] sm:$0xff]
        %v3658 = vld [vmem:[%s3637 + $0xa0] sm:$0xff]
        %v3659 = vld [vmem:[%s3637 + $0xa8] sm:$0xff]
        %v3660 = vld [vmem:[%s3637 + $0xb0] sm:$0xff]
        %v3661 = vld [vmem:[%s3637 + $0xb8] sm:$0xff]
        %v3662 = vld [vmem:[%s3637 + $0xc0] sm:$0xff]
        %v3663 = vld [vmem:[%s3637 + $0xc8] sm:$0xff]
        %v3664 = vld [vmem:[%s3637 + $0xd0] sm:$0xff]
        %v3665 = vld [vmem:[%s3637 + $0xd8] sm:$0xff]
        %v3666 = vld [vmem:[%s3637 + $0xe0] sm:$0xff]
        %v3667 = vld [vmem:[%s3637 + $0xe8] sm:$0xff]
        %v3668 = vld [vmem:[%s3637 + $0xf0] sm:$0xff]
        %v3669 = vld [vmem:[%s3637 + $0xf8] sm:$0xff]
        %v3670 = vld [vmem:[%s3637 + $0x100] sm:$0xff]
        %v3671 = vld [vmem:[%s3637 + $0x108] sm:$0xff]
        %v3672 = vld [vmem:[%s3637 + $0x110] sm:$0xff]
        %v3673 = vld [vmem:[%s3637 + $0x118] sm:$0xff]
        %v3674 = vld [vmem:[%s3637 + $0x120] sm:$0xff]
        %v3675 = vld [vmem:[%s3637 + $0x128] sm:$0xff]
        %v3676 = vld [vmem:[%s3637 + $0x130] sm:$0xff]
        %v3677 = vld [vmem:[%s3637 + $0x138] sm:$0xff]
        %v3678 = vld [vmem:[%s3637 + $0x140] sm:$0xff]
        %v3679 = vld [vmem:[%s3637 + $0x148] sm:$0xff]
        %v3680 = vld [vmem:[%s3637 + $0x150] sm:$0xff]
        %v3681 = vld [vmem:[%s3637 + $0x158] sm:$0xff]
        %v3682 = vld [vmem:[%s3637 + $0x160] sm:$0xff]
        %v3683 = vld [vmem:[%s3637 + $0x168] sm:$0xff]
        %v3684 = vld [vmem:[%s3637 + $0x170] sm:$0xff]
        %v3685 = vld [vmem:[%s3637 + $0x178] sm:$0xff]
        %v3686 = vld [vmem:[%s3637 + $0x180] sm:$0xff]
        %v3687 = vld [vmem:[%s3637 + $0x188] sm:$0xff]
        %v3688 = vld [vmem:[%s3637 + $0x190] sm:$0xff]
        %v3689 = vld [vmem:[%s3637 + $0x198] sm:$0xff]
        %v3690 = vld [vmem:[%s3637 + $0x1a0] sm:$0xff]
        %v3691 = vld [vmem:[%s3637 + $0x1a8] sm:$0xff]
        %v3692 = vld [vmem:[%s3637 + $0x1b0] sm:$0xff]
        %v3693 = vld [vmem:[%s3637 + $0x1b8] sm:$0xff]
        %v3694 = vld [vmem:[%s3637 + $0x1c0] sm:$0xff]
        %v3695 = vld [vmem:[%s3637 + $0x1c8] sm:$0xff]
        %v3696 = vld [vmem:[%s3637 + $0x1d0] sm:$0xff]
        %v3697 = vld [vmem:[%s3637 + $0x1d8] sm:$0xff]
        %v3698 = vld [vmem:[%s3637 + $0x1e0] sm:$0xff]
        %v3699 = vld [vmem:[%s3637 + $0x1e8] sm:$0xff]
        %v3700 = vld [vmem:[%s3637 + $0x1f0] sm:$0xff]
        %v3701 = vld [vmem:[%s3637 + $0x1f8] sm:$0xff]
        %v3702 = vld [vmem:[%s3637 + $0x200] sm:$0xff]
        %v3703 = vld [vmem:[%s3637 + $0x208] sm:$0xff]
        %v3704 = vld [vmem:[%s3637 + $0x210] sm:$0xff]
        %v3705 = vld [vmem:[%s3637 + $0x218] sm:$0xff]
        %v3706 = vld [vmem:[%s3637 + $0x220] sm:$0xff]
        %v3707 = vld [vmem:[%s3637 + $0x228] sm:$0xff]
        %v3708 = vld [vmem:[%s3637 + $0x230] sm:$0xff]
        %v3709 = vld [vmem:[%s3637 + $0x238] sm:$0xff]
        %v3710 = vld [vmem:[%s3637 + $0x240] sm:$0xff]
        %v3711 = vld [vmem:[%s3637 + $0x248] sm:$0xff]
        %v3712 = vld [vmem:[%s3637 + $0x250] sm:$0xff]
        %v3713 = vld [vmem:[%s3637 + $0x258] sm:$0xff]
        %v3714 = vld [vmem:[%s3637 + $0x260] sm:$0xff]
        %v3715 = vld [vmem:[%s3637 + $0x268] sm:$0xff]
        %v3716 = vld [vmem:[%s3637 + $0x270] sm:$0xff]
        %v3717 = vld [vmem:[%s3637 + $0x278] sm:$0xff]
        %v3718 = vld [vmem:[%s3637 + $0x280] sm:$0xff]
        %v3719 = vld [vmem:[%s3637 + $0x288] sm:$0xff]
        %v3720 = vld [vmem:[%s3637 + $0x290] sm:$0xff]
        %v3721 = vld [vmem:[%s3637 + $0x298] sm:$0xff]
        %v3722 = vld [vmem:[%s3637 + $0x2a0] sm:$0xff]
        %v3723 = vld [vmem:[%s3637 + $0x2a8] sm:$0xff]
        %v3724 = vld [vmem:[%s3637 + $0x2b0] sm:$0xff]
        %v3725 = vld [vmem:[%s3637 + $0x2b8] sm:$0xff]
        %v3726 = vld [vmem:[%s3637 + $0x2c0] sm:$0xff]
        %v3727 = vld [vmem:[%s3637 + $0x2c8] sm:$0xff]
        %v3728 = vld [vmem:[%s3637 + $0x2d0] sm:$0xff]
        %v3729 = vld [vmem:[%s3637 + $0x2d8] sm:$0xff]
        %v3730 = vld [vmem:[%s3637 + $0x2e0] sm:$0xff]
        %v3731 = vld [vmem:[%s3637 + $0x2e8] sm:$0xff]
        %v3732 = vld [vmem:[%s3637 + $0x2f0] sm:$0xff]
        %v3733 = vld [vmem:[%s3637 + $0x2f8] sm:$0xff]
        %v3734 = vld [vmem:[%s3637 + $0x300] sm:$0xff]
        %v3735 = vld [vmem:[%s3637 + $0x308] sm:$0xff]
        %v3736 = vld [vmem:[%s3637 + $0x310] sm:$0xff]
        %v3737 = vld [vmem:[%s3637 + $0x318] sm:$0xff]
        %v3738 = vld [vmem:[%s3637 + $0x320] sm:$0xff]
        %v3739 = vld [vmem:[%s3637 + $0x328] sm:$0xff]
        %v3740 = vld [vmem:[%s3637 + $0x330] sm:$0xff]
        %v3741 = vld [vmem:[%s3637 + $0x338] sm:$0xff]
        %v3742 = vld [vmem:[%s3637 + $0x340] sm:$0xff]
        %v3743 = vld [vmem:[%s3637 + $0x348] sm:$0xff]
        %v3744 = vld [vmem:[%s3637 + $0x350] sm:$0xff]
        %v3745 = vld [vmem:[%s3637 + $0x358] sm:$0xff]
        %v3746 = vld [vmem:[%s3637 + $0x360] sm:$0xff]
        %v3747 = vld [vmem:[%s3637 + $0x368] sm:$0xff]
        %v3748 = vld [vmem:[%s3637 + $0x370] sm:$0xff]
        %v3749 = vld [vmem:[%s3637 + $0x378] sm:$0xff]
        %v3750 = vld [vmem:[%s3637 + $0x380] sm:$0xff]
        %v3751 = vld [vmem:[%s3637 + $0x388] sm:$0xff]
        %v3752 = vld [vmem:[%s3637 + $0x390] sm:$0xff]
        %v3753 = vld [vmem:[%s3637 + $0x398] sm:$0xff]
        %v3754 = vld [vmem:[%s3637 + $0x3a0] sm:$0xff]
        %v3755 = vld [vmem:[%s3637 + $0x3a8] sm:$0xff]
        %v3756 = vld [vmem:[%s3637 + $0x3b0] sm:$0xff]
        %v3757 = vld [vmem:[%s3637 + $0x3b8] sm:$0xff]
        %v3758 = vld [vmem:[%s3637 + $0x3c0] sm:$0xff]
        %v3759 = vld [vmem:[%s3637 + $0x3c8] sm:$0xff]
        %v3760 = vld [vmem:[%s3637 + $0x3d0] sm:$0xff]
        %v3761 = vld [vmem:[%s3637 + $0x3d8] sm:$0xff]
        %v3762 = vld [vmem:[%s3637 + $0x3e0] sm:$0xff]
        %v3763 = vld [vmem:[%s3637 + $0x3e8] sm:$0xff]
        %v3764 = vld [vmem:[%s3637 + $0x3f0] sm:$0xff]
        %v3765 = vld [vmem:[%s3637 + $0x3f8] sm:$0xff]
        %s3766 = smul.u32 %s39, 8
        %s3767 = scalar_lea.vmem [#allocation14], %s3766
        %v3768 = vld [vmem:[%s3767] sm:$0xff]
        %v3770 = vlaneseq
        %v3771 = vshrl.u32 %v3770, 7
        %v3772 = vsub.s32 0, %v3771
        %v3773 = vrot.slane %v3768, %v3772
        %v3774 = vlaneseq
        %v3775 = vshrl.u32 %v3774, 7
        %v3776 = vsub.s32 1, %v3775
        %v3777 = vrot.slane %v3768, %v3776
        %v3778 = vlaneseq
        %v3779 = vshrl.u32 %v3778, 7
        %v3780 = vsub.s32 2, %v3779
        %v3781 = vrot.slane %v3768, %v3780
        %v3782 = vlaneseq
        %v3783 = vshrl.u32 %v3782, 7
        %v3784 = vsub.s32 3, %v3783
        %v3785 = vrot.slane %v3768, %v3784
        %v3786 = vlaneseq
        %v3787 = vshrl.u32 %v3786, 7
        %v3788 = vsub.s32 4, %v3787
        %v3789 = vrot.slane %v3768, %v3788
        %v3790 = vlaneseq
        %v3791 = vshrl.u32 %v3790, 7
        %v3792 = vsub.s32 5, %v3791
        %v3793 = vrot.slane %v3768, %v3792
        %v3794 = vlaneseq
        %v3795 = vshrl.u32 %v3794, 7
        %v3796 = vsub.s32 6, %v3795
        %v3797 = vrot.slane %v3768, %v3796
        %v3798 = vlaneseq
        %v3799 = vshrl.u32 %v3798, 7
        %v3800 = vsub.s32 7, %v3799
        %v3801 = vrot.slane %v3768, %v3800
        %v3938 = vunpack.c.l.b16 %v3638
        %v3939 = vunpack.c.h.b16 %v3638
        %v3940 = vunpack.c.l.b16 %v3639
        %v3941 = vunpack.c.h.b16 %v3639
        %v3942 = vunpack.c.l.b16 %v3640
        %v3943 = vunpack.c.h.b16 %v3640
        %v3944 = vunpack.c.l.b16 %v3641
        %v3945 = vunpack.c.h.b16 %v3641
        %v3946 = vunpack.c.l.b16 %v3642
        %v3947 = vunpack.c.h.b16 %v3642
        %v3948 = vunpack.c.l.b16 %v3643
        %v3949 = vunpack.c.h.b16 %v3643
        %v3950 = vunpack.c.l.b16 %v3644
        %v3951 = vunpack.c.h.b16 %v3644
        %v3952 = vunpack.c.l.b16 %v3645
        %v3953 = vunpack.c.h.b16 %v3645
        %v3954 = vunpack.c.l.b16 %v3646
        %v3955 = vunpack.c.h.b16 %v3646
        %v3956 = vunpack.c.l.b16 %v3647
        %v3957 = vunpack.c.h.b16 %v3647
        %v3958 = vunpack.c.l.b16 %v3648
        %v3959 = vunpack.c.h.b16 %v3648
        %v3960 = vunpack.c.l.b16 %v3649
        %v3961 = vunpack.c.h.b16 %v3649
        %v3962 = vunpack.c.l.b16 %v3650
        %v3963 = vunpack.c.h.b16 %v3650
        %v3964 = vunpack.c.l.b16 %v3651
        %v3965 = vunpack.c.h.b16 %v3651
        %v3966 = vunpack.c.l.b16 %v3652
        %v3967 = vunpack.c.h.b16 %v3652
        %v3968 = vunpack.c.l.b16 %v3653
        %v3969 = vunpack.c.h.b16 %v3653
        %v3970 = vunpack.c.l.b16 %v3654
        %v3971 = vunpack.c.h.b16 %v3654
        %v3972 = vunpack.c.l.b16 %v3655
        %v3973 = vunpack.c.h.b16 %v3655
        %v3974 = vunpack.c.l.b16 %v3656
        %v3975 = vunpack.c.h.b16 %v3656
        %v3976 = vunpack.c.l.b16 %v3657
        %v3977 = vunpack.c.h.b16 %v3657
        %v3978 = vunpack.c.l.b16 %v3658
        %v3979 = vunpack.c.h.b16 %v3658
        %v3980 = vunpack.c.l.b16 %v3659
        %v3981 = vunpack.c.h.b16 %v3659
        %v3982 = vunpack.c.l.b16 %v3660
        %v3983 = vunpack.c.h.b16 %v3660
        %v3984 = vunpack.c.l.b16 %v3661
        %v3985 = vunpack.c.h.b16 %v3661
        %v3986 = vunpack.c.l.b16 %v3662
        %v3987 = vunpack.c.h.b16 %v3662
        %v3988 = vunpack.c.l.b16 %v3663
        %v3989 = vunpack.c.h.b16 %v3663
        %v3990 = vunpack.c.l.b16 %v3664
        %v3991 = vunpack.c.h.b16 %v3664
        %v3992 = vunpack.c.l.b16 %v3665
        %v3993 = vunpack.c.h.b16 %v3665
        %v3994 = vunpack.c.l.b16 %v3666
        %v3995 = vunpack.c.h.b16 %v3666
        %v3996 = vunpack.c.l.b16 %v3667
        %v3997 = vunpack.c.h.b16 %v3667
        %v3998 = vunpack.c.l.b16 %v3668
        %v3999 = vunpack.c.h.b16 %v3668
        %v4000 = vunpack.c.l.b16 %v3669
        %v4001 = vunpack.c.h.b16 %v3669
        %v4002 = vunpack.c.l.b16 %v3670
        %v4003 = vunpack.c.h.b16 %v3670
        %v4004 = vunpack.c.l.b16 %v3671
        %v4005 = vunpack.c.h.b16 %v3671
        %v4006 = vunpack.c.l.b16 %v3672
        %v4007 = vunpack.c.h.b16 %v3672
        %v4008 = vunpack.c.l.b16 %v3673
        %v4009 = vunpack.c.h.b16 %v3673
        %v4010 = vunpack.c.l.b16 %v3674
        %v4011 = vunpack.c.h.b16 %v3674
        %v4012 = vunpack.c.l.b16 %v3675
        %v4013 = vunpack.c.h.b16 %v3675
        %v4014 = vunpack.c.l.b16 %v3676
        %v4015 = vunpack.c.h.b16 %v3676
        %v4016 = vunpack.c.l.b16 %v3677
        %v4017 = vunpack.c.h.b16 %v3677
        %v4018 = vunpack.c.l.b16 %v3678
        %v4019 = vunpack.c.h.b16 %v3678
        %v4020 = vunpack.c.l.b16 %v3679
        %v4021 = vunpack.c.h.b16 %v3679
        %v4022 = vunpack.c.l.b16 %v3680
        %v4023 = vunpack.c.h.b16 %v3680
        %v4024 = vunpack.c.l.b16 %v3681
        %v4025 = vunpack.c.h.b16 %v3681
        %v4026 = vunpack.c.l.b16 %v3682
        %v4027 = vunpack.c.h.b16 %v3682
        %v4028 = vunpack.c.l.b16 %v3683
        %v4029 = vunpack.c.h.b16 %v3683
        %v4030 = vunpack.c.l.b16 %v3684
        %v4031 = vunpack.c.h.b16 %v3684
        %v4032 = vunpack.c.l.b16 %v3685
        %v4033 = vunpack.c.h.b16 %v3685
        %v4034 = vunpack.c.l.b16 %v3686
        %v4035 = vunpack.c.h.b16 %v3686
        %v4036 = vunpack.c.l.b16 %v3687
        %v4037 = vunpack.c.h.b16 %v3687
        %v4038 = vunpack.c.l.b16 %v3688
        %v4039 = vunpack.c.h.b16 %v3688
        %v4040 = vunpack.c.l.b16 %v3689
        %v4041 = vunpack.c.h.b16 %v3689
        %v4042 = vunpack.c.l.b16 %v3690
        %v4043 = vunpack.c.h.b16 %v3690
        %v4044 = vunpack.c.l.b16 %v3691
        %v4045 = vunpack.c.h.b16 %v3691
        %v4046 = vunpack.c.l.b16 %v3692
        %v4047 = vunpack.c.h.b16 %v3692
        %v4048 = vunpack.c.l.b16 %v3693
        %v4049 = vunpack.c.h.b16 %v3693
        %v4050 = vunpack.c.l.b16 %v3694
        %v4051 = vunpack.c.h.b16 %v3694
        %v4052 = vunpack.c.l.b16 %v3695
        %v4053 = vunpack.c.h.b16 %v3695
        %v4054 = vunpack.c.l.b16 %v3696
        %v4055 = vunpack.c.h.b16 %v3696
        %v4056 = vunpack.c.l.b16 %v3697
        %v4057 = vunpack.c.h.b16 %v3697
        %v4058 = vunpack.c.l.b16 %v3698
        %v4059 = vunpack.c.h.b16 %v3698
        %v4060 = vunpack.c.l.b16 %v3699
        %v4061 = vunpack.c.h.b16 %v3699
        %v4062 = vunpack.c.l.b16 %v3700
        %v4063 = vunpack.c.h.b16 %v3700
        %v4064 = vunpack.c.l.b16 %v3701
        %v4065 = vunpack.c.h.b16 %v3701
        %v4066 = vunpack.c.l.b16 %v3702
        %v4067 = vunpack.c.h.b16 %v3702
        %v4068 = vunpack.c.l.b16 %v3703
        %v4069 = vunpack.c.h.b16 %v3703
        %v4070 = vunpack.c.l.b16 %v3704
        %v4071 = vunpack.c.h.b16 %v3704
        %v4072 = vunpack.c.l.b16 %v3705
        %v4073 = vunpack.c.h.b16 %v3705
        %v4074 = vunpack.c.l.b16 %v3706
        %v4075 = vunpack.c.h.b16 %v3706
        %v4076 = vunpack.c.l.b16 %v3707
        %v4077 = vunpack.c.h.b16 %v3707
        %v4078 = vunpack.c.l.b16 %v3708
        %v4079 = vunpack.c.h.b16 %v3708
        %v4080 = vunpack.c.l.b16 %v3709
        %v4081 = vunpack.c.h.b16 %v3709
        %v4082 = vunpack.c.l.b16 %v3710
        %v4083 = vunpack.c.h.b16 %v3710
        %v4084 = vunpack.c.l.b16 %v3711
        %v4085 = vunpack.c.h.b16 %v3711
        %v4086 = vunpack.c.l.b16 %v3712
        %v4087 = vunpack.c.h.b16 %v3712
        %v4088 = vunpack.c.l.b16 %v3713
        %v4089 = vunpack.c.h.b16 %v3713
        %v4090 = vunpack.c.l.b16 %v3714
        %v4091 = vunpack.c.h.b16 %v3714
        %v4092 = vunpack.c.l.b16 %v3715
        %v4093 = vunpack.c.h.b16 %v3715
        %v4094 = vunpack.c.l.b16 %v3716
        %v4095 = vunpack.c.h.b16 %v3716
        %v4096 = vunpack.c.l.b16 %v3717
        %v4097 = vunpack.c.h.b16 %v3717
        %v4098 = vunpack.c.l.b16 %v3718
        %v4099 = vunpack.c.h.b16 %v3718
        %v4100 = vunpack.c.l.b16 %v3719
        %v4101 = vunpack.c.h.b16 %v3719
        %v4102 = vunpack.c.l.b16 %v3720
        %v4103 = vunpack.c.h.b16 %v3720
        %v4104 = vunpack.c.l.b16 %v3721
        %v4105 = vunpack.c.h.b16 %v3721
        %v4106 = vunpack.c.l.b16 %v3722
        %v4107 = vunpack.c.h.b16 %v3722
        %v4108 = vunpack.c.l.b16 %v3723
        %v4109 = vunpack.c.h.b16 %v3723
        %v4110 = vunpack.c.l.b16 %v3724
        %v4111 = vunpack.c.h.b16 %v3724
        %v4112 = vunpack.c.l.b16 %v3725
        %v4113 = vunpack.c.h.b16 %v3725
        %v4114 = vunpack.c.l.b16 %v3726
        %v4115 = vunpack.c.h.b16 %v3726
        %v4116 = vunpack.c.l.b16 %v3727
        %v4117 = vunpack.c.h.b16 %v3727
        %v4118 = vunpack.c.l.b16 %v3728
        %v4119 = vunpack.c.h.b16 %v3728
        %v4120 = vunpack.c.l.b16 %v3729
        %v4121 = vunpack.c.h.b16 %v3729
        %v4122 = vunpack.c.l.b16 %v3730
        %v4123 = vunpack.c.h.b16 %v3730
        %v4124 = vunpack.c.l.b16 %v3731
        %v4125 = vunpack.c.h.b16 %v3731
        %v4126 = vunpack.c.l.b16 %v3732
        %v4127 = vunpack.c.h.b16 %v3732
        %v4128 = vunpack.c.l.b16 %v3733
        %v4129 = vunpack.c.h.b16 %v3733
        %v4130 = vunpack.c.l.b16 %v3734
        %v4131 = vunpack.c.h.b16 %v3734
        %v4132 = vunpack.c.l.b16 %v3735
        %v4133 = vunpack.c.h.b16 %v3735
        %v4134 = vunpack.c.l.b16 %v3736
        %v4135 = vunpack.c.h.b16 %v3736
        %v4136 = vunpack.c.l.b16 %v3737
        %v4137 = vunpack.c.h.b16 %v3737
        %v4138 = vunpack.c.l.b16 %v3738
        %v4139 = vunpack.c.h.b16 %v3738
        %v4140 = vunpack.c.l.b16 %v3739
        %v4141 = vunpack.c.h.b16 %v3739
        %v4142 = vunpack.c.l.b16 %v3740
        %v4143 = vunpack.c.h.b16 %v3740
        %v4144 = vunpack.c.l.b16 %v3741
        %v4145 = vunpack.c.h.b16 %v3741
        %v4146 = vunpack.c.l.b16 %v3742
        %v4147 = vunpack.c.h.b16 %v3742
        %v4148 = vunpack.c.l.b16 %v3743
        %v4149 = vunpack.c.h.b16 %v3743
        %v4150 = vunpack.c.l.b16 %v3744
        %v4151 = vunpack.c.h.b16 %v3744
        %v4152 = vunpack.c.l.b16 %v3745
        %v4153 = vunpack.c.h.b16 %v3745
        %v4154 = vunpack.c.l.b16 %v3746
        %v4155 = vunpack.c.h.b16 %v3746
        %v4156 = vunpack.c.l.b16 %v3747
        %v4157 = vunpack.c.h.b16 %v3747
        %v4158 = vunpack.c.l.b16 %v3748
        %v4159 = vunpack.c.h.b16 %v3748
        %v4160 = vunpack.c.l.b16 %v3749
        %v4161 = vunpack.c.h.b16 %v3749
        %v4162 = vunpack.c.l.b16 %v3750
        %v4163 = vunpack.c.h.b16 %v3750
        %v4164 = vunpack.c.l.b16 %v3751
        %v4165 = vunpack.c.h.b16 %v3751
        %v4166 = vunpack.c.l.b16 %v3752
        %v4167 = vunpack.c.h.b16 %v3752
        %v4168 = vunpack.c.l.b16 %v3753
        %v4169 = vunpack.c.h.b16 %v3753
        %v4170 = vunpack.c.l.b16 %v3754
        %v4171 = vunpack.c.h.b16 %v3754
        %v4172 = vunpack.c.l.b16 %v3755
        %v4173 = vunpack.c.h.b16 %v3755
        %v4174 = vunpack.c.l.b16 %v3756
        %v4175 = vunpack.c.h.b16 %v3756
        %v4176 = vunpack.c.l.b16 %v3757
        %v4177 = vunpack.c.h.b16 %v3757
        %v4178 = vunpack.c.l.b16 %v3758
        %v4179 = vunpack.c.h.b16 %v3758
        %v4180 = vunpack.c.l.b16 %v3759
        %v4181 = vunpack.c.h.b16 %v3759
        %v4182 = vunpack.c.l.b16 %v3760
        %v4183 = vunpack.c.h.b16 %v3760
        %v4184 = vunpack.c.l.b16 %v3761
        %v4185 = vunpack.c.h.b16 %v3761
        %v4186 = vunpack.c.l.b16 %v3762
        %v4187 = vunpack.c.h.b16 %v3762
        %v4188 = vunpack.c.l.b16 %v3763
        %v4189 = vunpack.c.h.b16 %v3763
        %v4190 = vunpack.c.l.b16 %v3764
        %v4191 = vunpack.c.h.b16 %v3764
        %v4192 = vunpack.c.l.b16 %v3765
        %v4193 = vunpack.c.h.b16 %v3765
        %v4194 = vpack.c.b16 %v3946, %v3938
        %v4195 = vpack.c.b16 %v3947, %v3939
        %v4196 = vpack.c.b16 %v3948, %v3940
        %v4197 = vpack.c.b16 %v3949, %v3941
        %v4198 = vpack.c.b16 %v3950, %v3942
        %v4199 = vpack.c.b16 %v3951, %v3943
        %v4200 = vpack.c.b16 %v3952, %v3944
        %v4201 = vpack.c.b16 %v3953, %v3945
        %v4202 = vpack.c.b16 %v3962, %v3954
        %v4203 = vpack.c.b16 %v3963, %v3955
        %v4204 = vpack.c.b16 %v3964, %v3956
        %v4205 = vpack.c.b16 %v3965, %v3957
        %v4206 = vpack.c.b16 %v3966, %v3958
        %v4207 = vpack.c.b16 %v3967, %v3959
        %v4208 = vpack.c.b16 %v3968, %v3960
        %v4209 = vpack.c.b16 %v3969, %v3961
        %v4210 = vpack.c.b16 %v3978, %v3970
        %v4211 = vpack.c.b16 %v3979, %v3971
        %v4212 = vpack.c.b16 %v3980, %v3972
        %v4213 = vpack.c.b16 %v3981, %v3973
        %v4214 = vpack.c.b16 %v3982, %v3974
        %v4215 = vpack.c.b16 %v3983, %v3975
        %v4216 = vpack.c.b16 %v3984, %v3976
        %v4217 = vpack.c.b16 %v3985, %v3977
        %v4218 = vpack.c.b16 %v3994, %v3986
        %v4219 = vpack.c.b16 %v3995, %v3987
        %v4220 = vpack.c.b16 %v3996, %v3988
        %v4221 = vpack.c.b16 %v3997, %v3989
        %v4222 = vpack.c.b16 %v3998, %v3990
        %v4223 = vpack.c.b16 %v3999, %v3991
        %v4224 = vpack.c.b16 %v4000, %v3992
        %v4225 = vpack.c.b16 %v4001, %v3993
        %v4226 = vpack.c.b16 %v4010, %v4002
        %v4227 = vpack.c.b16 %v4011, %v4003
        %v4228 = vpack.c.b16 %v4012, %v4004
        %v4229 = vpack.c.b16 %v4013, %v4005
        %v4230 = vpack.c.b16 %v4014, %v4006
        %v4231 = vpack.c.b16 %v4015, %v4007
        %v4232 = vpack.c.b16 %v4016, %v4008
        %v4233 = vpack.c.b16 %v4017, %v4009
        %v4234 = vpack.c.b16 %v4026, %v4018
        %v4235 = vpack.c.b16 %v4027, %v4019
        %v4236 = vpack.c.b16 %v4028, %v4020
        %v4237 = vpack.c.b16 %v4029, %v4021
        %v4238 = vpack.c.b16 %v4030, %v4022
        %v4239 = vpack.c.b16 %v4031, %v4023
        %v4240 = vpack.c.b16 %v4032, %v4024
        %v4241 = vpack.c.b16 %v4033, %v4025
        %v4242 = vpack.c.b16 %v4042, %v4034
        %v4243 = vpack.c.b16 %v4043, %v4035
        %v4244 = vpack.c.b16 %v4044, %v4036
        %v4245 = vpack.c.b16 %v4045, %v4037
        %v4246 = vpack.c.b16 %v4046, %v4038
        %v4247 = vpack.c.b16 %v4047, %v4039
        %v4248 = vpack.c.b16 %v4048, %v4040
        %v4249 = vpack.c.b16 %v4049, %v4041
        %v4250 = vpack.c.b16 %v4058, %v4050
        %v4251 = vpack.c.b16 %v4059, %v4051
        %v4252 = vpack.c.b16 %v4060, %v4052
        %v4253 = vpack.c.b16 %v4061, %v4053
        %v4254 = vpack.c.b16 %v4062, %v4054
        %v4255 = vpack.c.b16 %v4063, %v4055
        %v4256 = vpack.c.b16 %v4064, %v4056
        %v4257 = vpack.c.b16 %v4065, %v4057
        %v4258 = vpack.c.b16 %v4074, %v4066
        %v4259 = vpack.c.b16 %v4075, %v4067
        %v4260 = vpack.c.b16 %v4076, %v4068
        %v4261 = vpack.c.b16 %v4077, %v4069
        %v4262 = vpack.c.b16 %v4078, %v4070
        %v4263 = vpack.c.b16 %v4079, %v4071
        %v4264 = vpack.c.b16 %v4080, %v4072
        %v4265 = vpack.c.b16 %v4081, %v4073
        %v4266 = vpack.c.b16 %v4090, %v4082
        %v4267 = vpack.c.b16 %v4091, %v4083
        %v4268 = vpack.c.b16 %v4092, %v4084
        %v4269 = vpack.c.b16 %v4093, %v4085
        %v4270 = vpack.c.b16 %v4094, %v4086
        %v4271 = vpack.c.b16 %v4095, %v4087
        %v4272 = vpack.c.b16 %v4096, %v4088
        %v4273 = vpack.c.b16 %v4097, %v4089
        %v4274 = vpack.c.b16 %v4106, %v4098
        %v4275 = vpack.c.b16 %v4107, %v4099
        %v4276 = vpack.c.b16 %v4108, %v4100
        %v4277 = vpack.c.b16 %v4109, %v4101
        %v4278 = vpack.c.b16 %v4110, %v4102
        %v4279 = vpack.c.b16 %v4111, %v4103
        %v4280 = vpack.c.b16 %v4112, %v4104
        %v4281 = vpack.c.b16 %v4113, %v4105
        %v4282 = vpack.c.b16 %v4122, %v4114
        %v4283 = vpack.c.b16 %v4123, %v4115
        %v4284 = vpack.c.b16 %v4124, %v4116
        %v4285 = vpack.c.b16 %v4125, %v4117
        %v4286 = vpack.c.b16 %v4126, %v4118
        %v4287 = vpack.c.b16 %v4127, %v4119
        %v4288 = vpack.c.b16 %v4128, %v4120
        %v4289 = vpack.c.b16 %v4129, %v4121
        %v4290 = vpack.c.b16 %v4138, %v4130
        %v4291 = vpack.c.b16 %v4139, %v4131
        %v4292 = vpack.c.b16 %v4140, %v4132
        %v4293 = vpack.c.b16 %v4141, %v4133
        %v4294 = vpack.c.b16 %v4142, %v4134
        %v4295 = vpack.c.b16 %v4143, %v4135
        %v4296 = vpack.c.b16 %v4144, %v4136
        %v4297 = vpack.c.b16 %v4145, %v4137
        %v4298 = vpack.c.b16 %v4154, %v4146
        %v4299 = vpack.c.b16 %v4155, %v4147
        %v4300 = vpack.c.b16 %v4156, %v4148
        %v4301 = vpack.c.b16 %v4157, %v4149
        %v4302 = vpack.c.b16 %v4158, %v4150
        %v4303 = vpack.c.b16 %v4159, %v4151
        %v4304 = vpack.c.b16 %v4160, %v4152
        %v4305 = vpack.c.b16 %v4161, %v4153
        %v4306 = vpack.c.b16 %v4170, %v4162
        %v4307 = vpack.c.b16 %v4171, %v4163
        %v4308 = vpack.c.b16 %v4172, %v4164
        %v4309 = vpack.c.b16 %v4173, %v4165
        %v4310 = vpack.c.b16 %v4174, %v4166
        %v4311 = vpack.c.b16 %v4175, %v4167
        %v4312 = vpack.c.b16 %v4176, %v4168
        %v4313 = vpack.c.b16 %v4177, %v4169
        %v4314 = vpack.c.b16 %v4186, %v4178
        %v4315 = vpack.c.b16 %v4187, %v4179
        %v4316 = vpack.c.b16 %v4188, %v4180
        %v4317 = vpack.c.b16 %v4189, %v4181
        %v4318 = vpack.c.b16 %v4190, %v4182
        %v4319 = vpack.c.b16 %v4191, %v4183
        %v4320 = vpack.c.b16 %v4192, %v4184
        %v4321 = vpack.c.b16 %v4193, %v4185
        %4450 = vmatprep.subr.bf16.mxu0 %v4195
        %4451 = vmatpush1.bf16.msra.mxu0 %v4194
        %4452 = vmatprep.subr.bf16.mxu0 %v4203
        %4453 = vmatpush1.bf16.msra.mxu0 %v4202
        %4454 = vmatprep.subr.bf16.mxu0 %v4211
        %4455 = vmatpush1.bf16.msra.mxu0 %v4210
        %4456 = vmatprep.subr.bf16.mxu0 %v4219
        %4457 = vmatpush1.bf16.msra.mxu0 %v4218
        %4458 = vmatprep.subr.bf16.mxu0 %v4227
        %4459 = vmatpush1.bf16.msra.mxu0 %v4226
        %4460 = vmatprep.subr.bf16.mxu0 %v4235
        %4461 = vmatpush1.bf16.msra.mxu0 %v4234
        %4462 = vmatprep.subr.bf16.mxu0 %v4243
        %4463 = vmatpush1.bf16.msra.mxu0 %v4242
        %4464 = vmatprep.subr.bf16.mxu0 %v4251
        %4465 = vmatpush1.bf16.msra.mxu0 %v4250
        %4466 = vmatprep.subr.bf16.mxu0 %v4259
        %4467 = vmatpush1.bf16.msra.mxu0 %v4258
        %4468 = vmatprep.subr.bf16.mxu0 %v4267
        %4469 = vmatpush1.bf16.msra.mxu0 %v4266
        %4470 = vmatprep.subr.bf16.mxu0 %v4275
        %4471 = vmatpush1.bf16.msra.mxu0 %v4274
        %4472 = vmatprep.subr.bf16.mxu0 %v4283
        %4473 = vmatpush1.bf16.msra.mxu0 %v4282
        %4474 = vmatprep.subr.bf16.mxu0 %v4291
        %4475 = vmatpush1.bf16.msra.mxu0 %v4290
        %4476 = vmatprep.subr.bf16.mxu0 %v4299
        %4477 = vmatpush1.bf16.msra.mxu0 %v4298
        %4478 = vmatprep.subr.bf16.mxu0 %v4307
        %4479 = vmatpush1.bf16.msra.mxu0 %v4306
        %4480 = vmatprep.subr.bf16.mxu0 %v4315
        %4481 = vmatpush1.bf16.msra.mxu0 %v4314
        %4482 = vmatprep.mubr.bf16.mxu0 %v3634
        %4483 = vmatmul.mubr.bf16.gmra.mrb[0].mxu0 %v3633
        %v4484 = vpop.f32.mrb[0].mxu0
        %v4485 = vadd.f32 %v3773, %v4484
        %v4486 = vpop.f32.mrb[0].mxu0
        %v4487 = vadd.f32 %v3777, %v4486
        %v4488 = vpop.f32.mrb[0].mxu0
        %v4489 = vadd.f32 %v3773, %v4488
        %v4490 = vpop.f32.mrb[0].mxu0
        %v4491 = vadd.f32 %v3777, %v4490
        %4492 = vdwg.mxu0
        %4493 = vmatprep.subr.bf16.mxu0 %v4197
        %4494 = vmatpush1.bf16.msra.mxu0 %v4196
        %4495 = vmatprep.subr.bf16.mxu0 %v4205
        %4496 = vmatpush1.bf16.msra.mxu0 %v4204
        %4497 = vmatprep.subr.bf16.mxu0 %v4213
        %4498 = vmatpush1.bf16.msra.mxu0 %v4212
        %4499 = vmatprep.subr.bf16.mxu0 %v4221
        %4500 = vmatpush1.bf16.msra.mxu0 %v4220
        %4501 = vmatprep.subr.bf16.mxu0 %v4229
        %4502 = vmatpush1.bf16.msra.mxu0 %v4228
        %4503 = vmatprep.subr.bf16.mxu0 %v4237
        %4504 = vmatpush1.bf16.msra.mxu0 %v4236
        %4505 = vmatprep.subr.bf16.mxu0 %v4245
        %4506 = vmatpush1.bf16.msra.mxu0 %v4244
        %4507 = vmatprep.subr.bf16.mxu0 %v4253
        %4508 = vmatpush1.bf16.msra.mxu0 %v4252
        %4509 = vmatprep.subr.bf16.mxu0 %v4261
        %4510 = vmatpush1.bf16.msra.mxu0 %v4260
        %4511 = vmatprep.subr.bf16.mxu0 %v4269
        %4512 = vmatpush1.bf16.msra.mxu0 %v4268
        %4513 = vmatprep.subr.bf16.mxu0 %v4277
        %4514 = vmatpush1.bf16.msra.mxu0 %v4276
        %4515 = vmatprep.subr.bf16.mxu0 %v4285
        %4516 = vmatpush1.bf16.msra.mxu0 %v4284
        %4517 = vmatprep.subr.bf16.mxu0 %v4293
        %4518 = vmatpush1.bf16.msra.mxu0 %v4292
        %4519 = vmatprep.subr.bf16.mxu0 %v4301
        %4520 = vmatpush1.bf16.msra.mxu0 %v4300
        %4521 = vmatprep.subr.bf16.mxu0 %v4309
        %4522 = vmatpush1.bf16.msra.mxu0 %v4308
        %4523 = vmatprep.subr.bf16.mxu0 %v4317
        %4524 = vmatpush1.bf16.msra.mxu0 %v4316
        %4525 = vmatprep.mubr.bf16.mxu0 %v3634
        %4526 = vmatmul.mubr.bf16.gmra.mrb[0].mxu0 %v3633
        %v4527 = vpop.f32.mrb[0].mxu0
        %v4528 = vadd.f32 %v3781, %v4527
        %v4529 = vpop.f32.mrb[0].mxu0
        %v4530 = vadd.f32 %v3785, %v4529
        %v4531 = vpop.f32.mrb[0].mxu0
        %v4532 = vadd.f32 %v3781, %v4531
        %v4533 = vpop.f32.mrb[0].mxu0
        %v4534 = vadd.f32 %v3785, %v4533
        %4535 = vdwg.mxu0
        %4536 = vmatprep.subr.bf16.mxu0 %v4199
        %4537 = vmatpush1.bf16.msra.mxu0 %v4198
        %4538 = vmatprep.subr.bf16.mxu0 %v4207
        %4539 = vmatpush1.bf16.msra.mxu0 %v4206
        %4540 = vmatprep.subr.bf16.mxu0 %v4215
        %4541 = vmatpush1.bf16.msra.mxu0 %v4214
        %4542 = vmatprep.subr.bf16.mxu0 %v4223
        %4543 = vmatpush1.bf16.msra.mxu0 %v4222
        %4544 = vmatprep.subr.bf16.mxu0 %v4231
        %4545 = vmatpush1.bf16.msra.mxu0 %v4230
        %4546 = vmatprep.subr.bf16.mxu0 %v4239
        %4547 = vmatpush1.bf16.msra.mxu0 %v4238
        %4548 = vmatprep.subr.bf16.mxu0 %v4247
        %4549 = vmatpush1.bf16.msra.mxu0 %v4246
        %4550 = vmatprep.subr.bf16.mxu0 %v4255
        %4551 = vmatpush1.bf16.msra.mxu0 %v4254
        %4552 = vmatprep.subr.bf16.mxu0 %v4263
        %4553 = vmatpush1.bf16.msra.mxu0 %v4262
        %4554 = vmatprep.subr.bf16.mxu0 %v4271
        %4555 = vmatpush1.bf16.msra.mxu0 %v4270
        %4556 = vmatprep.subr.bf16.mxu0 %v4279
        %4557 = vmatpush1.bf16.msra.mxu0 %v4278
        %4558 = vmatprep.subr.bf16.mxu0 %v4287
        %4559 = vmatpush1.bf16.msra.mxu0 %v4286
        %4560 = vmatprep.subr.bf16.mxu0 %v4295
        %4561 = vmatpush1.bf16.msra.mxu0 %v4294
        %4562 = vmatprep.subr.bf16.mxu0 %v4303
        %4563 = vmatpush1.bf16.msra.mxu0 %v4302
        %4564 = vmatprep.subr.bf16.mxu0 %v4311
        %4565 = vmatpush1.bf16.msra.mxu0 %v4310
        %4566 = vmatprep.subr.bf16.mxu0 %v4319
        %4567 = vmatpush1.bf16.msra.mxu0 %v4318
        %4568 = vmatprep.mubr.bf16.mxu0 %v3634
        %4569 = vmatmul.mubr.bf16.gmra.mrb[0].mxu0 %v3633
        %v4570 = vpop.f32.mrb[0].mxu0
        %v4571 = vadd.f32 %v3789, %v4570
        %v4572 = vpop.f32.mrb[0].mxu0
        %v4573 = vadd.f32 %v3793, %v4572
        %v4574 = vpop.f32.mrb[0].mxu0
        %v4575 = vadd.f32 %v3789, %v4574
        %v4576 = vpop.f32.mrb[0].mxu0
        %v4577 = vadd.f32 %v3793, %v4576
        %4578 = vdwg.mxu0
        %4579 = vmatprep.subr.bf16.mxu0 %v4201
        %4580 = vmatpush1.bf16.msra.mxu0 %v4200
        %4581 = vmatprep.subr.bf16.mxu0 %v4209
        %4582 = vmatpush1.bf16.msra.mxu0 %v4208
        %4583 = vmatprep.subr.bf16.mxu0 %v4217
        %4584 = vmatpush1.bf16.msra.mxu0 %v4216
        %4585 = vmatprep.subr.bf16.mxu0 %v4225
        %4586 = vmatpush1.bf16.msra.mxu0 %v4224
        %4587 = vmatprep.subr.bf16.mxu0 %v4233
        %4588 = vmatpush1.bf16.msra.mxu0 %v4232
        %4589 = vmatprep.subr.bf16.mxu0 %v4241
        %4590 = vmatpush1.bf16.msra.mxu0 %v4240
        %4591 = vmatprep.subr.bf16.mxu0 %v4249
        %4592 = vmatpush1.bf16.msra.mxu0 %v4248
        %4593 = vmatprep.subr.bf16.mxu0 %v4257
        %4594 = vmatpush1.bf16.msra.mxu0 %v4256
        %4595 = vmatprep.subr.bf16.mxu0 %v4265
        %4596 = vmatpush1.bf16.msra.mxu0 %v4264
        %4597 = vmatprep.subr.bf16.mxu0 %v4273
        %4598 = vmatpush1.bf16.msra.mxu0 %v4272
        %4599 = vmatprep.subr.bf16.mxu0 %v4281
        %4600 = vmatpush1.bf16.msra.mxu0 %v4280
        %4601 = vmatprep.subr.bf16.mxu0 %v4289
        %4602 = vmatpush1.bf16.msra.mxu0 %v4288
        %4603 = vmatprep.subr.bf16.mxu0 %v4297
        %4604 = vmatpush1.bf16.msra.mxu0 %v4296
        %4605 = vmatprep.subr.bf16.mxu0 %v4305
        %4606 = vmatpush1.bf16.msra.mxu0 %v4304
        %4607 = vmatprep.subr.bf16.mxu0 %v4313
        %4608 = vmatpush1.bf16.msra.mxu0 %v4312
        %4609 = vmatprep.subr.bf16.mxu0 %v4321
        %4610 = vmatpush1.bf16.msra.mxu0 %v4320
        %4611 = vmatprep.mubr.bf16.mxu0 %v3634
        %4612 = vmatmul.mubr.bf16.gmra.mrb[0].mxu0 %v3633
        %v4613 = vpop.f32.mrb[0].mxu0
        %v4614 = vadd.f32 %v3797, %v4613
        %v4615 = vpop.f32.mrb[0].mxu0
        %v4616 = vadd.f32 %v3801, %v4615
        %v4617 = vpop.f32.mrb[0].mxu0
        %v4618 = vadd.f32 %v3797, %v4617
        %v4619 = vpop.f32.mrb[0].mxu0
        %v4620 = vadd.f32 %v3801, %v4619
        %4621 = vdwg.mxu0
        %v4622 = vmax.f32 %v4485, 0.0
        %v4623 = vmax.f32 %v4487, 0.0
        %v4624 = vmax.f32 %v4528, 0.0
        %v4625 = vmax.f32 %v4530, 0.0
        %v4626 = vmax.f32 %v4571, 0.0
        %v4627 = vmax.f32 %v4573, 0.0
        %v4628 = vmax.f32 %v4614, 0.0
        %v4629 = vmax.f32 %v4616, 0.0
        %v4630 = vmax.f32 %v4489, 0.0
        %v4631 = vmax.f32 %v4491, 0.0
        %v4632 = vmax.f32 %v4532, 0.0
        %v4633 = vmax.f32 %v4534, 0.0
        %v4634 = vmax.f32 %v4575, 0.0
        %v4635 = vmax.f32 %v4577, 0.0
        %v4636 = vmax.f32 %v4618, 0.0
        %v4637 = vmax.f32 %v4620, 0.0
        %v4638 = vpack.c.bf16 %v4630, %v4622
        %v4639 = vpack.c.bf16 %v4631, %v4623
        %v4640 = vpack.c.bf16 %v4632, %v4624
        %v4641 = vpack.c.bf16 %v4633, %v4625
        %v4642 = vpack.c.bf16 %v4634, %v4626
        %v4643 = vpack.c.bf16 %v4635, %v4627
        %v4644 = vpack.c.bf16 %v4636, %v4628
        %v4645 = vpack.c.bf16 %v4637, %v4629
        %s4646 = smul.addr %s3635, 4
        %s4647 = scalar_lea.vmem [#allocation16], %s4646
        %v4648 = vld [vmem:[%s4647] sm:$0xff]
        %v4649 = vld [vmem:[%s4647 + $0x8] sm:$0xff]
        %v4650 = vld [vmem:[%s4647 + $0x10] sm:$0xff]
        %v4651 = vld [vmem:[%s4647 + $0x18] sm:$0xff]
        %v4652 = vld [vmem:[%s4647 + $0x20] sm:$0xff]
        %v4653 = vld [vmem:[%s4647 + $0x28] sm:$0xff]
        %v4654 = vld [vmem:[%s4647 + $0x30] sm:$0xff]
        %v4655 = vld [vmem:[%s4647 + $0x38] sm:$0xff]
        %v4656 = vld [vmem:[%s4647 + $0x40] sm:$0xff]
        %v4657 = vld [vmem:[%s4647 + $0x48] sm:$0xff]
        %v4658 = vld [vmem:[%s4647 + $0x50] sm:$0xff]
        %v4659 = vld [vmem:[%s4647 + $0x58] sm:$0xff]
        %v4660 = vld [vmem:[%s4647 + $0x60] sm:$0xff]
        %v4661 = vld [vmem:[%s4647 + $0x68] sm:$0xff]
        %v4662 = vld [vmem:[%s4647 + $0x70] sm:$0xff]
        %v4663 = vld [vmem:[%s4647 + $0x78] sm:$0xff]
        %v4664 = vld [vmem:[%s4647 + $0x80] sm:$0xff]
        %v4665 = vld [vmem:[%s4647 + $0x88] sm:$0xff]
        %v4666 = vld [vmem:[%s4647 + $0x90] sm:$0xff]
        %v4667 = vld [vmem:[%s4647 + $0x98] sm:$0xff]
        %v4668 = vld [vmem:[%s4647 + $0xa0] sm:$0xff]
        %v4669 = vld [vmem:[%s4647 + $0xa8] sm:$0xff]
        %v4670 = vld [vmem:[%s4647 + $0xb0] sm:$0xff]
        %v4671 = vld [vmem:[%s4647 + $0xb8] sm:$0xff]
        %v4672 = vld [vmem:[%s4647 + $0xc0] sm:$0xff]
        %v4673 = vld [vmem:[%s4647 + $0xc8] sm:$0xff]
        %v4674 = vld [vmem:[%s4647 + $0xd0] sm:$0xff]
        %v4675 = vld [vmem:[%s4647 + $0xd8] sm:$0xff]
        %v4676 = vld [vmem:[%s4647 + $0xe0] sm:$0xff]
        %v4677 = vld [vmem:[%s4647 + $0xe8] sm:$0xff]
        %v4678 = vld [vmem:[%s4647 + $0xf0] sm:$0xff]
        %v4679 = vld [vmem:[%s4647 + $0xf8] sm:$0xff]
        %v4680 = vld [vmem:[%s4647 + $0x100] sm:$0xff]
        %v4681 = vld [vmem:[%s4647 + $0x108] sm:$0xff]
        %v4682 = vld [vmem:[%s4647 + $0x110] sm:$0xff]
        %v4683 = vld [vmem:[%s4647 + $0x118] sm:$0xff]
        %v4684 = vld [vmem:[%s4647 + $0x120] sm:$0xff]
        %v4685 = vld [vmem:[%s4647 + $0x128] sm:$0xff]
        %v4686 = vld [vmem:[%s4647 + $0x130] sm:$0xff]
        %v4687 = vld [vmem:[%s4647 + $0x138] sm:$0xff]
        %v4688 = vld [vmem:[%s4647 + $0x140] sm:$0xff]
        %v4689 = vld [vmem:[%s4647 + $0x148] sm:$0xff]
        %v4690 = vld [vmem:[%s4647 + $0x150] sm:$0xff]
        %v4691 = vld [vmem:[%s4647 + $0x158] sm:$0xff]
        %v4692 = vld [vmem:[%s4647 + $0x160] sm:$0xff]
        %v4693 = vld [vmem:[%s4647 + $0x168] sm:$0xff]
        %v4694 = vld [vmem:[%s4647 + $0x170] sm:$0xff]
        %v4695 = vld [vmem:[%s4647 + $0x178] sm:$0xff]
        %v4696 = vld [vmem:[%s4647 + $0x180] sm:$0xff]
        %v4697 = vld [vmem:[%s4647 + $0x188] sm:$0xff]
        %v4698 = vld [vmem:[%s4647 + $0x190] sm:$0xff]
        %v4699 = vld [vmem:[%s4647 + $0x198] sm:$0xff]
        %v4700 = vld [vmem:[%s4647 + $0x1a0] sm:$0xff]
        %v4701 = vld [vmem:[%s4647 + $0x1a8] sm:$0xff]
        %v4702 = vld [vmem:[%s4647 + $0x1b0] sm:$0xff]
        %v4703 = vld [vmem:[%s4647 + $0x1b8] sm:$0xff]
        %v4704 = vld [vmem:[%s4647 + $0x1c0] sm:$0xff]
        %v4705 = vld [vmem:[%s4647 + $0x1c8] sm:$0xff]
        %v4706 = vld [vmem:[%s4647 + $0x1d0] sm:$0xff]
        %v4707 = vld [vmem:[%s4647 + $0x1d8] sm:$0xff]
        %v4708 = vld [vmem:[%s4647 + $0x1e0] sm:$0xff]
        %v4709 = vld [vmem:[%s4647 + $0x1e8] sm:$0xff]
        %v4710 = vld [vmem:[%s4647 + $0x1f0] sm:$0xff]
        %v4711 = vld [vmem:[%s4647 + $0x1f8] sm:$0xff]
        %v4712 = vld [vmem:[%s4647 + $0x200] sm:$0xff]
        %v4713 = vld [vmem:[%s4647 + $0x208] sm:$0xff]
        %v4714 = vld [vmem:[%s4647 + $0x210] sm:$0xff]
        %v4715 = vld [vmem:[%s4647 + $0x218] sm:$0xff]
        %v4716 = vld [vmem:[%s4647 + $0x220] sm:$0xff]
        %v4717 = vld [vmem:[%s4647 + $0x228] sm:$0xff]
        %v4718 = vld [vmem:[%s4647 + $0x230] sm:$0xff]
        %v4719 = vld [vmem:[%s4647 + $0x238] sm:$0xff]
        %v4720 = vld [vmem:[%s4647 + $0x240] sm:$0xff]
        %v4721 = vld [vmem:[%s4647 + $0x248] sm:$0xff]
        %v4722 = vld [vmem:[%s4647 + $0x250] sm:$0xff]
        %v4723 = vld [vmem:[%s4647 + $0x258] sm:$0xff]
        %v4724 = vld [vmem:[%s4647 + $0x260] sm:$0xff]
        %v4725 = vld [vmem:[%s4647 + $0x268] sm:$0xff]
        %v4726 = vld [vmem:[%s4647 + $0x270] sm:$0xff]
        %v4727 = vld [vmem:[%s4647 + $0x278] sm:$0xff]
        %v4728 = vld [vmem:[%s4647 + $0x280] sm:$0xff]
        %v4729 = vld [vmem:[%s4647 + $0x288] sm:$0xff]
        %v4730 = vld [vmem:[%s4647 + $0x290] sm:$0xff]
        %v4731 = vld [vmem:[%s4647 + $0x298] sm:$0xff]
        %v4732 = vld [vmem:[%s4647 + $0x2a0] sm:$0xff]
        %v4733 = vld [vmem:[%s4647 + $0x2a8] sm:$0xff]
        %v4734 = vld [vmem:[%s4647 + $0x2b0] sm:$0xff]
        %v4735 = vld [vmem:[%s4647 + $0x2b8] sm:$0xff]
        %v4736 = vld [vmem:[%s4647 + $0x2c0] sm:$0xff]
        %v4737 = vld [vmem:[%s4647 + $0x2c8] sm:$0xff]
        %v4738 = vld [vmem:[%s4647 + $0x2d0] sm:$0xff]
        %v4739 = vld [vmem:[%s4647 + $0x2d8] sm:$0xff]
        %v4740 = vld [vmem:[%s4647 + $0x2e0] sm:$0xff]
        %v4741 = vld [vmem:[%s4647 + $0x2e8] sm:$0xff]
        %v4742 = vld [vmem:[%s4647 + $0x2f0] sm:$0xff]
        %v4743 = vld [vmem:[%s4647 + $0x2f8] sm:$0xff]
        %v4744 = vld [vmem:[%s4647 + $0x300] sm:$0xff]
        %v4745 = vld [vmem:[%s4647 + $0x308] sm:$0xff]
        %v4746 = vld [vmem:[%s4647 + $0x310] sm:$0xff]
        %v4747 = vld [vmem:[%s4647 + $0x318] sm:$0xff]
        %v4748 = vld [vmem:[%s4647 + $0x320] sm:$0xff]
        %v4749 = vld [vmem:[%s4647 + $0x328] sm:$0xff]
        %v4750 = vld [vmem:[%s4647 + $0x330] sm:$0xff]
        %v4751 = vld [vmem:[%s4647 + $0x338] sm:$0xff]
        %v4752 = vld [vmem:[%s4647 + $0x340] sm:$0xff]
        %v4753 = vld [vmem:[%s4647 + $0x348] sm:$0xff]
        %v4754 = vld [vmem:[%s4647 + $0x350] sm:$0xff]
        %v4755 = vld [vmem:[%s4647 + $0x358] sm:$0xff]
        %v4756 = vld [vmem:[%s4647 + $0x360] sm:$0xff]
        %v4757 = vld [vmem:[%s4647 + $0x368] sm:$0xff]
        %v4758 = vld [vmem:[%s4647 + $0x370] sm:$0xff]
        %v4759 = vld [vmem:[%s4647 + $0x378] sm:$0xff]
        %v4760 = vld [vmem:[%s4647 + $0x380] sm:$0xff]
        %v4761 = vld [vmem:[%s4647 + $0x388] sm:$0xff]
        %v4762 = vld [vmem:[%s4647 + $0x390] sm:$0xff]
        %v4763 = vld [vmem:[%s4647 + $0x398] sm:$0xff]
        %v4764 = vld [vmem:[%s4647 + $0x3a0] sm:$0xff]
        %v4765 = vld [vmem:[%s4647 + $0x3a8] sm:$0xff]
        %v4766 = vld [vmem:[%s4647 + $0x3b0] sm:$0xff]
        %v4767 = vld [vmem:[%s4647 + $0x3b8] sm:$0xff]
        %v4768 = vld [vmem:[%s4647 + $0x3c0] sm:$0xff]
        %v4769 = vld [vmem:[%s4647 + $0x3c8] sm:$0xff]
        %v4770 = vld [vmem:[%s4647 + $0x3d0] sm:$0xff]
        %v4771 = vld [vmem:[%s4647 + $0x3d8] sm:$0xff]
        %v4772 = vld [vmem:[%s4647 + $0x3e0] sm:$0xff]
        %v4773 = vld [vmem:[%s4647 + $0x3e8] sm:$0xff]
        %v4774 = vld [vmem:[%s4647 + $0x3f0] sm:$0xff]
        %v4775 = vld [vmem:[%s4647 + $0x3f8] sm:$0xff]
        %s4776 = scalar_lea.vmem [#allocation17], %s3345
        %v4777 = vld [vmem:[%s4776] sm:$0x3]
        %v4779 = vlaneseq
        %v4780 = vshrl.u32 %v4779, 7
        %v4781 = vsub.s32 0, %v4780
        %v4782 = vrot.slane %v4777, %v4781
        %v4783 = vlaneseq
        %v4784 = vshrl.u32 %v4783, 7
        %v4785 = vsub.s32 1, %v4784
        %v4786 = vrot.slane %v4777, %v4785
        %v4917 = vunpack.c.l.b16 %v4648
        %v4918 = vunpack.c.h.b16 %v4648
        %v4919 = vunpack.c.l.b16 %v4649
        %v4920 = vunpack.c.h.b16 %v4649
        %v4921 = vunpack.c.l.b16 %v4650
        %v4922 = vunpack.c.h.b16 %v4650
        %v4923 = vunpack.c.l.b16 %v4651
        %v4924 = vunpack.c.h.b16 %v4651
        %v4925 = vunpack.c.l.b16 %v4652
        %v4926 = vunpack.c.h.b16 %v4652
        %v4927 = vunpack.c.l.b16 %v4653
        %v4928 = vunpack.c.h.b16 %v4653
        %v4929 = vunpack.c.l.b16 %v4654
        %v4930 = vunpack.c.h.b16 %v4654
        %v4931 = vunpack.c.l.b16 %v4655
        %v4932 = vunpack.c.h.b16 %v4655
        %v4933 = vunpack.c.l.b16 %v4656
        %v4934 = vunpack.c.h.b16 %v4656
        %v4935 = vunpack.c.l.b16 %v4657
        %v4936 = vunpack.c.h.b16 %v4657
        %v4937 = vunpack.c.l.b16 %v4658
        %v4938 = vunpack.c.h.b16 %v4658
        %v4939 = vunpack.c.l.b16 %v4659
        %v4940 = vunpack.c.h.b16 %v4659
        %v4941 = vunpack.c.l.b16 %v4660
        %v4942 = vunpack.c.h.b16 %v4660
        %v4943 = vunpack.c.l.b16 %v4661
        %v4944 = vunpack.c.h.b16 %v4661
        %v4945 = vunpack.c.l.b16 %v4662
        %v4946 = vunpack.c.h.b16 %v4662
        %v4947 = vunpack.c.l.b16 %v4663
        %v4948 = vunpack.c.h.b16 %v4663
        %v4949 = vunpack.c.l.b16 %v4664
        %v4950 = vunpack.c.h.b16 %v4664
        %v4951 = vunpack.c.l.b16 %v4665
        %v4952 = vunpack.c.h.b16 %v4665
        %v4953 = vunpack.c.l.b16 %v4666
        %v4954 = vunpack.c.h.b16 %v4666
        %v4955 = vunpack.c.l.b16 %v4667
        %v4956 = vunpack.c.h.b16 %v4667
        %v4957 = vunpack.c.l.b16 %v4668
        %v4958 = vunpack.c.h.b16 %v4668
        %v4959 = vunpack.c.l.b16 %v4669
        %v4960 = vunpack.c.h.b16 %v4669
        %v4961 = vunpack.c.l.b16 %v4670
        %v4962 = vunpack.c.h.b16 %v4670
        %v4963 = vunpack.c.l.b16 %v4671
        %v4964 = vunpack.c.h.b16 %v4671
        %v4965 = vunpack.c.l.b16 %v4672
        %v4966 = vunpack.c.h.b16 %v4672
        %v4967 = vunpack.c.l.b16 %v4673
        %v4968 = vunpack.c.h.b16 %v4673
        %v4969 = vunpack.c.l.b16 %v4674
        %v4970 = vunpack.c.h.b16 %v4674
        %v4971 = vunpack.c.l.b16 %v4675
        %v4972 = vunpack.c.h.b16 %v4675
        %v4973 = vunpack.c.l.b16 %v4676
        %v4974 = vunpack.c.h.b16 %v4676
        %v4975 = vunpack.c.l.b16 %v4677
        %v4976 = vunpack.c.h.b16 %v4677
        %v4977 = vunpack.c.l.b16 %v4678
        %v4978 = vunpack.c.h.b16 %v4678
        %v4979 = vunpack.c.l.b16 %v4679
        %v4980 = vunpack.c.h.b16 %v4679
        %v4981 = vunpack.c.l.b16 %v4680
        %v4982 = vunpack.c.h.b16 %v4680
        %v4983 = vunpack.c.l.b16 %v4681
        %v4984 = vunpack.c.h.b16 %v4681
        %v4985 = vunpack.c.l.b16 %v4682
        %v4986 = vunpack.c.h.b16 %v4682
        %v4987 = vunpack.c.l.b16 %v4683
        %v4988 = vunpack.c.h.b16 %v4683
        %v4989 = vunpack.c.l.b16 %v4684
        %v4990 = vunpack.c.h.b16 %v4684
        %v4991 = vunpack.c.l.b16 %v4685
        %v4992 = vunpack.c.h.b16 %v4685
        %v4993 = vunpack.c.l.b16 %v4686
        %v4994 = vunpack.c.h.b16 %v4686
        %v4995 = vunpack.c.l.b16 %v4687
        %v4996 = vunpack.c.h.b16 %v4687
        %v4997 = vunpack.c.l.b16 %v4688
        %v4998 = vunpack.c.h.b16 %v4688
        %v4999 = vunpack.c.l.b16 %v4689
        %v5000 = vunpack.c.h.b16 %v4689
        %v5001 = vunpack.c.l.b16 %v4690
        %v5002 = vunpack.c.h.b16 %v4690
        %v5003 = vunpack.c.l.b16 %v4691
        %v5004 = vunpack.c.h.b16 %v4691
        %v5005 = vunpack.c.l.b16 %v4692
        %v5006 = vunpack.c.h.b16 %v4692
        %v5007 = vunpack.c.l.b16 %v4693
        %v5008 = vunpack.c.h.b16 %v4693
        %v5009 = vunpack.c.l.b16 %v4694
        %v5010 = vunpack.c.h.b16 %v4694
        %v5011 = vunpack.c.l.b16 %v4695
        %v5012 = vunpack.c.h.b16 %v4695
        %v5013 = vunpack.c.l.b16 %v4696
        %v5014 = vunpack.c.h.b16 %v4696
        %v5015 = vunpack.c.l.b16 %v4697
        %v5016 = vunpack.c.h.b16 %v4697
        %v5017 = vunpack.c.l.b16 %v4698
        %v5018 = vunpack.c.h.b16 %v4698
        %v5019 = vunpack.c.l.b16 %v4699
        %v5020 = vunpack.c.h.b16 %v4699
        %v5021 = vunpack.c.l.b16 %v4700
        %v5022 = vunpack.c.h.b16 %v4700
        %v5023 = vunpack.c.l.b16 %v4701
        %v5024 = vunpack.c.h.b16 %v4701
        %v5025 = vunpack.c.l.b16 %v4702
        %v5026 = vunpack.c.h.b16 %v4702
        %v5027 = vunpack.c.l.b16 %v4703
        %v5028 = vunpack.c.h.b16 %v4703
        %v5029 = vunpack.c.l.b16 %v4704
        %v5030 = vunpack.c.h.b16 %v4704
        %v5031 = vunpack.c.l.b16 %v4705
        %v5032 = vunpack.c.h.b16 %v4705
        %v5033 = vunpack.c.l.b16 %v4706
        %v5034 = vunpack.c.h.b16 %v4706
        %v5035 = vunpack.c.l.b16 %v4707
        %v5036 = vunpack.c.h.b16 %v4707
        %v5037 = vunpack.c.l.b16 %v4708
        %v5038 = vunpack.c.h.b16 %v4708
        %v5039 = vunpack.c.l.b16 %v4709
        %v5040 = vunpack.c.h.b16 %v4709
        %v5041 = vunpack.c.l.b16 %v4710
        %v5042 = vunpack.c.h.b16 %v4710
        %v5043 = vunpack.c.l.b16 %v4711
        %v5044 = vunpack.c.h.b16 %v4711
        %v5045 = vunpack.c.l.b16 %v4712
        %v5046 = vunpack.c.h.b16 %v4712
        %v5047 = vunpack.c.l.b16 %v4713
        %v5048 = vunpack.c.h.b16 %v4713
        %v5049 = vunpack.c.l.b16 %v4714
        %v5050 = vunpack.c.h.b16 %v4714
        %v5051 = vunpack.c.l.b16 %v4715
        %v5052 = vunpack.c.h.b16 %v4715
        %v5053 = vunpack.c.l.b16 %v4716
        %v5054 = vunpack.c.h.b16 %v4716
        %v5055 = vunpack.c.l.b16 %v4717
        %v5056 = vunpack.c.h.b16 %v4717
        %v5057 = vunpack.c.l.b16 %v4718
        %v5058 = vunpack.c.h.b16 %v4718
        %v5059 = vunpack.c.l.b16 %v4719
        %v5060 = vunpack.c.h.b16 %v4719
        %v5061 = vunpack.c.l.b16 %v4720
        %v5062 = vunpack.c.h.b16 %v4720
        %v5063 = vunpack.c.l.b16 %v4721
        %v5064 = vunpack.c.h.b16 %v4721
        %v5065 = vunpack.c.l.b16 %v4722
        %v5066 = vunpack.c.h.b16 %v4722
        %v5067 = vunpack.c.l.b16 %v4723
        %v5068 = vunpack.c.h.b16 %v4723
        %v5069 = vunpack.c.l.b16 %v4724
        %v5070 = vunpack.c.h.b16 %v4724
        %v5071 = vunpack.c.l.b16 %v4725
        %v5072 = vunpack.c.h.b16 %v4725
        %v5073 = vunpack.c.l.b16 %v4726
        %v5074 = vunpack.c.h.b16 %v4726
        %v5075 = vunpack.c.l.b16 %v4727
        %v5076 = vunpack.c.h.b16 %v4727
        %v5077 = vunpack.c.l.b16 %v4728
        %v5078 = vunpack.c.h.b16 %v4728
        %v5079 = vunpack.c.l.b16 %v4729
        %v5080 = vunpack.c.h.b16 %v4729
        %v5081 = vunpack.c.l.b16 %v4730
        %v5082 = vunpack.c.h.b16 %v4730
        %v5083 = vunpack.c.l.b16 %v4731
        %v5084 = vunpack.c.h.b16 %v4731
        %v5085 = vunpack.c.l.b16 %v4732
        %v5086 = vunpack.c.h.b16 %v4732
        %v5087 = vunpack.c.l.b16 %v4733
        %v5088 = vunpack.c.h.b16 %v4733
        %v5089 = vunpack.c.l.b16 %v4734
        %v5090 = vunpack.c.h.b16 %v4734
        %v5091 = vunpack.c.l.b16 %v4735
        %v5092 = vunpack.c.h.b16 %v4735
        %v5093 = vunpack.c.l.b16 %v4736
        %v5094 = vunpack.c.h.b16 %v4736
        %v5095 = vunpack.c.l.b16 %v4737
        %v5096 = vunpack.c.h.b16 %v4737
        %v5097 = vunpack.c.l.b16 %v4738
        %v5098 = vunpack.c.h.b16 %v4738
        %v5099 = vunpack.c.l.b16 %v4739
        %v5100 = vunpack.c.h.b16 %v4739
        %v5101 = vunpack.c.l.b16 %v4740
        %v5102 = vunpack.c.h.b16 %v4740
        %v5103 = vunpack.c.l.b16 %v4741
        %v5104 = vunpack.c.h.b16 %v4741
        %v5105 = vunpack.c.l.b16 %v4742
        %v5106 = vunpack.c.h.b16 %v4742
        %v5107 = vunpack.c.l.b16 %v4743
        %v5108 = vunpack.c.h.b16 %v4743
        %v5109 = vunpack.c.l.b16 %v4744
        %v5110 = vunpack.c.h.b16 %v4744
        %v5111 = vunpack.c.l.b16 %v4745
        %v5112 = vunpack.c.h.b16 %v4745
        %v5113 = vunpack.c.l.b16 %v4746
        %v5114 = vunpack.c.h.b16 %v4746
        %v5115 = vunpack.c.l.b16 %v4747
        %v5116 = vunpack.c.h.b16 %v4747
        %v5117 = vunpack.c.l.b16 %v4748
        %v5118 = vunpack.c.h.b16 %v4748
        %v5119 = vunpack.c.l.b16 %v4749
        %v5120 = vunpack.c.h.b16 %v4749
        %v5121 = vunpack.c.l.b16 %v4750
        %v5122 = vunpack.c.h.b16 %v4750
        %v5123 = vunpack.c.l.b16 %v4751
        %v5124 = vunpack.c.h.b16 %v4751
        %v5125 = vunpack.c.l.b16 %v4752
        %v5126 = vunpack.c.h.b16 %v4752
        %v5127 = vunpack.c.l.b16 %v4753
        %v5128 = vunpack.c.h.b16 %v4753
        %v5129 = vunpack.c.l.b16 %v4754
        %v5130 = vunpack.c.h.b16 %v4754
        %v5131 = vunpack.c.l.b16 %v4755
        %v5132 = vunpack.c.h.b16 %v4755
        %v5133 = vunpack.c.l.b16 %v4756
        %v5134 = vunpack.c.h.b16 %v4756
        %v5135 = vunpack.c.l.b16 %v4757
        %v5136 = vunpack.c.h.b16 %v4757
        %v5137 = vunpack.c.l.b16 %v4758
        %v5138 = vunpack.c.h.b16 %v4758
        %v5139 = vunpack.c.l.b16 %v4759
        %v5140 = vunpack.c.h.b16 %v4759
        %v5141 = vunpack.c.l.b16 %v4760
        %v5142 = vunpack.c.h.b16 %v4760
        %v5143 = vunpack.c.l.b16 %v4761
        %v5144 = vunpack.c.h.b16 %v4761
        %v5145 = vunpack.c.l.b16 %v4762
        %v5146 = vunpack.c.h.b16 %v4762
        %v5147 = vunpack.c.l.b16 %v4763
        %v5148 = vunpack.c.h.b16 %v4763
        %v5149 = vunpack.c.l.b16 %v4764
        %v5150 = vunpack.c.h.b16 %v4764
        %v5151 = vunpack.c.l.b16 %v4765
        %v5152 = vunpack.c.h.b16 %v4765
        %v5153 = vunpack.c.l.b16 %v4766
        %v5154 = vunpack.c.h.b16 %v4766
        %v5155 = vunpack.c.l.b16 %v4767
        %v5156 = vunpack.c.h.b16 %v4767
        %v5157 = vunpack.c.l.b16 %v4768
        %v5158 = vunpack.c.h.b16 %v4768
        %v5159 = vunpack.c.l.b16 %v4769
        %v5160 = vunpack.c.h.b16 %v4769
        %v5161 = vunpack.c.l.b16 %v4770
        %v5162 = vunpack.c.h.b16 %v4770
        %v5163 = vunpack.c.l.b16 %v4771
        %v5164 = vunpack.c.h.b16 %v4771
        %v5165 = vunpack.c.l.b16 %v4772
        %v5166 = vunpack.c.h.b16 %v4772
        %v5167 = vunpack.c.l.b16 %v4773
        %v5168 = vunpack.c.h.b16 %v4773
        %v5169 = vunpack.c.l.b16 %v4774
        %v5170 = vunpack.c.h.b16 %v4774
        %v5171 = vunpack.c.l.b16 %v4775
        %v5172 = vunpack.c.h.b16 %v4775
        %v5173 = vpack.c.b16 %v4919, %v4917
        %v5174 = vpack.c.b16 %v4920, %v4918
        %v5175 = vpack.c.b16 %v4923, %v4921
        %v5176 = vpack.c.b16 %v4924, %v4922
        %v5177 = vpack.c.b16 %v4927, %v4925
        %v5178 = vpack.c.b16 %v4928, %v4926
        %v5179 = vpack.c.b16 %v4931, %v4929
        %v5180 = vpack.c.b16 %v4932, %v4930
        %v5181 = vpack.c.b16 %v4935, %v4933
        %v5182 = vpack.c.b16 %v4936, %v4934
        %v5183 = vpack.c.b16 %v4939, %v4937
        %v5184 = vpack.c.b16 %v4940, %v4938
        %v5185 = vpack.c.b16 %v4943, %v4941
        %v5186 = vpack.c.b16 %v4944, %v4942
        %v5187 = vpack.c.b16 %v4947, %v4945
        %v5188 = vpack.c.b16 %v4948, %v4946
        %v5189 = vpack.c.b16 %v4951, %v4949
        %v5190 = vpack.c.b16 %v4952, %v4950
        %v5191 = vpack.c.b16 %v4955, %v4953
        %v5192 = vpack.c.b16 %v4956, %v4954
        %v5193 = vpack.c.b16 %v4959, %v4957
        %v5194 = vpack.c.b16 %v4960, %v4958
        %v5195 = vpack.c.b16 %v4963, %v4961
        %v5196 = vpack.c.b16 %v4964, %v4962
        %v5197 = vpack.c.b16 %v4967, %v4965
        %v5198 = vpack.c.b16 %v4968, %v4966
        %v5199 = vpack.c.b16 %v4971, %v4969
        %v5200 = vpack.c.b16 %v4972, %v4970
        %v5201 = vpack.c.b16 %v4975, %v4973
        %v5202 = vpack.c.b16 %v4976, %v4974
        %v5203 = vpack.c.b16 %v4979, %v4977
        %v5204 = vpack.c.b16 %v4980, %v4978
        %v5205 = vpack.c.b16 %v4983, %v4981
        %v5206 = vpack.c.b16 %v4984, %v4982
        %v5207 = vpack.c.b16 %v4987, %v4985
        %v5208 = vpack.c.b16 %v4988, %v4986
        %v5209 = vpack.c.b16 %v4991, %v4989
        %v5210 = vpack.c.b16 %v4992, %v4990
        %v5211 = vpack.c.b16 %v4995, %v4993
        %v5212 = vpack.c.b16 %v4996, %v4994
        %v5213 = vpack.c.b16 %v4999, %v4997
        %v5214 = vpack.c.b16 %v5000, %v4998
        %v5215 = vpack.c.b16 %v5003, %v5001
        %v5216 = vpack.c.b16 %v5004, %v5002
        %v5217 = vpack.c.b16 %v5007, %v5005
        %v5218 = vpack.c.b16 %v5008, %v5006
        %v5219 = vpack.c.b16 %v5011, %v5009
        %v5220 = vpack.c.b16 %v5012, %v5010
        %v5221 = vpack.c.b16 %v5015, %v5013
        %v5222 = vpack.c.b16 %v5016, %v5014
        %v5223 = vpack.c.b16 %v5019, %v5017
        %v5224 = vpack.c.b16 %v5020, %v5018
        %v5225 = vpack.c.b16 %v5023, %v5021
        %v5226 = vpack.c.b16 %v5024, %v5022
        %v5227 = vpack.c.b16 %v5027, %v5025
        %v5228 = vpack.c.b16 %v5028, %v5026
        %v5229 = vpack.c.b16 %v5031, %v5029
        %v5230 = vpack.c.b16 %v5032, %v5030
        %v5231 = vpack.c.b16 %v5035, %v5033
        %v5232 = vpack.c.b16 %v5036, %v5034
        %v5233 = vpack.c.b16 %v5039, %v5037
        %v5234 = vpack.c.b16 %v5040, %v5038
        %v5235 = vpack.c.b16 %v5043, %v5041
        %v5236 = vpack.c.b16 %v5044, %v5042
        %v5237 = vpack.c.b16 %v5047, %v5045
        %v5238 = vpack.c.b16 %v5048, %v5046
        %v5239 = vpack.c.b16 %v5051, %v5049
        %v5240 = vpack.c.b16 %v5052, %v5050
        %v5241 = vpack.c.b16 %v5055, %v5053
        %v5242 = vpack.c.b16 %v5056, %v5054
        %v5243 = vpack.c.b16 %v5059, %v5057
        %v5244 = vpack.c.b16 %v5060, %v5058
        %v5245 = vpack.c.b16 %v5063, %v5061
        %v5246 = vpack.c.b16 %v5064, %v5062
        %v5247 = vpack.c.b16 %v5067, %v5065
        %v5248 = vpack.c.b16 %v5068, %v5066
        %v5249 = vpack.c.b16 %v5071, %v5069
        %v5250 = vpack.c.b16 %v5072, %v5070
        %v5251 = vpack.c.b16 %v5075, %v5073
        %v5252 = vpack.c.b16 %v5076, %v5074
        %v5253 = vpack.c.b16 %v5079, %v5077
        %v5254 = vpack.c.b16 %v5080, %v5078
        %v5255 = vpack.c.b16 %v5083, %v5081
        %v5256 = vpack.c.b16 %v5084, %v5082
        %v5257 = vpack.c.b16 %v5087, %v5085
        %v5258 = vpack.c.b16 %v5088, %v5086
        %v5259 = vpack.c.b16 %v5091, %v5089
        %v5260 = vpack.c.b16 %v5092, %v5090
        %v5261 = vpack.c.b16 %v5095, %v5093
        %v5262 = vpack.c.b16 %v5096, %v5094
        %v5263 = vpack.c.b16 %v5099, %v5097
        %v5264 = vpack.c.b16 %v5100, %v5098
        %v5265 = vpack.c.b16 %v5103, %v5101
        %v5266 = vpack.c.b16 %v5104, %v5102
        %v5267 = vpack.c.b16 %v5107, %v5105
        %v5268 = vpack.c.b16 %v5108, %v5106
        %v5269 = vpack.c.b16 %v5111, %v5109
        %v5270 = vpack.c.b16 %v5112, %v5110
        %v5271 = vpack.c.b16 %v5115, %v5113
        %v5272 = vpack.c.b16 %v5116, %v5114
        %v5273 = vpack.c.b16 %v5119, %v5117
        %v5274 = vpack.c.b16 %v5120, %v5118
        %v5275 = vpack.c.b16 %v5123, %v5121
        %v5276 = vpack.c.b16 %v5124, %v5122
        %v5277 = vpack.c.b16 %v5127, %v5125
        %v5278 = vpack.c.b16 %v5128, %v5126
        %v5279 = vpack.c.b16 %v5131, %v5129
        %v5280 = vpack.c.b16 %v5132, %v5130
        %v5281 = vpack.c.b16 %v5135, %v5133
        %v5282 = vpack.c.b16 %v5136, %v5134
        %v5283 = vpack.c.b16 %v5139, %v5137
        %v5284 = vpack.c.b16 %v5140, %v5138
        %v5285 = vpack.c.b16 %v5143, %v5141
        %v5286 = vpack.c.b16 %v5144, %v5142
        %v5287 = vpack.c.b16 %v5147, %v5145
        %v5288 = vpack.c.b16 %v5148, %v5146
        %v5289 = vpack.c.b16 %v5151, %v5149
        %v5290 = vpack.c.b16 %v5152, %v5150
        %v5291 = vpack.c.b16 %v5155, %v5153
        %v5292 = vpack.c.b16 %v5156, %v5154
        %v5293 = vpack.c.b16 %v5159, %v5157
        %v5294 = vpack.c.b16 %v5160, %v5158
        %v5295 = vpack.c.b16 %v5163, %v5161
        %v5296 = vpack.c.b16 %v5164, %v5162
        %v5297 = vpack.c.b16 %v5167, %v5165
        %v5298 = vpack.c.b16 %v5168, %v5166
        %v5299 = vpack.c.b16 %v5171, %v5169
        %v5300 = vpack.c.b16 %v5172, %v5170
        %5429 = vmatprep.subr.bf16.mxu0 %v5174
        %5430 = vmatpush1.bf16.msra.mxu0 %v5173
        %5431 = vmatprep.subr.bf16.mxu0 %v5176
        %5432 = vmatpush1.bf16.msra.mxu0 %v5175
        %5433 = vmatprep.subr.bf16.mxu0 %v5178
        %5434 = vmatpush1.bf16.msra.mxu0 %v5177
        %5435 = vmatprep.subr.bf16.mxu0 %v5180
        %5436 = vmatpush1.bf16.msra.mxu0 %v5179
        %5437 = vmatprep.subr.bf16.mxu0 %v5182
        %5438 = vmatpush1.bf16.msra.mxu0 %v5181
        %5439 = vmatprep.subr.bf16.mxu0 %v5184
        %5440 = vmatpush1.bf16.msra.mxu0 %v5183
        %5441 = vmatprep.subr.bf16.mxu0 %v5186
        %5442 = vmatpush1.bf16.msra.mxu0 %v5185
        %5443 = vmatprep.subr.bf16.mxu0 %v5188
        %5444 = vmatpush1.bf16.msra.mxu0 %v5187
        %5445 = vmatprep.subr.bf16.mxu0 %v5190
        %5446 = vmatpush1.bf16.msra.mxu0 %v5189
        %5447 = vmatprep.subr.bf16.mxu0 %v5192
        %5448 = vmatpush1.bf16.msra.mxu0 %v5191
        %5449 = vmatprep.subr.bf16.mxu0 %v5194
        %5450 = vmatpush1.bf16.msra.mxu0 %v5193
        %5451 = vmatprep.subr.bf16.mxu0 %v5196
        %5452 = vmatpush1.bf16.msra.mxu0 %v5195
        %5453 = vmatprep.subr.bf16.mxu0 %v5198
        %5454 = vmatpush1.bf16.msra.mxu0 %v5197
        %5455 = vmatprep.subr.bf16.mxu0 %v5200
        %5456 = vmatpush1.bf16.msra.mxu0 %v5199
        %5457 = vmatprep.subr.bf16.mxu0 %v5202
        %5458 = vmatpush1.bf16.msra.mxu0 %v5201
        %5459 = vmatprep.subr.bf16.mxu0 %v5204
        %5460 = vmatpush1.bf16.msra.mxu0 %v5203
        %5461 = vmatprep.mubr.bf16.mxu0 %v4639
        %5462 = vmatmul.mubr.bf16.gmra.mrb[0].mxu0 %v4638
        %v5463 = vpop.f32.mrb[0].mxu0
        %v5464 = vadd.f32 %v4782, %v5463
        %v5465 = vpop.f32.mrb[0].mxu0
        %v5466 = vadd.f32 %v4786, %v5465
        %v5467 = vpop.f32.mrb[0].mxu0
        %v5468 = vadd.f32 %v4782, %v5467
        %v5469 = vpop.f32.mrb[0].mxu0
        %v5470 = vadd.f32 %v4786, %v5469
        %5471 = vdwg.mxu0
        %5472 = vmatprep.subr.bf16.mxu0 %v5206
        %5473 = vmatpush1.bf16.msra.mxu0 %v5205
        %5474 = vmatprep.subr.bf16.mxu0 %v5208
        %5475 = vmatpush1.bf16.msra.mxu0 %v5207
        %5476 = vmatprep.subr.bf16.mxu0 %v5210
        %5477 = vmatpush1.bf16.msra.mxu0 %v5209
        %5478 = vmatprep.subr.bf16.mxu0 %v5212
        %5479 = vmatpush1.bf16.msra.mxu0 %v5211
        %5480 = vmatprep.subr.bf16.mxu0 %v5214
        %5481 = vmatpush1.bf16.msra.mxu0 %v5213
        %5482 = vmatprep.subr.bf16.mxu0 %v5216
        %5483 = vmatpush1.bf16.msra.mxu0 %v5215
        %5484 = vmatprep.subr.bf16.mxu0 %v5218
        %5485 = vmatpush1.bf16.msra.mxu0 %v5217
        %5486 = vmatprep.subr.bf16.mxu0 %v5220
        %5487 = vmatpush1.bf16.msra.mxu0 %v5219
        %5488 = vmatprep.subr.bf16.mxu0 %v5222
        %5489 = vmatpush1.bf16.msra.mxu0 %v5221
        %5490 = vmatprep.subr.bf16.mxu0 %v5224
        %5491 = vmatpush1.bf16.msra.mxu0 %v5223
        %5492 = vmatprep.subr.bf16.mxu0 %v5226
        %5493 = vmatpush1.bf16.msra.mxu0 %v5225
        %5494 = vmatprep.subr.bf16.mxu0 %v5228
        %5495 = vmatpush1.bf16.msra.mxu0 %v5227
        %5496 = vmatprep.subr.bf16.mxu0 %v5230
        %5497 = vmatpush1.bf16.msra.mxu0 %v5229
        %5498 = vmatprep.subr.bf16.mxu0 %v5232
        %5499 = vmatpush1.bf16.msra.mxu0 %v5231
        %5500 = vmatprep.subr.bf16.mxu0 %v5234
        %5501 = vmatpush1.bf16.msra.mxu0 %v5233
        %5502 = vmatprep.subr.bf16.mxu0 %v5236
        %5503 = vmatpush1.bf16.msra.mxu0 %v5235
        %5504 = vmatprep.mubr.bf16.mxu0 %v4641
        %5505 = vmatmul.mubr.bf16.gmra.mrb[0].mxu0 %v4640
        %v5506 = vpop.f32.mrb[0].mxu0
        %v5507 = vadd.f32 %v5464, %v5506
        %v5508 = vpop.f32.mrb[0].mxu0
        %v5509 = vadd.f32 %v5466, %v5508
        %v5510 = vpop.f32.mrb[0].mxu0
        %v5511 = vadd.f32 %v5468, %v5510
        %v5512 = vpop.f32.mrb[0].mxu0
        %v5513 = vadd.f32 %v5470, %v5512
        %5514 = vdwg.mxu0
        %5515 = vmatprep.subr.bf16.mxu0 %v5238
        %5516 = vmatpush1.bf16.msra.mxu0 %v5237
        %5517 = vmatprep.subr.bf16.mxu0 %v5240
        %5518 = vmatpush1.bf16.msra.mxu0 %v5239
        %5519 = vmatprep.subr.bf16.mxu0 %v5242
        %5520 = vmatpush1.bf16.msra.mxu0 %v5241
        %5521 = vmatprep.subr.bf16.mxu0 %v5244
        %5522 = vmatpush1.bf16.msra.mxu0 %v5243
        %5523 = vmatprep.subr.bf16.mxu0 %v5246
        %5524 = vmatpush1.bf16.msra.mxu0 %v5245
        %5525 = vmatprep.subr.bf16.mxu0 %v5248
        %5526 = vmatpush1.bf16.msra.mxu0 %v5247
        %5527 = vmatprep.subr.bf16.mxu0 %v5250
        %5528 = vmatpush1.bf16.msra.mxu0 %v5249
        %5529 = vmatprep.subr.bf16.mxu0 %v5252
        %5530 = vmatpush1.bf16.msra.mxu0 %v5251
        %5531 = vmatprep.subr.bf16.mxu0 %v5254
        %5532 = vmatpush1.bf16.msra.mxu0 %v5253
        %5533 = vmatprep.subr.bf16.mxu0 %v5256
        %5534 = vmatpush1.bf16.msra.mxu0 %v5255
        %5535 = vmatprep.subr.bf16.mxu0 %v5258
        %5536 = vmatpush1.bf16.msra.mxu0 %v5257
        %5537 = vmatprep.subr.bf16.mxu0 %v5260
        %5538 = vmatpush1.bf16.msra.mxu0 %v5259
        %5539 = vmatprep.subr.bf16.mxu0 %v5262
        %5540 = vmatpush1.bf16.msra.mxu0 %v5261
        %5541 = vmatprep.subr.bf16.mxu0 %v5264
        %5542 = vmatpush1.bf16.msra.mxu0 %v5263
        %5543 = vmatprep.subr.bf16.mxu0 %v5266
        %5544 = vmatpush1.bf16.msra.mxu0 %v5265
        %5545 = vmatprep.subr.bf16.mxu0 %v5268
        %5546 = vmatpush1.bf16.msra.mxu0 %v5267
        %5547 = vmatprep.mubr.bf16.mxu0 %v4643
        %5548 = vmatmul.mubr.bf16.gmra.mrb[0].mxu0 %v4642
        %v5549 = vpop.f32.mrb[0].mxu0
        %v5550 = vadd.f32 %v5507, %v5549
        %v5551 = vpop.f32.mrb[0].mxu0
        %v5552 = vadd.f32 %v5509, %v5551
        %v5553 = vpop.f32.mrb[0].mxu0
        %v5554 = vadd.f32 %v5511, %v5553
        %v5555 = vpop.f32.mrb[0].mxu0
        %v5556 = vadd.f32 %v5513, %v5555
        %5557 = vdwg.mxu0
        %5558 = vmatprep.subr.bf16.mxu0 %v5270
        %5559 = vmatpush1.bf16.msra.mxu0 %v5269
        %5560 = vmatprep.subr.bf16.mxu0 %v5272
        %5561 = vmatpush1.bf16.msra.mxu0 %v5271
        %5562 = vmatprep.subr.bf16.mxu0 %v5274
        %5563 = vmatpush1.bf16.msra.mxu0 %v5273
        %5564 = vmatprep.subr.bf16.mxu0 %v5276
        %5565 = vmatpush1.bf16.msra.mxu0 %v5275
        %5566 = vmatprep.subr.bf16.mxu0 %v5278
        %5567 = vmatpush1.bf16.msra.mxu0 %v5277
        %5568 = vmatprep.subr.bf16.mxu0 %v5280
        %5569 = vmatpush1.bf16.msra.mxu0 %v5279
        %5570 = vmatprep.subr.bf16.mxu0 %v5282
        %5571 = vmatpush1.bf16.msra.mxu0 %v5281
        %5572 = vmatprep.subr.bf16.mxu0 %v5284
        %5573 = vmatpush1.bf16.msra.mxu0 %v5283
        %5574 = vmatprep.subr.bf16.mxu0 %v5286
        %5575 = vmatpush1.bf16.msra.mxu0 %v5285
        %5576 = vmatprep.subr.bf16.mxu0 %v5288
        %5577 = vmatpush1.bf16.msra.mxu0 %v5287
        %5578 = vmatprep.subr.bf16.mxu0 %v5290
        %5579 = vmatpush1.bf16.msra.mxu0 %v5289
        %5580 = vmatprep.subr.bf16.mxu0 %v5292
        %5581 = vmatpush1.bf16.msra.mxu0 %v5291
        %5582 = vmatprep.subr.bf16.mxu0 %v5294
        %5583 = vmatpush1.bf16.msra.mxu0 %v5293
        %5584 = vmatprep.subr.bf16.mxu0 %v5296
        %5585 = vmatpush1.bf16.msra.mxu0 %v5295
        %5586 = vmatprep.subr.bf16.mxu0 %v5298
        %5587 = vmatpush1.bf16.msra.mxu0 %v5297
        %5588 = vmatprep.subr.bf16.mxu0 %v5300
        %5589 = vmatpush1.bf16.msra.mxu0 %v5299
        %5590 = vmatprep.mubr.bf16.mxu0 %v4645
        %5591 = vmatmul.mubr.bf16.gmra.mrb[0].mxu0 %v4644
        %v5592 = vpop.f32.mrb[0].mxu0
        %v5593 = vadd.f32 %v5550, %v5592
        %v5594 = vpop.f32.mrb[0].mxu0
        %v5595 = vadd.f32 %v5552, %v5594
        %v5596 = vpop.f32.mrb[0].mxu0
        %v5597 = vadd.f32 %v5554, %v5596
        %v5598 = vpop.f32.mrb[0].mxu0
        %v5599 = vadd.f32 %v5556, %v5598
        %5600 = vdwg.mxu0
        %v5601 = vadd.f32 %v3629, %v5593
        %v5602 = vadd.f32 %v3630, %v5595
        %v5603 = vadd.f32 %v3631, %v5597
        %v5604 = vadd.f32 %v3632, %v5599
        %s5605 = scalar_lea.vmem [#allocation22], %s3345
        %v5606 = vld [vmem:[%s5605] sm:$0x3]
        %s5607 = scalar_lea.vmem [#allocation23], %s3345
        %v5608 = vld [vmem:[%s5607] sm:$0x3]
        %v5609 = vadd.f32 %v5601, %v5602
        %5610 = vadd.xlane.f32.xlu0 %v5609
        %v5611 = vpop.xlane.xlu0 %5610
        %v5612 = vadd.f32 %v5603, %v5604
        %5613 = vadd.xlane.f32.xlu0 %v5612
        %v5614 = vpop.xlane.xlu0 %5613
        %v5615 = vmul.f32 %v5611, %v3576
        %v5616 = vmul.f32 %v5614, %v3576
        %v5617 = vsub.f32 %v5601, %v5615
        %v5618 = vsub.f32 %v5602, %v5615
        %v5619 = vsub.f32 %v5603, %v5616
        %v5620 = vsub.f32 %v5604, %v5616
        %v5621 = vmul.f32 %v5617, %v5617
        %v5622 = vmul.f32 %v5618, %v5618
        %v5623 = vmul.f32 %v5619, %v5619
        %v5624 = vmul.f32 %v5620, %v5620
        %v5625 = vadd.f32 %v5621, %v5622
        %5626 = vadd.xlane.f32.xlu0 %v5625
        %v5627 = vpop.xlane.xlu0 %5626
        %v5628 = vadd.f32 %v5623, %v5624
        %5629 = vadd.xlane.f32.xlu0 %v5628
        %v5630 = vpop.xlane.xlu0 %5629
        %v5631 = vmul.f32 %v5627, %v3576
        %v5632 = vmul.f32 %v5630, %v3576
        %v5633 = vadd.f32 %v5631, 1e-05
        %v5634 = vadd.f32 %v5632, 1e-05
        %v5635 = vrsqrt.pop %v5633
        %v5636 = vrsqrt.pop %v5634
        %v5637 = vmul.f32 %v5617, %v5635
        %v5638 = vmul.f32 %v5618, %v5635
        %v5639 = vmul.f32 %v5619, %v5636
        %v5640 = vmul.f32 %v5620, %v5636
        %v5642 = vlaneseq
        %v5643 = vshrl.u32 %v5642, 7
        %v5644 = vsub.s32 0, %v5643
        %v5645 = vrot.slane %v5606, %v5644
        %v5646 = vlaneseq
        %v5647 = vshrl.u32 %v5646, 7
        %v5648 = vsub.s32 1, %v5647
        %v5649 = vrot.slane %v5606, %v5648
        %v5652 = vmul.f32 %v5637, %v5645
        %v5653 = vmul.f32 %v5638, %v5649
        %v5654 = vmul.f32 %v5639, %v5645
        %v5655 = vmul.f32 %v5640, %v5649
        %v5657 = vlaneseq
        %v5658 = vshrl.u32 %v5657, 7
        %v5659 = vsub.s32 0, %v5658
        %v5660 = vrot.slane %v5608, %v5659
        %v5661 = vlaneseq
        %v5662 = vshrl.u32 %v5661, 7
        %v5663 = vsub.s32 1, %v5662
        %v5664 = vrot.slane %v5608, %v5663
        %v5667 = vadd.f32 %v5652, %v5660
        %v5668 = vadd.f32 %v5653, %v5664
        %v5669 = vadd.f32 %v5654, %v5660
        %v5670 = vadd.f32 %v5655, %v5664
        %5671 = vst [vmem:[#allocation25] sm:$0xff] %v5667
        %5672 = vst [vmem:[#allocation25 + $0x8] sm:$0xff] %v5668
        %5673 = vst [vmem:[#allocation25 + $0x10] sm:$0xff] %v5669
        %5674 = vst [vmem:[#allocation25 + $0x18] sm:$0xff] %v5670
        // Predicated region
        $region137: #{transformer_encoder.1} parent=75 // pred_check
          %p5675 = pneg %p363
        $region138: #{transformer_encoder.1} parent=75 // pred_check_branch
          %5677 = sbr.rel (%p5675) target = $region140
        $region139: #{transformer_encoder.1} parent=75 // pred_region
          %s5678 = smul.u32 2, %s38
          %s5680 = ssub.s32 512, 512
          %5681 = vsyncadd [#allocation4], %s5680
          %s5682 = smul.addr %s5678, 2
          %s5683 = smul.addr %s5682, 128
          %s5684 = scalar_lea.hbm %s14, %s5683
          %s5685 = sshll.u32 [#allocation25], 4
          %s5686 = int_to_ptr.vmem [resolvable:$true] %s5685
          %5691 = dma.vmem_to_hbm [thread:$0]  %s5686, 512, %s5684, [#allocation4], 256, 256, 16
        $region140: #{transformer_encoder.1} parent=75 // pred_fallthru
          _
        // Predicated region
        $region141: #{transformer_encoder.1} parent=75 // pred_check
          %p5692 = pneg %p363
        $region142: #{transformer_encoder.1} parent=75 // pred_check_branch
          %5694 = sbr.rel (%p5692) target = $region144
        $region143: #{transformer_encoder.1} parent=75 // pred_region
          %5695 = dma.done [#allocation4], 512
        $region144: #{transformer_encoder.1} parent=75 // pred_fallthru
          _
      $region76: #{transformer_encoder.1} parent=5 // pred_fallthru
        _
      %p5696 = scmp.le.s32.totalorder 2, %s29
      // Predicated region
      $region145: #{transformer_encoder.1} parent=5 // pred_check
        %p5697 = pneg %p5696
      $region146: #{transformer_encoder.1} parent=5 // pred_check_branch
        %5699 = sbr.rel (%p5697) target = $region148
      $region147: #{transformer_encoder.1} parent=5 // pred_region
        %s5700 = ssub.s32 %s29, 2
      $region148: #{transformer_encoder.1} parent=5 // pred_fallthru
        _
    $region6: #{transformer_encoder.1} parent=1 // loop_footer
      %s33 = sadd.s32 1, %s29
    $region7: #{transformer_encoder.1} parent=1 // loop_footer_branch
      %28 = sbr.rel target = $region3
    $region8: #{transformer_encoder.1} parent=1 // loop_exit
      _
    %5701 = vsyncpa [#allocation3], 1
    %s5702 = scalar_lea.sflag [#allocation3], 1
    %5703 = vsyncpa %s5702, 1
    %5704 = vsyncpa [#allocation6], 1
    %5705 = vsyncpa [#allocation9], 1
    %5706 = vsyncpa [#allocation12], 1
    %5707 = vsyncpa [#allocation15], 1
    %5708 = vsyncpa [#allocation18], 1
    %5709 = vsyncpa [#allocation21], 1
    %5710 = vsyncpa [#allocation24], 1
    %5711 = vsyncpa [#allocation4], 1
    %s5712 = scalar_lea.sflag [#allocation4], 1
    %5713 = vsyncpa %s5712, 1

</llo_original>
